<compile_context>
chip_gen: v6e
topology: v6e:2x2x1
jax: 0.10.0
libtpu: 0.0.40
codegen_flags: <defaults>
</compile_context>

<pallas_src>
import jax
import jax.numpy as jnp
from jax import lax
from jax.experimental import pallas as pl
from jax.experimental.pallas import tpu as pltpu


def hebbian_mlp_kernel(x_ref, w0_ref, w1_ref, lr0_ref, lr1_ref, e0_ref, e1_ref,
                       y_ref, w0_out_ref, w1_out_ref, e0_out_ref, e1_out_ref):
    T = x_ref.shape[1]

    # Seed the loop-carried (vreg-resident) state once per policy tile.
    w0 = w0_ref[...]      # (Pb, H, D_in)
    w1 = w1_ref[...]      # (Pb, A, H)
    lr0 = lr0_ref[...]    # (Pb, H, D_in)
    lr1 = lr1_ref[...]    # (Pb, A, H)
    e0 = e0_ref[...]      # (Pb, H, D_in)   trace in weight layout
    e1 = e1_ref[...]      # (Pb, A, H)

    # (Pb,B,K)·(Pb,N,K) -> (Pb,B,N): contract feature dim, batch over policies (== x @ W.T)
    dn_feat = (((2,), (2,)), ((0,), (0,)))
    # (Pb,B,M)·(Pb,B,N) -> (Pb,M,N): contract env-batch dim (Hebbian outer product, weight layout)
    dn_hebb = (((1,), (1,)), ((0,), (0,)))

    # Fully-unrolled static timestep loop (T is small in ES rollout chunks).
    # TODO(synk): for long rollouts switch to lax.fori_loop(..., unroll=k) to bound live ranges.
    for t in range(T):
        xt = x_ref[:, t]                                                           # (Pb, B, D_in)

        # Forward pass (batched MXU matmuls + VPU relu).
        h_pre = lax.dot_general(xt, w0, dn_feat, preferred_element_type=jnp.float32)   # (Pb, B, H)
        h = jnp.maximum(h_pre, 0.0)
        y_pre = lax.dot_general(h, w1, dn_feat, preferred_element_type=jnp.float32)    # (Pb, B, A)
        y_ref[:, t] = jnp.maximum(y_pre, 0.0)

        # Hebbian plastic update on PRE-activation node traces, directly in weight layout.
        de0 = lax.dot_general(h_pre, xt, dn_hebb, preferred_element_type=jnp.float32)     # (Pb, H, D_in)
        de1 = lax.dot_general(y_pre, h_pre, dn_hebb, preferred_element_type=jnp.float32)  # (Pb, A, H)

        e0 = jnp.clip(e0 + de0, -1.0, 1.0)
        e1 = jnp.clip(e1 + de1, -1.0, 1.0)
        w0 = w0 + lr0 * e0
        w1 = w1 + lr1 * e1

    # Single writeback of the plastic state per policy tile.
    w0_out_ref[...] = w0
    w1_out_ref[...] = w1
    e0_out_ref[...] = e0
    e1_out_ref[...] = e1


def _pick_policy_tile(P):
    """Largest of {8,4,2} that divides P while keeping >=2 grid steps (v7x has 2 TCs)."""
    for cand in (8, 4, 2):
        if P % cand == 0 and P // cand >= 2:
            return cand
    return 1 if P >= 1 else 1


def hebbian_mlp_rollout(x, w0, w1, lr0, lr1, e0, e1, *, policy_tile=None):
    """Run T plastic forward steps for P independent policies in one pallas_call.

    x:   (P, T, B, D_in)
    w0, lr0, e0: (P, H, D_in)     w1, lr1, e1: (P, A, H)   (E stored in weight layout)
    Returns (y:(P,T,B,A), w0_final, w1_final, e0_final, e1_final).

    NOTE: w0/w1/e0/e1 are donated (input_output_aliases) -> do not reuse them after
    this call; use the returned updated arrays instead.
    """
    P, T, B, D_in = x.shape
    H = w0.shape[1]
    A = w1.shape[1]

    pb = _pick_policy_tile(P) if policy_tile is None else policy_tile
    assert P % pb == 0, (P, pb)
    grid = (P // pb,)

    # Whole-parameter / whole-rollout blocks per policy tile.  Last two dims of every
    # block equal the full array dims, so the (8,128) rule is trivially satisfied.
    # Parameter/trace VMEM footprint per step is ~ pb * 3*(H*D_in + A*H) * 4 B (x2 for
    # in/out aliases, x2 double-buffering) -- raise vmem_limit_bytes in CompilerParams
    # if H/D_in/pb are scaled up (v7x has only 64 MiB VMEM).
    spec_x = pl.BlockSpec((pb, T, B, D_in), lambda p: (p, 0, 0, 0))
    spec_y = pl.BlockSpec((pb, T, B, A), lambda p: (p, 0, 0, 0))
    spec_l0 = pl.BlockSpec((pb, H, D_in), lambda p: (p, 0, 0))
    spec_l1 = pl.BlockSpec((pb, A, H), lambda p: (p, 0, 0))

    out_shapes = (
        jax.ShapeDtypeStruct((P, T, B, A), jnp.float32),
        jax.ShapeDtypeStruct(w0.shape, jnp.float32),
        jax.ShapeDtypeStruct(w1.shape, jnp.float32),
        jax.ShapeDtypeStruct(e0.shape, jnp.float32),
        jax.ShapeDtypeStruct(e1.shape, jnp.float32),
    )

    return pl.pallas_call(
        hebbian_mlp_kernel,
        grid=grid,
        in_specs=[spec_x, spec_l0, spec_l1, spec_l0, spec_l1, spec_l0, spec_l1],
        out_specs=(spec_y, spec_l0, spec_l1, spec_l0, spec_l1),
        out_shape=out_shapes,
        # In-place parameter / trace update (matches the PyTorch module's mutation):
        #   w0 -> w0_out, w1 -> w1_out, e0 -> e0_out, e1 -> e1_out
        input_output_aliases={1: 1, 2: 2, 5: 3, 6: 4},
        compiler_params=pltpu.CompilerParams(
            dimension_semantics=("parallel",)),
    )(x, w0, w1, lr0, lr1, e0, e1)


def reference_rollout(x_seq, w0, w1, lr0, lr1, e0, e1):
    """Pure-JAX reference for one policy: T sequential plastic forward passes."""
    def step(carry, xt):
        w0, w1, e0, e1 = carry
        h_pre = xt @ w0.T
        h = jnp.maximum(h_pre, 0.0)
        y_pre = h @ w1.T
        y = jnp.maximum(y_pre, 0.0)
        e0n = jnp.clip(e0 + h_pre.T @ xt, -1.0, 1.0)     # weight layout == module E0.T
        e1n = jnp.clip(e1 + y_pre.T @ h_pre, -1.0, 1.0)  # weight layout == module E1.T
        return (w0 + lr0 * e0n, w1 + lr1 * e1n, e0n, e1n), y

    (w0f, w1f, e0f, e1f), ys = lax.scan(step, (w0, w1, e0, e1), x_seq)
    return ys, w0f, w1f, e0f, e1f


if __name__ == "__main__":
    # Small shapes consistent with the module: population=2 policies, rollout T=6,
    # batch=4, dim_x=16, dim_h=[32], dim_y=8.
    P, T, B, D_IN, HID, D_OUT = 2, 6, 4, 16, 32, 8

    key = jax.random.PRNGKey(0)
    kx, kw0, kw1, kl0, kl1 = jax.random.split(key, 5)

    x = jax.random.normal(kx, (P, T, B, D_IN), dtype=jnp.float32)

    # Deterministic parameter init (PyTorch nn.Linear-style uniform scale, bias=False).
    s0 = 1.0 / jnp.sqrt(D_IN)
    s1 = 1.0 / jnp.sqrt(HID)
    w0 = jax.random.uniform(kw0, (P, HID, D_IN), jnp.float32, -s0, s0)   # layers.layer0.weight
    w1 = jax.random.uniform(kw1, (P, D_OUT, HID), jnp.float32, -s1, s1)  # layers.output_layer.weight
    lr0 = jax.random.uniform(kl0, (P, HID, D_IN), jnp.float32, -s0, s0)  # lr_layers.layer0.weight
    lr1 = jax.random.uniform(kl1, (P, D_OUT, HID), jnp.float32, -s1, s1) # lr_layers.output_layer.weight
    e0 = jnp.zeros((P, HID, D_IN), jnp.float32)   # eligibility_layers[0], stored in weight layout
    e1 = jnp.zeros((P, D_OUT, HID), jnp.float32)  # eligibility_layers[1], stored in weight layout

    # Run the pure-JAX reference first (the kernel donates w0/w1/e0/e1 via aliasing).
    refs = jax.block_until_ready(jax.vmap(reference_rollout)(x, w0, w1, lr0, lr1, e0, e1))
    outs = jax.block_until_ready(hebbian_mlp_rollout(x, w0, w1, lr0, lr1, e0, e1))

    for got, ref in zip(outs, refs):
        assert got.shape == ref.shape, (got.shape, ref.shape)
        assert jnp.allclose(got, ref, atol=5e-4, rtol=5e-4), "mismatch vs reference"

    print("KERNEL_OK")
</pallas_src>

<mosaic_0001>
module attributes {stable_mosaic.version = 11 : i64} {
  func.func @hebbian_mlp_kernel(%arg0: i32, %arg1: memref<1x6x4x16xf32, #tpu.memory_space<vmem>>, %arg2: memref<1x32x16xf32, #tpu.memory_space<vmem>>, %arg3: memref<1x8x32xf32, #tpu.memory_space<vmem>>, %arg4: memref<1x32x16xf32, #tpu.memory_space<vmem>>, %arg5: memref<1x8x32xf32, #tpu.memory_space<vmem>>, %arg6: memref<1x32x16xf32, #tpu.memory_space<vmem>>, %arg7: memref<1x8x32xf32, #tpu.memory_space<vmem>>, %arg8: memref<1x6x4x8xf32, #tpu.memory_space<vmem>>, %arg9: memref<1x32x16xf32, #tpu.memory_space<vmem>>, %arg10: memref<1x8x32xf32, #tpu.memory_space<vmem>>, %arg11: memref<1x32x16xf32, #tpu.memory_space<vmem>>, %arg12: memref<1x8x32xf32, #tpu.memory_space<vmem>>) attributes {dimension_semantics = [#tpu.dimension_semantics<parallel>], iteration_bounds = array<i64: 2>, scalar_prefetch = 0 : i64, scratch_operands = 0 : i64, tpu.core_type = #tpu.core_type<tc>, window_params = [{transform_indices = @transform_0, window_bounds = array<i64: 1, 6, 4, 16>}, {transform_indices = @transform_1, window_bounds = array<i64: 1, 32, 16>}, {transform_indices = @transform_2, window_bounds = array<i64: 1, 8, 32>}, {transform_indices = @transform_3, window_bounds = array<i64: 1, 32, 16>}, {transform_indices = @transform_4, window_bounds = array<i64: 1, 8, 32>}, {transform_indices = @transform_5, window_bounds = array<i64: 1, 32, 16>}, {transform_indices = @transform_6, window_bounds = array<i64: 1, 8, 32>}, {transform_indices = @transform_7, window_bounds = array<i64: 1, 6, 4, 8>}, {transform_indices = @transform_8, window_bounds = array<i64: 1, 32, 16>}, {transform_indices = @transform_9, window_bounds = array<i64: 1, 8, 32>}, {transform_indices = @transform_10, window_bounds = array<i64: 1, 32, 16>}, {transform_indices = @transform_11, window_bounds = array<i64: 1, 8, 32>}]} {
    %c0 = arith.constant 0 : index
    %c0_0 = arith.constant 0 : index
    %c0_1 = arith.constant 0 : index
    %0 = vector.load %arg2[%c0, %c0_0, %c0_1] : memref<1x32x16xf32, #tpu.memory_space<vmem>>, vector<1x32x16xf32>
    %c0_2 = arith.constant 0 : index
    %c0_3 = arith.constant 0 : index
    %c0_4 = arith.constant 0 : index
    %1 = vector.load %arg3[%c0_2, %c0_3, %c0_4] : memref<1x8x32xf32, #tpu.memory_space<vmem>>, vector<1x8x32xf32>
    %c0_5 = arith.constant 0 : index
    %c0_6 = arith.constant 0 : index
    %c0_7 = arith.constant 0 : index
    %2 = vector.load %arg4[%c0_5, %c0_6, %c0_7] : memref<1x32x16xf32, #tpu.memory_space<vmem>>, vector<1x32x16xf32>
    %c0_8 = arith.constant 0 : index
    %c0_9 = arith.constant 0 : index
    %c0_10 = arith.constant 0 : index
    %3 = vector.load %arg5[%c0_8, %c0_9, %c0_10] : memref<1x8x32xf32, #tpu.memory_space<vmem>>, vector<1x8x32xf32>
    %c0_11 = arith.constant 0 : index
    %c0_12 = arith.constant 0 : index
    %c0_13 = arith.constant 0 : index
    %4 = vector.load %arg6[%c0_11, %c0_12, %c0_13] : memref<1x32x16xf32, #tpu.memory_space<vmem>>, vector<1x32x16xf32>
    %c0_14 = arith.constant 0 : index
    %c0_15 = arith.constant 0 : index
    %c0_16 = arith.constant 0 : index
    %5 = vector.load %arg7[%c0_14, %c0_15, %c0_16] : memref<1x8x32xf32, #tpu.memory_space<vmem>>, vector<1x8x32xf32>
    %c0_17 = arith.constant 0 : index
    %c0_18 = arith.constant 0 : index
    %c0_19 = arith.constant 0 : index
    %c0_20 = arith.constant 0 : index
    %6 = vector.load %arg1[%c0_17, %c0_18, %c0_19, %c0_20] : memref<1x6x4x16xf32, #tpu.memory_space<vmem>>, vector<1x1x4x16xf32>
    %7 = vector.shape_cast %6 : vector<1x1x4x16xf32> to vector<1x4x16xf32>
    %cst = arith.constant dense<0.000000e+00> : vector<1x4x32xf32>
    %8 = tpu.matmul %7, %0, %cst {dimension_numbers = #tpu.dot_dimension_numbers<[2], [2], [1], [1], [0, 0, 0, 1, 1, 1], [0], [0]>} : vector<1x4x16xf32>, vector<1x32x16xf32>, vector<1x4x32xf32> -> vector<1x4x32xf32>
    %cst_21 = arith.constant 0.000000e+00 : f32
    %9 = vector.broadcast %cst_21 : f32 to vector<1x4x32xf32>
    %10 = arith.maximumf %8, %9 : vector<1x4x32xf32>
    %cst_22 = arith.constant dense<0.000000e+00> : vector<1x4x8xf32>
    %11 = tpu.matmul %10, %1, %cst_22 {dimension_numbers = #tpu.dot_dimension_numbers<[2], [2], [1], [1], [0, 0, 0, 1, 1, 1], [0], [0]>} : vector<1x4x32xf32>, vector<1x8x32xf32>, vector<1x4x8xf32> -> vector<1x4x8xf32>
    %cst_23 = arith.constant 0.000000e+00 : f32
    %12 = vector.broadcast %cst_23 : f32 to vector<1x4x8xf32>
    %13 = arith.maximumf %11, %12 : vector<1x4x8xf32>
    %c0_24 = arith.constant 0 : index
    %c0_25 = arith.constant 0 : index
    %c0_26 = arith.constant 0 : index
    %c0_27 = arith.constant 0 : index
    %14 = vector.load %arg8[%c0_24, %c0_25, %c0_26, %c0_27] : memref<1x6x4x8xf32, #tpu.memory_space<vmem>>, vector<1x1x4x8xf32>
    %15 = vector.shape_cast %14 : vector<1x1x4x8xf32> to vector<1x4x8xf32>
    %16 = vector.shape_cast %13 : vector<1x4x8xf32> to vector<1x1x4x8xf32>
    tpu.vector_store %arg8[%c0_24, %c0_25, %c0_26, %c0_27], %16 {strides = array<i32>} : memref<1x6x4x8xf32, #tpu.memory_space<vmem>>, vector<1x1x4x8xf32>,
    %cst_28 = arith.constant dense<0.000000e+00> : vector<1x32x16xf32>
    %17 = tpu.matmul %8, %7, %cst_28 {dimension_numbers = #tpu.dot_dimension_numbers<[1], [1], [2], [2], [0, 0, 0, 2, 1, 2], [0], [0]>} : vector<1x4x32xf32>, vector<1x4x16xf32>, vector<1x32x16xf32> -> vector<1x32x16xf32>
    %cst_29 = arith.constant dense<0.000000e+00> : vector<1x8x32xf32>
    %18 = tpu.matmul %11, %8, %cst_29 {dimension_numbers = #tpu.dot_dimension_numbers<[1], [1], [2], [2], [0, 0, 0, 2, 1, 2], [0], [0]>} : vector<1x4x8xf32>, vector<1x4x32xf32>, vector<1x8x32xf32> -> vector<1x8x32xf32>
    %19 = arith.addf %4, %17 : vector<1x32x16xf32>
    %cst_30 = arith.constant -1.000000e+00 : f32
    %cst_31 = arith.constant 1.000000e+00 : f32
    %20 = vector.broadcast %cst_30 : f32 to vector<1x32x16xf32>
    %21 = arith.maximumf %20, %19 : vector<1x32x16xf32>
    %22 = vector.broadcast %cst_31 : f32 to vector<1x32x16xf32>
    %23 = arith.minimumf %22, %21 : vector<1x32x16xf32>
    %24 = arith.addf %5, %18 : vector<1x8x32xf32>
    %cst_32 = arith.constant -1.000000e+00 : f32
    %cst_33 = arith.constant 1.000000e+00 : f32
    %25 = vector.broadcast %cst_32 : f32 to vector<1x8x32xf32>
    %26 = arith.maximumf %25, %24 : vector<1x8x32xf32>
    %27 = vector.broadcast %cst_33 : f32 to vector<1x8x32xf32>
    %28 = arith.minimumf %27, %26 : vector<1x8x32xf32>
    %29 = arith.mulf %2, %23 : vector<1x32x16xf32>
    %30 = arith.addf %0, %29 : vector<1x32x16xf32>
    %31 = arith.mulf %3, %28 : vector<1x8x32xf32>
    %32 = arith.addf %1, %31 : vector<1x8x32xf32>
    %c0_34 = arith.constant 0 : index
    %c1 = arith.constant 1 : index
    %c0_35 = arith.constant 0 : index
    %c0_36 = arith.constant 0 : index
    %33 = vector.load %arg1[%c0_34, %c1, %c0_35, %c0_36] : memref<1x6x4x16xf32, #tpu.memory_space<vmem>>, vector<1x1x4x16xf32>
    %34 = vector.shape_cast %33 : vector<1x1x4x16xf32> to vector<1x4x16xf32>
    %cst_37 = arith.constant dense<0.000000e+00> : vector<1x4x32xf32>
    %35 = tpu.matmul %34, %30, %cst_37 {dimension_numbers = #tpu.dot_dimension_numbers<[2], [2], [1], [1], [0, 0, 0, 1, 1, 1], [0], [0]>} : vector<1x4x16xf32>, vector<1x32x16xf32>, vector<1x4x32xf32> -> vector<1x4x32xf32>
    %cst_38 = arith.constant 0.000000e+00 : f32
    %36 = vector.broadcast %cst_38 : f32 to vector<1x4x32xf32>
    %37 = arith.maximumf %35, %36 : vector<1x4x32xf32>
    %cst_39 = arith.constant dense<0.000000e+00> : vector<1x4x8xf32>
    %38 = tpu.matmul %37, %32, %cst_39 {dimension_numbers = #tpu.dot_dimension_numbers<[2], [2], [1], [1], [0, 0, 0, 1, 1, 1], [0], [0]>} : vector<1x4x32xf32>, vector<1x8x32xf32>, vector<1x4x8xf32> -> vector<1x4x8xf32>
    %cst_40 = arith.constant 0.000000e+00 : f32
    %39 = vector.broadcast %cst_40 : f32 to vector<1x4x8xf32>
    %40 = arith.maximumf %38, %39 : vector<1x4x8xf32>
    %c0_41 = arith.constant 0 : index
    %c1_42 = arith.constant 1 : index
    %c0_43 = arith.constant 0 : index
    %c0_44 = arith.constant 0 : index
    %41 = vector.load %arg8[%c0_41, %c1_42, %c0_43, %c0_44] : memref<1x6x4x8xf32, #tpu.memory_space<vmem>>, vector<1x1x4x8xf32>
    %42 = vector.shape_cast %41 : vector<1x1x4x8xf32> to vector<1x4x8xf32>
    %43 = vector.shape_cast %40 : vector<1x4x8xf32> to vector<1x1x4x8xf32>
    tpu.vector_store %arg8[%c0_41, %c1_42, %c0_43, %c0_44], %43 {strides = array<i32>} : memref<1x6x4x8xf32, #tpu.memory_space<vmem>>, vector<1x1x4x8xf32>,
    %cst_45 = arith.constant dense<0.000000e+00> : vector<1x32x16xf32>
    %44 = tpu.matmul %35, %34, %cst_45 {dimension_numbers = #tpu.dot_dimension_numbers<[1], [1], [2], [2], [0, 0, 0, 2, 1, 2], [0], [0]>} : vector<1x4x32xf32>, vector<1x4x16xf32>, vector<1x32x16xf32> -> vector<1x32x16xf32>
    %cst_46 = arith.constant dense<0.000000e+00> : vector<1x8x32xf32>
    %45 = tpu.matmul %38, %35, %cst_46 {dimension_numbers = #tpu.dot_dimension_numbers<[1], [1], [2], [2], [0, 0, 0, 2, 1, 2], [0], [0]>} : vector<1x4x8xf32>, vector<1x4x32xf32>, vector<1x8x32xf32> -> vector<1x8x32xf32>
    %46 = arith.addf %23, %44 : vector<1x32x16xf32>
    %cst_47 = arith.constant -1.000000e+00 : f32
    %cst_48 = arith.constant 1.000000e+00 : f32
    %47 = vector.broadcast %cst_47 : f32 to vector<1x32x16xf32>
    %48 = arith.maximumf %47, %46 : vector<1x32x16xf32>
    %49 = vector.broadcast %cst_48 : f32 to vector<1x32x16xf32>
    %50 = arith.minimumf %49, %48 : vector<1x32x16xf32>
    %51 = arith.addf %28, %45 : vector<1x8x32xf32>
    %cst_49 = arith.constant -1.000000e+00 : f32
    %cst_50 = arith.constant 1.000000e+00 : f32
    %52 = vector.broadcast %cst_49 : f32 to vector<1x8x32xf32>
    %53 = arith.maximumf %52, %51 : vector<1x8x32xf32>
    %54 = vector.broadcast %cst_50 : f32 to vector<1x8x32xf32>
    %55 = arith.minimumf %54, %53 : vector<1x8x32xf32>
    %56 = arith.mulf %2, %50 : vector<1x32x16xf32>
    %57 = arith.addf %30, %56 : vector<1x32x16xf32>
    %58 = arith.mulf %3, %55 : vector<1x8x32xf32>
    %59 = arith.addf %32, %58 : vector<1x8x32xf32>
    %c0_51 = arith.constant 0 : index
    %c2 = arith.constant 2 : index
    %c0_52 = arith.constant 0 : index
    %c0_53 = arith.constant 0 : index
    %60 = vector.load %arg1[%c0_51, %c2, %c0_52, %c0_53] : memref<1x6x4x16xf32, #tpu.memory_space<vmem>>, vector<1x1x4x16xf32>
    %61 = vector.shape_cast %60 : vector<1x1x4x16xf32> to vector<1x4x16xf32>
    %cst_54 = arith.constant dense<0.000000e+00> : vector<1x4x32xf32>
    %62 = tpu.matmul %61, %57, %cst_54 {dimension_numbers = #tpu.dot_dimension_numbers<[2], [2], [1], [1], [0, 0, 0, 1, 1, 1], [0], [0]>} : vector<1x4x16xf32>, vector<1x32x16xf32>, vector<1x4x32xf32> -> vector<1x4x32xf32>
    %cst_55 = arith.constant 0.000000e+00 : f32
    %63 = vector.broadcast %cst_55 : f32 to vector<1x4x32xf32>
    %64 = arith.maximumf %62, %63 : vector<1x4x32xf32>
    %cst_56 = arith.constant dense<0.000000e+00> : vector<1x4x8xf32>
    %65 = tpu.matmul %64, %59, %cst_56 {dimension_numbers = #tpu.dot_dimension_numbers<[2], [2], [1], [1], [0, 0, 0, 1, 1, 1], [0], [0]>} : vector<1x4x32xf32>, vector<1x8x32xf32>, vector<1x4x8xf32> -> vector<1x4x8xf32>
    %cst_57 = arith.constant 0.000000e+00 : f32
    %66 = vector.broadcast %cst_57 : f32 to vector<1x4x8xf32>
    %67 = arith.maximumf %65, %66 : vector<1x4x8xf32>
    %c0_58 = arith.constant 0 : index
    %c2_59 = arith.constant 2 : index
    %c0_60 = arith.constant 0 : index
    %c0_61 = arith.constant 0 : index
    %68 = vector.load %arg8[%c0_58, %c2_59, %c0_60, %c0_61] : memref<1x6x4x8xf32, #tpu.memory_space<vmem>>, vector<1x1x4x8xf32>
    %69 = vector.shape_cast %68 : vector<1x1x4x8xf32> to vector<1x4x8xf32>
    %70 = vector.shape_cast %67 : vector<1x4x8xf32> to vector<1x1x4x8xf32>
    tpu.vector_store %arg8[%c0_58, %c2_59, %c0_60, %c0_61], %70 {strides = array<i32>} : memref<1x6x4x8xf32, #tpu.memory_space<vmem>>, vector<1x1x4x8xf32>,
    %cst_62 = arith.constant dense<0.000000e+00> : vector<1x32x16xf32>
    %71 = tpu.matmul %62, %61, %cst_62 {dimension_numbers = #tpu.dot_dimension_numbers<[1], [1], [2], [2], [0, 0, 0, 2, 1, 2], [0], [0]>} : vector<1x4x32xf32>, vector<1x4x16xf32>, vector<1x32x16xf32> -> vector<1x32x16xf32>
    %cst_63 = arith.constant dense<0.000000e+00> : vector<1x8x32xf32>
    %72 = tpu.matmul %65, %62, %cst_63 {dimension_numbers = #tpu.dot_dimension_numbers<[1], [1], [2], [2], [0, 0, 0, 2, 1, 2], [0], [0]>} : vector<1x4x8xf32>, vector<1x4x32xf32>, vector<1x8x32xf32> -> vector<1x8x32xf32>
    %73 = arith.addf %50, %71 : vector<1x32x16xf32>
    %cst_64 = arith.constant -1.000000e+00 : f32
    %cst_65 = arith.constant 1.000000e+00 : f32
    %74 = vector.broadcast %cst_64 : f32 to vector<1x32x16xf32>
    %75 = arith.maximumf %74, %73 : vector<1x32x16xf32>
    %76 = vector.broadcast %cst_65 : f32 to vector<1x32x16xf32>
    %77 = arith.minimumf %76, %75 : vector<1x32x16xf32>
    %78 = arith.addf %55, %72 : vector<1x8x32xf32>
    %cst_66 = arith.constant -1.000000e+00 : f32
    %cst_67 = arith.constant 1.000000e+00 : f32
    %79 = vector.broadcast %cst_66 : f32 to vector<1x8x32xf32>
    %80 = arith.maximumf %79, %78 : vector<1x8x32xf32>
    %81 = vector.broadcast %cst_67 : f32 to vector<1x8x32xf32>
    %82 = arith.minimumf %81, %80 : vector<1x8x32xf32>
    %83 = arith.mulf %2, %77 : vector<1x32x16xf32>
    %84 = arith.addf %57, %83 : vector<1x32x16xf32>
    %85 = arith.mulf %3, %82 : vector<1x8x32xf32>
    %86 = arith.addf %59, %85 : vector<1x8x32xf32>
    %c0_68 = arith.constant 0 : index
    %c3 = arith.constant 3 : index
    %c0_69 = arith.constant 0 : index
    %c0_70 = arith.constant 0 : index
    %87 = vector.load %arg1[%c0_68, %c3, %c0_69, %c0_70] : memref<1x6x4x16xf32, #tpu.memory_space<vmem>>, vector<1x1x4x16xf32>
    %88 = vector.shape_cast %87 : vector<1x1x4x16xf32> to vector<1x4x16xf32>
    %cst_71 = arith.constant dense<0.000000e+00> : vector<1x4x32xf32>
    %89 = tpu.matmul %88, %84, %cst_71 {dimension_numbers = #tpu.dot_dimension_numbers<[2], [2], [1], [1], [0, 0, 0, 1, 1, 1], [0], [0]>} : vector<1x4x16xf32>, vector<1x32x16xf32>, vector<1x4x32xf32> -> vector<1x4x32xf32>
    %cst_72 = arith.constant 0.000000e+00 : f32
    %90 = vector.broadcast %cst_72 : f32 to vector<1x4x32xf32>
    %91 = arith.maximumf %89, %90 : vector<1x4x32xf32>
    %cst_73 = arith.constant dense<0.000000e+00> : vector<1x4x8xf32>
    %92 = tpu.matmul %91, %86, %cst_73 {dimension_numbers = #tpu.dot_dimension_numbers<[2], [2], [1], [1], [0, 0, 0, 1, 1, 1], [0], [0]>} : vector<1x4x32xf32>, vector<1x8x32xf32>, vector<1x4x8xf32> -> vector<1x4x8xf32>
    %cst_74 = arith.constant 0.000000e+00 : f32
    %93 = vector.broadcast %cst_74 : f32 to vector<1x4x8xf32>
    %94 = arith.maximumf %92, %93 : vector<1x4x8xf32>
    %c0_75 = arith.constant 0 : index
    %c3_76 = arith.constant 3 : index
    %c0_77 = arith.constant 0 : index
    %c0_78 = arith.constant 0 : index
    %95 = vector.load %arg8[%c0_75, %c3_76, %c0_77, %c0_78] : memref<1x6x4x8xf32, #tpu.memory_space<vmem>>, vector<1x1x4x8xf32>
    %96 = vector.shape_cast %95 : vector<1x1x4x8xf32> to vector<1x4x8xf32>
    %97 = vector.shape_cast %94 : vector<1x4x8xf32> to vector<1x1x4x8xf32>
    tpu.vector_store %arg8[%c0_75, %c3_76, %c0_77, %c0_78], %97 {strides = array<i32>} : memref<1x6x4x8xf32, #tpu.memory_space<vmem>>, vector<1x1x4x8xf32>,
    %cst_79 = arith.constant dense<0.000000e+00> : vector<1x32x16xf32>
    %98 = tpu.matmul %89, %88, %cst_79 {dimension_numbers = #tpu.dot_dimension_numbers<[1], [1], [2], [2], [0, 0, 0, 2, 1, 2], [0], [0]>} : vector<1x4x32xf32>, vector<1x4x16xf32>, vector<1x32x16xf32> -> vector<1x32x16xf32>
    %cst_80 = arith.constant dense<0.000000e+00> : vector<1x8x32xf32>
    %99 = tpu.matmul %92, %89, %cst_80 {dimension_numbers = #tpu.dot_dimension_numbers<[1], [1], [2], [2], [0, 0, 0, 2, 1, 2], [0], [0]>} : vector<1x4x8xf32>, vector<1x4x32xf32>, vector<1x8x32xf32> -> vector<1x8x32xf32>
    %100 = arith.addf %77, %98 : vector<1x32x16xf32>
    %cst_81 = arith.constant -1.000000e+00 : f32
    %cst_82 = arith.constant 1.000000e+00 : f32
    %101 = vector.broadcast %cst_81 : f32 to vector<1x32x16xf32>
    %102 = arith.maximumf %101, %100 : vector<1x32x16xf32>
    %103 = vector.broadcast %cst_82 : f32 to vector<1x32x16xf32>
    %104 = arith.minimumf %103, %102 : vector<1x32x16xf32>
    %105 = arith.addf %82, %99 : vector<1x8x32xf32>
    %cst_83 = arith.constant -1.000000e+00 : f32
    %cst_84 = arith.constant 1.000000e+00 : f32
    %106 = vector.broadcast %cst_83 : f32 to vector<1x8x32xf32>
    %107 = arith.maximumf %106, %105 : vector<1x8x32xf32>
    %108 = vector.broadcast %cst_84 : f32 to vector<1x8x32xf32>
    %109 = arith.minimumf %108, %107 : vector<1x8x32xf32>
    %110 = arith.mulf %2, %104 : vector<1x32x16xf32>
    %111 = arith.addf %84, %110 : vector<1x32x16xf32>
    %112 = arith.mulf %3, %109 : vector<1x8x32xf32>
    %113 = arith.addf %86, %112 : vector<1x8x32xf32>
    %c0_85 = arith.constant 0 : index
    %c4 = arith.constant 4 : index
    %c0_86 = arith.constant 0 : index
    %c0_87 = arith.constant 0 : index
    %114 = vector.load %arg1[%c0_85, %c4, %c0_86, %c0_87] : memref<1x6x4x16xf32, #tpu.memory_space<vmem>>, vector<1x1x4x16xf32>
    %115 = vector.shape_cast %114 : vector<1x1x4x16xf32> to vector<1x4x16xf32>
    %cst_88 = arith.constant dense<0.000000e+00> : vector<1x4x32xf32>
    %116 = tpu.matmul %115, %111, %cst_88 {dimension_numbers = #tpu.dot_dimension_numbers<[2], [2], [1], [1], [0, 0, 0, 1, 1, 1], [0], [0]>} : vector<1x4x16xf32>, vector<1x32x16xf32>, vector<1x4x32xf32> -> vector<1x4x32xf32>
    %cst_89 = arith.constant 0.000000e+00 : f32
    %117 = vector.broadcast %cst_89 : f32 to vector<1x4x32xf32>
    %118 = arith.maximumf %116, %117 : vector<1x4x32xf32>
    %cst_90 = arith.constant dense<0.000000e+00> : vector<1x4x8xf32>
    %119 = tpu.matmul %118, %113, %cst_90 {dimension_numbers = #tpu.dot_dimension_numbers<[2], [2], [1], [1], [0, 0, 0, 1, 1, 1], [0], [0]>} : vector<1x4x32xf32>, vector<1x8x32xf32>, vector<1x4x8xf32> -> vector<1x4x8xf32>
    %cst_91 = arith.constant 0.000000e+00 : f32
    %120 = vector.broadcast %cst_91 : f32 to vector<1x4x8xf32>
    %121 = arith.maximumf %119, %120 : vector<1x4x8xf32>
    %c0_92 = arith.constant 0 : index
    %c4_93 = arith.constant 4 : index
    %c0_94 = arith.constant 0 : index
    %c0_95 = arith.constant 0 : index
    %122 = vector.load %arg8[%c0_92, %c4_93, %c0_94, %c0_95] : memref<1x6x4x8xf32, #tpu.memory_space<vmem>>, vector<1x1x4x8xf32>
    %123 = vector.shape_cast %122 : vector<1x1x4x8xf32> to vector<1x4x8xf32>
    %124 = vector.shape_cast %121 : vector<1x4x8xf32> to vector<1x1x4x8xf32>
    tpu.vector_store %arg8[%c0_92, %c4_93, %c0_94, %c0_95], %124 {strides = array<i32>} : memref<1x6x4x8xf32, #tpu.memory_space<vmem>>, vector<1x1x4x8xf32>,
    %cst_96 = arith.constant dense<0.000000e+00> : vector<1x32x16xf32>
    %125 = tpu.matmul %116, %115, %cst_96 {dimension_numbers = #tpu.dot_dimension_numbers<[1], [1], [2], [2], [0, 0, 0, 2, 1, 2], [0], [0]>} : vector<1x4x32xf32>, vector<1x4x16xf32>, vector<1x32x16xf32> -> vector<1x32x16xf32>
    %cst_97 = arith.constant dense<0.000000e+00> : vector<1x8x32xf32>
    %126 = tpu.matmul %119, %116, %cst_97 {dimension_numbers = #tpu.dot_dimension_numbers<[1], [1], [2], [2], [0, 0, 0, 2, 1, 2], [0], [0]>} : vector<1x4x8xf32>, vector<1x4x32xf32>, vector<1x8x32xf32> -> vector<1x8x32xf32>
    %127 = arith.addf %104, %125 : vector<1x32x16xf32>
    %cst_98 = arith.constant -1.000000e+00 : f32
    %cst_99 = arith.constant 1.000000e+00 : f32
    %128 = vector.broadcast %cst_98 : f32 to vector<1x32x16xf32>
    %129 = arith.maximumf %128, %127 : vector<1x32x16xf32>
    %130 = vector.broadcast %cst_99 : f32 to vector<1x32x16xf32>
    %131 = arith.minimumf %130, %129 : vector<1x32x16xf32>
    %132 = arith.addf %109, %126 : vector<1x8x32xf32>
    %cst_100 = arith.constant -1.000000e+00 : f32
    %cst_101 = arith.constant 1.000000e+00 : f32
    %133 = vector.broadcast %cst_100 : f32 to vector<1x8x32xf32>
    %134 = arith.maximumf %133, %132 : vector<1x8x32xf32>
    %135 = vector.broadcast %cst_101 : f32 to vector<1x8x32xf32>
    %136 = arith.minimumf %135, %134 : vector<1x8x32xf32>
    %137 = arith.mulf %2, %131 : vector<1x32x16xf32>
    %138 = arith.addf %111, %137 : vector<1x32x16xf32>
    %139 = arith.mulf %3, %136 : vector<1x8x32xf32>
    %140 = arith.addf %113, %139 : vector<1x8x32xf32>
    %c0_102 = arith.constant 0 : index
    %c5 = arith.constant 5 : index
    %c0_103 = arith.constant 0 : index
    %c0_104 = arith.constant 0 : index
    %141 = vector.load %arg1[%c0_102, %c5, %c0_103, %c0_104] : memref<1x6x4x16xf32, #tpu.memory_space<vmem>>, vector<1x1x4x16xf32>
    %142 = vector.shape_cast %141 : vector<1x1x4x16xf32> to vector<1x4x16xf32>
    %cst_105 = arith.constant dense<0.000000e+00> : vector<1x4x32xf32>
    %143 = tpu.matmul %142, %138, %cst_105 {dimension_numbers = #tpu.dot_dimension_numbers<[2], [2], [1], [1], [0, 0, 0, 1, 1, 1], [0], [0]>} : vector<1x4x16xf32>, vector<1x32x16xf32>, vector<1x4x32xf32> -> vector<1x4x32xf32>
    %cst_106 = arith.constant 0.000000e+00 : f32
    %144 = vector.broadcast %cst_106 : f32 to vector<1x4x32xf32>
    %145 = arith.maximumf %143, %144 : vector<1x4x32xf32>
    %cst_107 = arith.constant dense<0.000000e+00> : vector<1x4x8xf32>
    %146 = tpu.matmul %145, %140, %cst_107 {dimension_numbers = #tpu.dot_dimension_numbers<[2], [2], [1], [1], [0, 0, 0, 1, 1, 1], [0], [0]>} : vector<1x4x32xf32>, vector<1x8x32xf32>, vector<1x4x8xf32> -> vector<1x4x8xf32>
    %cst_108 = arith.constant 0.000000e+00 : f32
    %147 = vector.broadcast %cst_108 : f32 to vector<1x4x8xf32>
    %148 = arith.maximumf %146, %147 : vector<1x4x8xf32>
    %c0_109 = arith.constant 0 : index
    %c5_110 = arith.constant 5 : index
    %c0_111 = arith.constant 0 : index
    %c0_112 = arith.constant 0 : index
    %149 = vector.load %arg8[%c0_109, %c5_110, %c0_111, %c0_112] : memref<1x6x4x8xf32, #tpu.memory_space<vmem>>, vector<1x1x4x8xf32>
    %150 = vector.shape_cast %149 : vector<1x1x4x8xf32> to vector<1x4x8xf32>
    %151 = vector.shape_cast %148 : vector<1x4x8xf32> to vector<1x1x4x8xf32>
    tpu.vector_store %arg8[%c0_109, %c5_110, %c0_111, %c0_112], %151 {strides = array<i32>} : memref<1x6x4x8xf32, #tpu.memory_space<vmem>>, vector<1x1x4x8xf32>,
    %cst_113 = arith.constant dense<0.000000e+00> : vector<1x32x16xf32>
    %152 = tpu.matmul %143, %142, %cst_113 {dimension_numbers = #tpu.dot_dimension_numbers<[1], [1], [2], [2], [0, 0, 0, 2, 1, 2], [0], [0]>} : vector<1x4x32xf32>, vector<1x4x16xf32>, vector<1x32x16xf32> -> vector<1x32x16xf32>
    %cst_114 = arith.constant dense<0.000000e+00> : vector<1x8x32xf32>
    %153 = tpu.matmul %146, %143, %cst_114 {dimension_numbers = #tpu.dot_dimension_numbers<[1], [1], [2], [2], [0, 0, 0, 2, 1, 2], [0], [0]>} : vector<1x4x8xf32>, vector<1x4x32xf32>, vector<1x8x32xf32> -> vector<1x8x32xf32>
    %154 = arith.addf %131, %152 : vector<1x32x16xf32>
    %cst_115 = arith.constant -1.000000e+00 : f32
    %cst_116 = arith.constant 1.000000e+00 : f32
    %155 = vector.broadcast %cst_115 : f32 to vector<1x32x16xf32>
    %156 = arith.maximumf %155, %154 : vector<1x32x16xf32>
    %157 = vector.broadcast %cst_116 : f32 to vector<1x32x16xf32>
    %158 = arith.minimumf %157, %156 : vector<1x32x16xf32>
    %159 = arith.addf %136, %153 : vector<1x8x32xf32>
    %cst_117 = arith.constant -1.000000e+00 : f32
    %cst_118 = arith.constant 1.000000e+00 : f32
    %160 = vector.broadcast %cst_117 : f32 to vector<1x8x32xf32>
    %161 = arith.maximumf %160, %159 : vector<1x8x32xf32>
    %162 = vector.broadcast %cst_118 : f32 to vector<1x8x32xf32>
    %163 = arith.minimumf %162, %161 : vector<1x8x32xf32>
    %164 = arith.mulf %2, %158 : vector<1x32x16xf32>
    %165 = arith.addf %138, %164 : vector<1x32x16xf32>
    %166 = arith.mulf %3, %163 : vector<1x8x32xf32>
    %167 = arith.addf %140, %166 : vector<1x8x32xf32>
    %c0_119 = arith.constant 0 : index
    %c0_120 = arith.constant 0 : index
    %c0_121 = arith.constant 0 : index
    %168 = vector.load %arg9[%c0_119, %c0_120, %c0_121] : memref<1x32x16xf32, #tpu.memory_space<vmem>>, vector<1x32x16xf32>
    tpu.vector_store %arg9[%c0_119, %c0_120, %c0_121], %165 {strides = array<i32>} : memref<1x32x16xf32, #tpu.memory_space<vmem>>, vector<1x32x16xf32>,
    %c0_122 = arith.constant 0 : index
    %c0_123 = arith.constant 0 : index
    %c0_124 = arith.constant 0 : index
    %169 = vector.load %arg10[%c0_122, %c0_123, %c0_124] : memref<1x8x32xf32, #tpu.memory_space<vmem>>, vector<1x8x32xf32>
    tpu.vector_store %arg10[%c0_122, %c0_123, %c0_124], %167 {strides = array<i32>} : memref<1x8x32xf32, #tpu.memory_space<vmem>>, vector<1x8x32xf32>,
    %c0_125 = arith.constant 0 : index
    %c0_126 = arith.constant 0 : index
    %c0_127 = arith.constant 0 : index
    %170 = vector.load %arg11[%c0_125, %c0_126, %c0_127] : memref<1x32x16xf32, #tpu.memory_space<vmem>>, vector<1x32x16xf32>
    tpu.vector_store %arg11[%c0_125, %c0_126, %c0_127], %158 {strides = array<i32>} : memref<1x32x16xf32, #tpu.memory_space<vmem>>, vector<1x32x16xf32>,
    %c0_128 = arith.constant 0 : index
    %c0_129 = arith.constant 0 : index
    %c0_130 = arith.constant 0 : index
    %171 = vector.load %arg12[%c0_128, %c0_129, %c0_130] : memref<1x8x32xf32, #tpu.memory_space<vmem>>, vector<1x8x32xf32>
    tpu.vector_store %arg12[%c0_128, %c0_129, %c0_130], %163 {strides = array<i32>} : memref<1x8x32xf32, #tpu.memory_space<vmem>>, vector<1x8x32xf32>,
    return
  }
  func.func @transform_0(%arg0: i32) -> (i32, i32, i32, i32) {
    %c0_i32 = arith.constant 0 : i32
    %c0_i32_0 = arith.constant 0 : i32
    %c0_i32_1 = arith.constant 0 : i32
    %c0_i32_2 = arith.constant 0 : i32
    return %arg0, %c0_i32, %c0_i32_0, %c0_i32_1 : i32, i32, i32, i32
  }
  func.func @transform_1(%arg0: i32) -> (i32, i32, i32) {
    %c0_i32 = arith.constant 0 : i32
    %c0_i32_0 = arith.constant 0 : i32
    %c0_i32_1 = arith.constant 0 : i32
    return %arg0, %c0_i32, %c0_i32_0 : i32, i32, i32
  }
  func.func @transform_2(%arg0: i32) -> (i32, i32, i32) {
    %c0_i32 = arith.constant 0 : i32
    %c0_i32_0 = arith.constant 0 : i32
    %c0_i32_1 = arith.constant 0 : i32
    return %arg0, %c0_i32, %c0_i32_0 : i32, i32, i32
  }
  func.func @transform_3(%arg0: i32) -> (i32, i32, i32) {
    %c0_i32 = arith.constant 0 : i32
    %c0_i32_0 = arith.constant 0 : i32
    %c0_i32_1 = arith.constant 0 : i32
    return %arg0, %c0_i32, %c0_i32_0 : i32, i32, i32
  }
  func.func @transform_4(%arg0: i32) -> (i32, i32, i32) {
    %c0_i32 = arith.constant 0 : i32
    %c0_i32_0 = arith.constant 0 : i32
    %c0_i32_1 = arith.constant 0 : i32
    return %arg0, %c0_i32, %c0_i32_0 : i32, i32, i32
  }
  func.func @transform_5(%arg0: i32) -> (i32, i32, i32) {
    %c0_i32 = arith.constant 0 : i32
    %c0_i32_0 = arith.constant 0 : i32
    %c0_i32_1 = arith.constant 0 : i32
    return %arg0, %c0_i32, %c0_i32_0 : i32, i32, i32
  }
  func.func @transform_6(%arg0: i32) -> (i32, i32, i32) {
    %c0_i32 = arith.constant 0 : i32
    %c0_i32_0 = arith.constant 0 : i32
    %c0_i32_1 = arith.constant 0 : i32
    return %arg0, %c0_i32, %c0_i32_0 : i32, i32, i32
  }
  func.func @transform_7(%arg0: i32) -> (i32, i32, i32, i32) {
    %c0_i32 = arith.constant 0 : i32
    %c0_i32_0 = arith.constant 0 : i32
    %c0_i32_1 = arith.constant 0 : i32
    %c0_i32_2 = arith.constant 0 : i32
    return %arg0, %c0_i32, %c0_i32_0, %c0_i32_1 : i32, i32, i32, i32
  }
  func.func @transform_8(%arg0: i32) -> (i32, i32, i32) {
    %c0_i32 = arith.constant 0 : i32
    %c0_i32_0 = arith.constant 0 : i32
    %c0_i32_1 = arith.constant 0 : i32
    return %arg0, %c0_i32, %c0_i32_0 : i32, i32, i32
  }
  func.func @transform_9(%arg0: i32) -> (i32, i32, i32) {
    %c0_i32 = arith.constant 0 : i32
    %c0_i32_0 = arith.constant 0 : i32
    %c0_i32_1 = arith.constant 0 : i32
    return %arg0, %c0_i32, %c0_i32_0 : i32, i32, i32
  }
  func.func @transform_10(%arg0: i32) -> (i32, i32, i32) {
    %c0_i32 = arith.constant 0 : i32
    %c0_i32_0 = arith.constant 0 : i32
    %c0_i32_1 = arith.constant 0 : i32
    return %arg0, %c0_i32, %c0_i32_0 : i32, i32, i32
  }
  func.func @transform_11(%arg0: i32) -> (i32, i32, i32) {
    %c0_i32 = arith.constant 0 : i32
    %c0_i32_0 = arith.constant 0 : i32
    %c0_i32_1 = arith.constant 0 : i32
    return %arg0, %c0_i32, %c0_i32_0 : i32, i32, i32
  }
}

</mosaic_0001>

<llo_original>
// kernel: tpu_custom_call.1
$region0: #{tpu_custom_call.1}
  #allocation0 [shape = 'u32[]', space=smem, size = 0x4, offset = 0x4, fixed_abs, tag = 'smem constant byte address 0x4 - core index']
  #allocation1 [shape = 'u32[144,128]{1,0:T(1,128)}', space=vmem, size = 0x12000, scoped, tag = 'internal scratch']
  %s0 = inlined_call_operand.vmem [shape: f32[2,6,4,16], index: 0, kind: input, shape index: {}]
  %s1 = inlined_call_operand.vmem [shape: f32[2,32,16], index: 1, kind: input, shape index: {}, may-alias: {1,8}]
  %s2 = inlined_call_operand.vmem [shape: f32[2,8,32], index: 2, kind: input, shape index: {}, may-alias: {2,9}]
  %s3 = inlined_call_operand.vmem [shape: f32[2,32,16], index: 3, kind: input, shape index: {}]
  %s4 = inlined_call_operand.vmem [shape: f32[2,8,32], index: 4, kind: input, shape index: {}]
  %s5 = inlined_call_operand.vmem [shape: f32[2,32,16], index: 5, kind: input, shape index: {}, may-alias: {5,10}]
  %s6 = inlined_call_operand.vmem [shape: f32[2,8,32], index: 6, kind: input, shape index: {}, may-alias: {6,11}]
  %s7 = inlined_call_operand.hbm [shape: f32[2,6,4,8], index: 7, kind: output, shape index: {0}]
  %s8 = inlined_call_operand.vmem [shape: f32[2,32,16], index: 8, kind: output, shape index: {1}, may-alias: {1,8}]
  %s9 = inlined_call_operand.vmem [shape: f32[2,8,32], index: 9, kind: output, shape index: {2}, may-alias: {2,9}]
  %s10 = inlined_call_operand.vmem [shape: f32[2,32,16], index: 10, kind: output, shape index: {3}, may-alias: {5,10}]
  %s11 = inlined_call_operand.vmem [shape: f32[2,8,32], index: 11, kind: output, shape index: {4}, may-alias: {6,11}]
  %12 = xla_tuple %s7, %s8, %s9, %s10, %s11
  %s13 = sld [smem:[#allocation0]]
  $region93: #{tpu_custom_call.1} parent=0
    _
  %s15 = ssub.s32 1, %s13
  %s16 = scalar_select 0, %s15, %s13
  $region1: #{tpu_custom_call.1} parent=0
    #allocation2 [shape = 'u8[24576]{0}', space=vmem, size = 0x6000, scoped, tag = 'output window, operand 0']
    #allocation3 [shape = 's32[2]{0}', space=sflag, size = 0x8, scoped, tag = 'scoped memory for tpu_custom_call.1']
    %17 = vsyncpa [#allocation3], 0
    %s18 = scalar_lea.sflag [#allocation3], 1
    %19 = vsyncpa %s18, 0
    loop: start=0, step=1, limit=4
    $region2: #{tpu_custom_call.1} parent=1 // loop_pre_header
      _
    $region3: #{tpu_custom_call.1} parent=1 // loop_header
      %s21 = sphi 0, %s25
      %p22 = scmp.ge.s32.totalorder %s21, 4
      %s31 = sphi 0, %s33
      %s34 = sphi 0, %s31
      %s35 = sphi 0, %s34
      %s51 = sphi 0, %s35
      %s57 = sphi 0, %s59
      %s60 = sphi 0, %s57
      %s61 = sphi 0, %s60
      %s77 = sphi 0, %s61
      %s83 = sphi 0, %s85
      %s86 = sphi 0, %s83
      %s87 = sphi 0, %s86
      %s103 = sphi 0, %s87
      %s109 = sphi 0, %s111
      %s112 = sphi 0, %s109
      %s113 = sphi 0, %s112
      %s129 = sphi 0, %s113
      %s135 = sphi 0, %s137
      %s138 = sphi 0, %s135
      %s139 = sphi 0, %s138
      %s155 = sphi 0, %s139
      %s161 = sphi 0, %s163
      %s164 = sphi 0, %s161
      %s165 = sphi 0, %s164
      %s181 = sphi 0, %s165
      %s187 = sphi 0, %s189
      %s190 = sphi 0, %s187
      %s191 = sphi 0, %s190
      %s207 = sphi 0, %s191
      %s213 = sphi 0, %s215
      %s216 = sphi 0, %s213
      %s217 = sphi 0, %s216
      %s233 = sphi 0, %s217
      %s239 = sphi 0, %s241
      %s242 = sphi 0, %s239
      %s243 = sphi 0, %s242
      %s259 = sphi 0, %s243
      %s265 = sphi 0, %s267
      %s268 = sphi 0, %s265
      %s269 = sphi 0, %s268
      %s285 = sphi 0, %s269
      %s291 = sphi 0, %s293
      %s294 = sphi 0, %s291
      %s295 = sphi 0, %s294
      %s311 = sphi 0, %s295
      %s317 = sphi 0, %s319
      %s320 = sphi 0, %s317
      %s321 = sphi 0, %s320
      %s337 = sphi 0, %s321
    $region4: #{tpu_custom_call.1} parent=1 // loop_header_branch
      %24 = sbr.rel (%p22) target = $region8
    $region5: #{tpu_custom_call.1} parent=1 // loop_body
      %s26 = ssub.s32 %s21, 1
      %s27 = ssub.s32 %s21, 2
      %s28 = sadd.s32 %s21, 1
      %s29 = ssub.s32 %s21, %s28
      %p30 = scmp.eq.s32.totalorder %s29, 0
      %s32 = sadd.s32 %s31, 1
      %s33 = scalar_select %p30, %s31, %s32
      %p36 = pneg %p30
      %p37 = scmp.eq.s32.totalorder %s21, 1
      %p38 = por %p36, %p37
      %p39 = scmp.ne.s32.totalorder %s31, %s34
      %p40 = scmp.eq.s32.totalorder %s21, 0
      %p41 = por %p39, %p40
      %p42 = scmp.ne.s32.totalorder %s31, %s34
      %p43 = scmp.eq.s32.totalorder %s26, 1
      %p44 = por %p42, %p43
      %p45 = scmp.ne.s32.totalorder %s34, %s35
      %p46 = scmp.eq.s32.totalorder %s26, 0
      %p47 = por %p45, %p46
      %p48 = scmp.ne.s32.totalorder %s34, %s35
      %p49 = scmp.eq.s32.totalorder %s27, 1
      %p50 = por %p48, %p49
      %p52 = scmp.ne.s32.totalorder %s35, %s51
      %p53 = scmp.eq.s32.totalorder %s27, 0
      %p54 = por %p52, %p53
      %s55 = ssub.s32 %s21, %s28
      %p56 = scmp.eq.s32.totalorder %s55, 0
      %s58 = sadd.s32 %s57, 1
      %s59 = scalar_select %p56, %s57, %s58
      %p62 = pneg %p56
      %p63 = scmp.eq.s32.totalorder %s21, 1
      %p64 = por %p62, %p63
      %p65 = scmp.ne.s32.totalorder %s57, %s60
      %p66 = scmp.eq.s32.totalorder %s21, 0
      %p67 = por %p65, %p66
      %p68 = scmp.ne.s32.totalorder %s57, %s60
      %p69 = scmp.eq.s32.totalorder %s26, 1
      %p70 = por %p68, %p69
      %p71 = scmp.ne.s32.totalorder %s60, %s61
      %p72 = scmp.eq.s32.totalorder %s26, 0
      %p73 = por %p71, %p72
      %p74 = scmp.ne.s32.totalorder %s60, %s61
      %p75 = scmp.eq.s32.totalorder %s27, 1
      %p76 = por %p74, %p75
      %p78 = scmp.ne.s32.totalorder %s61, %s77
      %p79 = scmp.eq.s32.totalorder %s27, 0
      %p80 = por %p78, %p79
      %s81 = ssub.s32 %s21, %s28
      %p82 = scmp.eq.s32.totalorder %s81, 0
      %s84 = sadd.s32 %s83, 1
      %s85 = scalar_select %p82, %s83, %s84
      %p88 = pneg %p82
      %p89 = scmp.eq.s32.totalorder %s21, 1
      %p90 = por %p88, %p89
      %p91 = scmp.ne.s32.totalorder %s83, %s86
      %p92 = scmp.eq.s32.totalorder %s21, 0
      %p93 = por %p91, %p92
      %p94 = scmp.ne.s32.totalorder %s83, %s86
      %p95 = scmp.eq.s32.totalorder %s26, 1
      %p96 = por %p94, %p95
      %p97 = scmp.ne.s32.totalorder %s86, %s87
      %p98 = scmp.eq.s32.totalorder %s26, 0
      %p99 = por %p97, %p98
      %p100 = scmp.ne.s32.totalorder %s86, %s87
      %p101 = scmp.eq.s32.totalorder %s27, 1
      %p102 = por %p100, %p101
      %p104 = scmp.ne.s32.totalorder %s87, %s103
      %p105 = scmp.eq.s32.totalorder %s27, 0
      %p106 = por %p104, %p105
      %s107 = ssub.s32 %s21, %s28
      %p108 = scmp.eq.s32.totalorder %s107, 0
      %s110 = sadd.s32 %s109, 1
      %s111 = scalar_select %p108, %s109, %s110
      %p114 = pneg %p108
      %p115 = scmp.eq.s32.totalorder %s21, 1
      %p116 = por %p114, %p115
      %p117 = scmp.ne.s32.totalorder %s109, %s112
      %p118 = scmp.eq.s32.totalorder %s21, 0
      %p119 = por %p117, %p118
      %p120 = scmp.ne.s32.totalorder %s109, %s112
      %p121 = scmp.eq.s32.totalorder %s26, 1
      %p122 = por %p120, %p121
      %p123 = scmp.ne.s32.totalorder %s112, %s113
      %p124 = scmp.eq.s32.totalorder %s26, 0
      %p125 = por %p123, %p124
      %p126 = scmp.ne.s32.totalorder %s112, %s113
      %p127 = scmp.eq.s32.totalorder %s27, 1
      %p128 = por %p126, %p127
      %p130 = scmp.ne.s32.totalorder %s113, %s129
      %p131 = scmp.eq.s32.totalorder %s27, 0
      %p132 = por %p130, %p131
      %s133 = ssub.s32 %s21, %s28
      %p134 = scmp.eq.s32.totalorder %s133, 0
      %s136 = sadd.s32 %s135, 1
      %s137 = scalar_select %p134, %s135, %s136
      %p140 = pneg %p134
      %p141 = scmp.eq.s32.totalorder %s21, 1
      %p142 = por %p140, %p141
      %p143 = scmp.ne.s32.totalorder %s135, %s138
      %p144 = scmp.eq.s32.totalorder %s21, 0
      %p145 = por %p143, %p144
      %p146 = scmp.ne.s32.totalorder %s135, %s138
      %p147 = scmp.eq.s32.totalorder %s26, 1
      %p148 = por %p146, %p147
      %p149 = scmp.ne.s32.totalorder %s138, %s139
      %p150 = scmp.eq.s32.totalorder %s26, 0
      %p151 = por %p149, %p150
      %p152 = scmp.ne.s32.totalorder %s138, %s139
      %p153 = scmp.eq.s32.totalorder %s27, 1
      %p154 = por %p152, %p153
      %p156 = scmp.ne.s32.totalorder %s139, %s155
      %p157 = scmp.eq.s32.totalorder %s27, 0
      %p158 = por %p156, %p157
      %s159 = ssub.s32 %s21, %s28
      %p160 = scmp.eq.s32.totalorder %s159, 0
      %s162 = sadd.s32 %s161, 1
      %s163 = scalar_select %p160, %s161, %s162
      %p166 = pneg %p160
      %p167 = scmp.eq.s32.totalorder %s21, 1
      %p168 = por %p166, %p167
      %p169 = scmp.ne.s32.totalorder %s161, %s164
      %p170 = scmp.eq.s32.totalorder %s21, 0
      %p171 = por %p169, %p170
      %p172 = scmp.ne.s32.totalorder %s161, %s164
      %p173 = scmp.eq.s32.totalorder %s26, 1
      %p174 = por %p172, %p173
      %p175 = scmp.ne.s32.totalorder %s164, %s165
      %p176 = scmp.eq.s32.totalorder %s26, 0
      %p177 = por %p175, %p176
      %p178 = scmp.ne.s32.totalorder %s164, %s165
      %p179 = scmp.eq.s32.totalorder %s27, 1
      %p180 = por %p178, %p179
      %p182 = scmp.ne.s32.totalorder %s165, %s181
      %p183 = scmp.eq.s32.totalorder %s27, 0
      %p184 = por %p182, %p183
      %s185 = ssub.s32 %s21, %s28
      %p186 = scmp.eq.s32.totalorder %s185, 0
      %s188 = sadd.s32 %s187, 1
      %s189 = scalar_select %p186, %s187, %s188
      %p192 = pneg %p186
      %p193 = scmp.eq.s32.totalorder %s21, 1
      %p194 = por %p192, %p193
      %p195 = scmp.ne.s32.totalorder %s187, %s190
      %p196 = scmp.eq.s32.totalorder %s21, 0
      %p197 = por %p195, %p196
      %p198 = scmp.ne.s32.totalorder %s187, %s190
      %p199 = scmp.eq.s32.totalorder %s26, 1
      %p200 = por %p198, %p199
      %p201 = scmp.ne.s32.totalorder %s190, %s191
      %p202 = scmp.eq.s32.totalorder %s26, 0
      %p203 = por %p201, %p202
      %p204 = scmp.ne.s32.totalorder %s190, %s191
      %p205 = scmp.eq.s32.totalorder %s27, 1
      %p206 = por %p204, %p205
      %p208 = scmp.ne.s32.totalorder %s191, %s207
      %p209 = scmp.eq.s32.totalorder %s27, 0
      %p210 = por %p208, %p209
      %s211 = ssub.s32 %s21, %s28
      %p212 = scmp.eq.s32.totalorder %s211, 0
      %s214 = sadd.s32 %s213, 1
      %s215 = scalar_select %p212, %s213, %s214
      %p218 = pneg %p212
      %p219 = scmp.eq.s32.totalorder %s21, 1
      %p220 = por %p218, %p219
      %p221 = scmp.ne.s32.totalorder %s213, %s216
      %p222 = scmp.eq.s32.totalorder %s21, 0
      %p223 = por %p221, %p222
      %p224 = scmp.ne.s32.totalorder %s213, %s216
      %p225 = scmp.eq.s32.totalorder %s26, 1
      %p226 = por %p224, %p225
      %p227 = scmp.ne.s32.totalorder %s216, %s217
      %p228 = scmp.eq.s32.totalorder %s26, 0
      %p229 = por %p227, %p228
      %p230 = scmp.ne.s32.totalorder %s216, %s217
      %p231 = scmp.eq.s32.totalorder %s27, 1
      %p232 = por %p230, %p231
      %p234 = scmp.ne.s32.totalorder %s217, %s233
      %p235 = scmp.eq.s32.totalorder %s27, 0
      %p236 = por %p234, %p235
      %s237 = ssub.s32 %s21, %s28
      %p238 = scmp.eq.s32.totalorder %s237, 0
      %s240 = sadd.s32 %s239, 1
      %s241 = scalar_select %p238, %s239, %s240
      %p244 = pneg %p238
      %p245 = scmp.eq.s32.totalorder %s21, 1
      %p246 = por %p244, %p245
      %p247 = scmp.ne.s32.totalorder %s239, %s242
      %p248 = scmp.eq.s32.totalorder %s21, 0
      %p249 = por %p247, %p248
      %p250 = scmp.ne.s32.totalorder %s239, %s242
      %p251 = scmp.eq.s32.totalorder %s26, 1
      %p252 = por %p250, %p251
      %p253 = scmp.ne.s32.totalorder %s242, %s243
      %p254 = scmp.eq.s32.totalorder %s26, 0
      %p255 = por %p253, %p254
      %p256 = scmp.ne.s32.totalorder %s242, %s243
      %p257 = scmp.eq.s32.totalorder %s27, 1
      %p258 = por %p256, %p257
      %p260 = scmp.ne.s32.totalorder %s243, %s259
      %p261 = scmp.eq.s32.totalorder %s27, 0
      %p262 = por %p260, %p261
      %s263 = ssub.s32 %s21, %s28
      %p264 = scmp.eq.s32.totalorder %s263, 0
      %s266 = sadd.s32 %s265, 1
      %s267 = scalar_select %p264, %s265, %s266
      %p270 = pneg %p264
      %p271 = scmp.eq.s32.totalorder %s21, 1
      %p272 = por %p270, %p271
      %p273 = scmp.ne.s32.totalorder %s265, %s268
      %p274 = scmp.eq.s32.totalorder %s21, 0
      %p275 = por %p273, %p274
      %p276 = scmp.ne.s32.totalorder %s265, %s268
      %p277 = scmp.eq.s32.totalorder %s26, 1
      %p278 = por %p276, %p277
      %p279 = scmp.ne.s32.totalorder %s268, %s269
      %p280 = scmp.eq.s32.totalorder %s26, 0
      %p281 = por %p279, %p280
      %p282 = scmp.ne.s32.totalorder %s268, %s269
      %p283 = scmp.eq.s32.totalorder %s27, 1
      %p284 = por %p282, %p283
      %p286 = scmp.ne.s32.totalorder %s269, %s285
      %p287 = scmp.eq.s32.totalorder %s27, 0
      %p288 = por %p286, %p287
      %s289 = ssub.s32 %s21, %s28
      %p290 = scmp.eq.s32.totalorder %s289, 0
      %s292 = sadd.s32 %s291, 1
      %s293 = scalar_select %p290, %s291, %s292
      %p296 = pneg %p290
      %p297 = scmp.eq.s32.totalorder %s21, 1
      %p298 = por %p296, %p297
      %p299 = scmp.ne.s32.totalorder %s291, %s294
      %p300 = scmp.eq.s32.totalorder %s21, 0
      %p301 = por %p299, %p300
      %p302 = scmp.ne.s32.totalorder %s291, %s294
      %p303 = scmp.eq.s32.totalorder %s26, 1
      %p304 = por %p302, %p303
      %p305 = scmp.ne.s32.totalorder %s294, %s295
      %p306 = scmp.eq.s32.totalorder %s26, 0
      %p307 = por %p305, %p306
      %p308 = scmp.ne.s32.totalorder %s294, %s295
      %p309 = scmp.eq.s32.totalorder %s27, 1
      %p310 = por %p308, %p309
      %p312 = scmp.ne.s32.totalorder %s295, %s311
      %p313 = scmp.eq.s32.totalorder %s27, 0
      %p314 = por %p312, %p313
      %s315 = ssub.s32 %s21, %s28
      %p316 = scmp.eq.s32.totalorder %s315, 0
      %s318 = sadd.s32 %s317, 1
      %s319 = scalar_select %p316, %s317, %s318
      %p322 = pneg %p316
      %p323 = scmp.eq.s32.totalorder %s21, 1
      %p324 = por %p322, %p323
      %p325 = scmp.ne.s32.totalorder %s317, %s320
      %p326 = scmp.eq.s32.totalorder %s21, 0
      %p327 = por %p325, %p326
      %p328 = scmp.ne.s32.totalorder %s317, %s320
      %p329 = scmp.eq.s32.totalorder %s26, 1
      %p330 = por %p328, %p329
      %p331 = scmp.ne.s32.totalorder %s320, %s321
      %p332 = scmp.eq.s32.totalorder %s26, 0
      %p333 = por %p331, %p332
      %p334 = scmp.ne.s32.totalorder %s320, %s321
      %p335 = scmp.eq.s32.totalorder %s27, 1
      %p336 = por %p334, %p335
      %p338 = scmp.ne.s32.totalorder %s321, %s337
      %p339 = scmp.eq.s32.totalorder %s27, 0
      %p340 = por %p338, %p339
      %p341 = scmp.le.s32.totalorder 1, %s21
      %p342 = scmp.lt.s32.totalorder %s21, 3
      %p343 = pnand %p341, %p342
      %p344 = pneg %p343
      // Predicated region
      $region9: #{tpu_custom_call.1} parent=5 // pred_check
        _
      $region10: #{tpu_custom_call.1} parent=5 // pred_check_branch
        %346 = sbr.rel (%p343) target = $region12
      $region11: #{tpu_custom_call.1} parent=5 // pred_region
        %s347 = ssub.s32 %s21, 1
      $region12: #{tpu_custom_call.1} parent=5 // pred_fallthru
        _
      %p348 = scmp.lt.s32.totalorder %s21, 2
      // Predicated region
      $region13: #{tpu_custom_call.1} parent=5 // pred_check
        %p349 = pneg %p348
      $region14: #{tpu_custom_call.1} parent=5 // pred_check_branch
        %351 = sbr.rel (%p349) target = $region16
      $region15: #{tpu_custom_call.1} parent=5 // pred_region
        // Predicated region
        $region17: #{tpu_custom_call.1} parent=15 // pred_check
          %p352 = pneg %p41
        $region18: #{tpu_custom_call.1} parent=15 // pred_check_branch
          %354 = sbr.rel (%p352) target = $region20
        $region19: #{tpu_custom_call.1} parent=15 // pred_region
          %p355 = scmp.lt.s32.totalorder %s21, 1
          %s356 = scalar_select %p355, %s21, 1
          %s357 = smul.addr %s356, 6
          %s358 = smul.addr %s357, 4
          %s359 = scalar_lea.vmem %s0, %s358
        $region20: #{tpu_custom_call.1} parent=15 // pred_fallthru
          _
        // Predicated region
        $region21: #{tpu_custom_call.1} parent=15 // pred_check
          %p360 = pneg %p67
        $region22: #{tpu_custom_call.1} parent=15 // pred_check_branch
          %362 = sbr.rel (%p360) target = $region24
        $region23: #{tpu_custom_call.1} parent=15 // pred_region
          %p363 = scmp.lt.s32.totalorder %s21, 1
          %s364 = scalar_select %p363, %s21, 1
          %s365 = smul.addr %s364, 4
          %s366 = smul.addr %s365, 8
          %s367 = scalar_lea.vmem %s1, %s366
        $region24: #{tpu_custom_call.1} parent=15 // pred_fallthru
          _
        // Predicated region
        $region25: #{tpu_custom_call.1} parent=15 // pred_check
          %p368 = pneg %p93
        $region26: #{tpu_custom_call.1} parent=15 // pred_check_branch
          %370 = sbr.rel (%p368) target = $region28
        $region27: #{tpu_custom_call.1} parent=15 // pred_region
          %p371 = scmp.lt.s32.totalorder %s21, 1
          %s372 = scalar_select %p371, %s21, 1
          %s373 = smul.addr %s372, 8
          %s374 = scalar_lea.vmem %s2, %s373
        $region28: #{tpu_custom_call.1} parent=15 // pred_fallthru
          _
        // Predicated region
        $region29: #{tpu_custom_call.1} parent=15 // pred_check
          %p375 = pneg %p119
        $region30: #{tpu_custom_call.1} parent=15 // pred_check_branch
          %377 = sbr.rel (%p375) target = $region32
        $region31: #{tpu_custom_call.1} parent=15 // pred_region
          %p378 = scmp.lt.s32.totalorder %s21, 1
          %s379 = scalar_select %p378, %s21, 1
          %s380 = smul.addr %s379, 4
          %s381 = smul.addr %s380, 8
          %s382 = scalar_lea.vmem %s3, %s381
        $region32: #{tpu_custom_call.1} parent=15 // pred_fallthru
          _
        // Predicated region
        $region33: #{tpu_custom_call.1} parent=15 // pred_check
          %p383 = pneg %p145
        $region34: #{tpu_custom_call.1} parent=15 // pred_check_branch
          %385 = sbr.rel (%p383) target = $region36
        $region35: #{tpu_custom_call.1} parent=15 // pred_region
          %p386 = scmp.lt.s32.totalorder %s21, 1
          %s387 = scalar_select %p386, %s21, 1
          %s388 = smul.addr %s387, 8
          %s389 = scalar_lea.vmem %s4, %s388
        $region36: #{tpu_custom_call.1} parent=15 // pred_fallthru
          _
        // Predicated region
        $region37: #{tpu_custom_call.1} parent=15 // pred_check
          %p390 = pneg %p171
        $region38: #{tpu_custom_call.1} parent=15 // pred_check_branch
          %392 = sbr.rel (%p390) target = $region40
        $region39: #{tpu_custom_call.1} parent=15 // pred_region
          %p393 = scmp.lt.s32.totalorder %s21, 1
          %s394 = scalar_select %p393, %s21, 1
          %s395 = smul.addr %s394, 4
          %s396 = smul.addr %s395, 8
          %s397 = scalar_lea.vmem %s5, %s396
        $region40: #{tpu_custom_call.1} parent=15 // pred_fallthru
          _
        // Predicated region
        $region41: #{tpu_custom_call.1} parent=15 // pred_check
          %p398 = pneg %p197
        $region42: #{tpu_custom_call.1} parent=15 // pred_check_branch
          %400 = sbr.rel (%p398) target = $region44
        $region43: #{tpu_custom_call.1} parent=15 // pred_region
          %p401 = scmp.lt.s32.totalorder %s21, 1
          %s402 = scalar_select %p401, %s21, 1
          %s403 = smul.addr %s402, 8
          %s404 = scalar_lea.vmem %s6, %s403
        $region44: #{tpu_custom_call.1} parent=15 // pred_fallthru
          _
      $region16: #{tpu_custom_call.1} parent=5 // pred_fallthru
        _
      %p405 = scmp.le.s32.totalorder 1, %s21
      %p406 = scmp.lt.s32.totalorder %s21, 3
      %p407 = pnand %p405, %p406
      %p408 = pneg %p407
      // Predicated region
      $region45: #{tpu_custom_call.1} parent=5 // pred_check
        _
      $region46: #{tpu_custom_call.1} parent=5 // pred_check_branch
        %410 = sbr.rel (%p407) target = $region48
      $region47: #{tpu_custom_call.1} parent=5 // pred_region
        %s411 = ssub.s32 %s21, 1
        %p412 = scmp.lt.s32.totalorder %s26, 1
        %s413 = scalar_select %p412, %s26, 1
        %s414 = smul.addr %s413, 6
        %s415 = smul.addr %s414, 4
        %s416 = scalar_lea.vmem %s0, %s415
        %p417 = pneg %p47
        %p418 = pneg %p44
        %p419 = scmp.lt.s32.totalorder %s26, 1
        %s420 = scalar_select %p419, %s26, 1
        %s421 = smul.addr %s420, 4
        %s422 = smul.addr %s421, 8
        %s423 = scalar_lea.vmem %s1, %s422
        %p424 = pneg %p73
        %p425 = pneg %p70
        %p426 = scmp.lt.s32.totalorder %s26, 1
        %s427 = scalar_select %p426, %s26, 1
        %s428 = smul.addr %s427, 8
        %s429 = scalar_lea.vmem %s2, %s428
        %p430 = pneg %p99
        %p431 = pneg %p96
        %p432 = scmp.lt.s32.totalorder %s26, 1
        %s433 = scalar_select %p432, %s26, 1
        %s434 = smul.addr %s433, 4
        %s435 = smul.addr %s434, 8
        %s436 = scalar_lea.vmem %s3, %s435
        %p437 = pneg %p125
        %p438 = pneg %p122
        %p439 = scmp.lt.s32.totalorder %s26, 1
        %s440 = scalar_select %p439, %s26, 1
        %s441 = smul.addr %s440, 8
        %s442 = scalar_lea.vmem %s4, %s441
        %p443 = pneg %p151
        %p444 = pneg %p148
        %p445 = scmp.lt.s32.totalorder %s26, 1
        %s446 = scalar_select %p445, %s26, 1
        %s447 = smul.addr %s446, 4
        %s448 = smul.addr %s447, 8
        %s449 = scalar_lea.vmem %s5, %s448
        %p450 = pneg %p177
        %p451 = pneg %p174
        %p452 = scmp.lt.s32.totalorder %s26, 1
        %s453 = scalar_select %p452, %s26, 1
        %s454 = smul.addr %s453, 8
        %s455 = scalar_lea.vmem %s6, %s454
        %p456 = pneg %p203
        %p457 = pneg %p200
        %p458 = pneg %p229
        %p459 = pneg %p226
        %s460 = sand.u32 %s216, 1
        %s461 = scalar_lea.sflag [#allocation3], %s460
        %s462 = sand.u32 %s216, 1
        %s463 = smul.addr %s462, 24
        %s464 = scalar_lea.vmem [#allocation2], %s463
        %p465 = pneg %p255
        %p466 = pneg %p252
        %p467 = scmp.lt.s32.totalorder %s26, 1
        %s468 = scalar_select %p467, %s26, 1
        %s469 = smul.addr %s468, 4
        %s470 = smul.addr %s469, 8
        %s471 = scalar_lea.vmem %s8, %s470
        %p472 = pneg %p281
        %p473 = pneg %p278
        %p474 = scmp.lt.s32.totalorder %s26, 1
        %s475 = scalar_select %p474, %s26, 1
        %s476 = smul.addr %s475, 8
        %s477 = scalar_lea.vmem %s9, %s476
        %p478 = pneg %p307
        %p479 = pneg %p304
        %p480 = scmp.lt.s32.totalorder %s26, 1
        %s481 = scalar_select %p480, %s26, 1
        %s482 = smul.addr %s481, 4
        %s483 = smul.addr %s482, 8
        %s484 = scalar_lea.vmem %s10, %s483
        %p485 = pneg %p333
        %p486 = pneg %p330
        %p487 = scmp.lt.s32.totalorder %s26, 1
        %s488 = scalar_select %p487, %s26, 1
        %s489 = smul.addr %s488, 8
        %s490 = scalar_lea.vmem %s11, %s489
        %p491 = scmp.lt.s32.totalorder %s26, 1
        %s492 = scalar_select %p491, %s26, 1
        %s493 = smul.addr %s492, 6
        %s494 = smul.addr %s493, 4
        %s495 = scalar_lea.vmem %s0, %s494
        %p496 = scmp.lt.s32.totalorder %s26, 1
        %s497 = scalar_select %p496, %s26, 1
        %s498 = smul.addr %s497, 4
        %s499 = smul.addr %s498, 8
        %s500 = scalar_lea.vmem %s1, %s499
        %p501 = scmp.lt.s32.totalorder %s26, 1
        %s502 = scalar_select %p501, %s26, 1
        %s503 = smul.addr %s502, 8
        %s504 = scalar_lea.vmem %s2, %s503
        %p505 = scmp.lt.s32.totalorder %s26, 1
        %s506 = scalar_select %p505, %s26, 1
        %s507 = smul.addr %s506, 4
        %s508 = smul.addr %s507, 8
        %s509 = scalar_lea.vmem %s3, %s508
        %p510 = scmp.lt.s32.totalorder %s26, 1
        %s511 = scalar_select %p510, %s26, 1
        %s512 = smul.addr %s511, 8
        %s513 = scalar_lea.vmem %s4, %s512
        %p514 = scmp.lt.s32.totalorder %s26, 1
        %s515 = scalar_select %p514, %s26, 1
        %s516 = smul.addr %s515, 4
        %s517 = smul.addr %s516, 8
        %s518 = scalar_lea.vmem %s5, %s517
        %p519 = scmp.lt.s32.totalorder %s26, 1
        %s520 = scalar_select %p519, %s26, 1
        %s521 = smul.addr %s520, 8
        %s522 = scalar_lea.vmem %s6, %s521
        %p523 = scmp.lt.s32.totalorder %s26, 1
        %s524 = scalar_select %p523, %s26, 1
        %s525 = smul.addr %s524, 4
        %s526 = smul.addr %s525, 8
        %s527 = scalar_lea.vmem %s8, %s526
        %p528 = scmp.lt.s32.totalorder %s26, 1
        %s529 = scalar_select %p528, %s26, 1
        %s530 = smul.addr %s529, 8
        %s531 = scalar_lea.vmem %s9, %s530
        %p532 = scmp.lt.s32.totalorder %s26, 1
        %s533 = scalar_select %p532, %s26, 1
        %s534 = smul.addr %s533, 4
        %s535 = smul.addr %s534, 8
        %s536 = scalar_lea.vmem %s10, %s535
        %p537 = scmp.lt.s32.totalorder %s26, 1
        %s538 = scalar_select %p537, %s26, 1
        %s539 = smul.addr %s538, 8
        %s540 = scalar_lea.vmem %s11, %s539
        %v541 = vld [vmem:[%s500] sm:$0xff]
        %v542 = vld [vmem:[%s500 + $0x8] sm:$0xff]
        %v543 = vld [vmem:[%s500 + $0x10] sm:$0xff]
        %v544 = vld [vmem:[%s500 + $0x18] sm:$0xff]
        %v545 = vld [vmem:[%s504] sm:$0xff]
        %v546 = vld [vmem:[%s509] sm:$0xff]
        %v547 = vld [vmem:[%s509 + $0x8] sm:$0xff]
        %v548 = vld [vmem:[%s509 + $0x10] sm:$0xff]
        %v549 = vld [vmem:[%s509 + $0x18] sm:$0xff]
        %v550 = vld [vmem:[%s513] sm:$0xff]
        %v551 = vld [vmem:[%s518] sm:$0xff]
        %v552 = vld [vmem:[%s518 + $0x8] sm:$0xff]
        %v553 = vld [vmem:[%s518 + $0x10] sm:$0xff]
        %v554 = vld [vmem:[%s518 + $0x18] sm:$0xff]
        %v555 = vld [vmem:[%s522] sm:$0xff]
        %v556 = vld [vmem:[%s495] sm:$0xf]
        %vm557 = vcmask 130048
        %v559 = vsel %vm557, %v556, 0
        %v562 = vsel %vm557, %v541, 0
        %v565 = vsel %vm557, %v542, 0
        %v568 = vsel %vm557, %v543, 0
        %v571 = vsel %vm557, %v544, 0
        %573 = vmatprep.subr.mxu0 0.0
        %574 = vmatpush1.xpose.msra.mxu0 0.0
        %575 = vmatprep.subr.mxu0 0.0
        %576 = vmatpush1.xpose.msra.mxu0 0.0
        %577 = vmatprep.subr.mxu0 0.0
        %578 = vmatpush1.xpose.msra.mxu0 0.0
        %579 = vmatprep.subr.mxu0 0.0
        %580 = vmatpush1.xpose.msra.mxu0 0.0
        %581 = vmatprep.subr.mxu0 0.0
        %582 = vmatpush1.xpose.msra.mxu0 0.0
        %583 = vmatprep.subr.mxu0 0.0
        %584 = vmatpush1.xpose.msra.mxu0 0.0
        %585 = vmatprep.subr.mxu0 0.0
        %586 = vmatpush1.xpose.msra.mxu0 0.0
        %587 = vmatprep.subr.mxu0 0.0
        %588 = vmatpush1.xpose.msra.mxu0 0.0
        %589 = vmatprep.subr.mxu0 0.0
        %590 = vmatpush1.xpose.msra.mxu0 0.0
        %591 = vmatprep.subr.mxu0 0.0
        %592 = vmatpush1.xpose.msra.mxu0 0.0
        %593 = vmatprep.subr.mxu0 0.0
        %594 = vmatpush1.xpose.msra.mxu0 0.0
        %595 = vmatprep.subr.mxu0 0.0
        %596 = vmatpush1.xpose.msra.mxu0 0.0
        %597 = vmatprep.subr.mxu0 0.0
        %598 = vmatpush1.xpose.msra.mxu0 %v571
        %599 = vmatprep.subr.mxu0 0.0
        %600 = vmatpush1.xpose.msra.mxu0 %v568
        %601 = vmatprep.subr.mxu0 0.0
        %602 = vmatpush1.xpose.msra.mxu0 %v565
        %603 = vmatprep.subr.mxu0 0.0
        %604 = vmatpush1.xpose.msra.mxu0 %v562
        %605 = vmatprep.subr.mxu0 0.0
        %606 = vmatpush2.xpose.msra.mxu0 0.0
        %607 = vmatprep.subr.mxu0 0.0
        %608 = vmatpush2.xpose.msra.mxu0 0.0
        %609 = vmatprep.subr.mxu0 0.0
        %610 = vmatpush2.xpose.msra.mxu0 0.0
        %611 = vmatprep.subr.mxu0 0.0
        %612 = vmatpush2.xpose.msra.mxu0 0.0
        %613 = vmatprep.subr.mxu0 0.0
        %614 = vmatpush2.xpose.msra.mxu0 0.0
        %615 = vmatprep.subr.mxu0 0.0
        %616 = vmatpush2.xpose.msra.mxu0 0.0
        %617 = vmatprep.subr.mxu0 0.0
        %618 = vmatpush2.xpose.msra.mxu0 0.0
        %619 = vmatprep.subr.mxu0 0.0
        %620 = vmatpush2.xpose.msra.mxu0 0.0
        %621 = vmatprep.subr.mxu0 0.0
        %622 = vmatpush2.xpose.msra.mxu0 0.0
        %623 = vmatprep.subr.mxu0 0.0
        %624 = vmatpush2.xpose.msra.mxu0 0.0
        %625 = vmatprep.subr.mxu0 0.0
        %626 = vmatpush2.xpose.msra.mxu0 0.0
        %627 = vmatprep.subr.mxu0 0.0
        %628 = vmatpush2.xpose.msra.mxu0 0.0
        %629 = vmatprep.subr.mxu0 0.0
        %630 = vmatpush2.xpose.msra.mxu0 0.0
        %631 = vmatprep.subr.mxu0 0.0
        %632 = vmatpush2.xpose.msra.mxu0 0.0
        %633 = vmatprep.subr.mxu0 0.0
        %634 = vmatpush2.xpose.msra.mxu0 0.0
        %635 = vmatprep.subr.mxu0 0.0
        %636 = vmatpush2.xpose.msra.mxu0 0.0
        %637 = vmatprep.mubr.f32.mxu0 0.0
        %638 = vmatmul.mubr.f32.gmra.mxu0 %v559
        %v639 = vpop.f32.mrf.mxu0
        %v640 = vadd.f32 0.0, %v639
        %v641 = vpop.f32.mrf.mxu0
        %642 = vdwg.mxu0
        %v643 = vmax.f32 %v640, 0.0
        %vm644 = vcmask 261120
        %v646 = vsel %vm644, %v643, 0
        %v649 = vsel %vm644, %v545, 0
        %651 = vmatprep.subr.mxu0 0.0
        %652 = vmatpush1.xpose.msra.mxu0 0.0
        %653 = vmatprep.subr.mxu0 0.0
        %654 = vmatpush1.xpose.msra.mxu0 0.0
        %655 = vmatprep.subr.mxu0 0.0
        %656 = vmatpush1.xpose.msra.mxu0 0.0
        %657 = vmatprep.subr.mxu0 0.0
        %658 = vmatpush1.xpose.msra.mxu0 0.0
        %659 = vmatprep.subr.mxu0 0.0
        %660 = vmatpush1.xpose.msra.mxu0 0.0
        %661 = vmatprep.subr.mxu0 0.0
        %662 = vmatpush1.xpose.msra.mxu0 0.0
        %663 = vmatprep.subr.mxu0 0.0
        %664 = vmatpush1.xpose.msra.mxu0 0.0
        %665 = vmatprep.subr.mxu0 0.0
        %666 = vmatpush1.xpose.msra.mxu0 0.0
        %667 = vmatprep.subr.mxu0 0.0
        %668 = vmatpush1.xpose.msra.mxu0 0.0
        %669 = vmatprep.subr.mxu0 0.0
        %670 = vmatpush1.xpose.msra.mxu0 0.0
        %671 = vmatprep.subr.mxu0 0.0
        %672 = vmatpush1.xpose.msra.mxu0 0.0
        %673 = vmatprep.subr.mxu0 0.0
        %674 = vmatpush1.xpose.msra.mxu0 0.0
        %675 = vmatprep.subr.mxu0 0.0
        %676 = vmatpush1.xpose.msra.mxu0 0.0
        %677 = vmatprep.subr.mxu0 0.0
        %678 = vmatpush1.xpose.msra.mxu0 0.0
        %679 = vmatprep.subr.mxu0 0.0
        %680 = vmatpush1.xpose.msra.mxu0 0.0
        %681 = vmatprep.subr.mxu0 0.0
        %682 = vmatpush1.xpose.msra.mxu0 %v649
        %683 = vmatprep.subr.mxu0 0.0
        %684 = vmatpush2.xpose.msra.mxu0 0.0
        %685 = vmatprep.subr.mxu0 0.0
        %686 = vmatpush2.xpose.msra.mxu0 0.0
        %687 = vmatprep.subr.mxu0 0.0
        %688 = vmatpush2.xpose.msra.mxu0 0.0
        %689 = vmatprep.subr.mxu0 0.0
        %690 = vmatpush2.xpose.msra.mxu0 0.0
        %691 = vmatprep.subr.mxu0 0.0
        %692 = vmatpush2.xpose.msra.mxu0 0.0
        %693 = vmatprep.subr.mxu0 0.0
        %694 = vmatpush2.xpose.msra.mxu0 0.0
        %695 = vmatprep.subr.mxu0 0.0
        %696 = vmatpush2.xpose.msra.mxu0 0.0
        %697 = vmatprep.subr.mxu0 0.0
        %698 = vmatpush2.xpose.msra.mxu0 0.0
        %699 = vmatprep.subr.mxu0 0.0
        %700 = vmatpush2.xpose.msra.mxu0 0.0
        %701 = vmatprep.subr.mxu0 0.0
        %702 = vmatpush2.xpose.msra.mxu0 0.0
        %703 = vmatprep.subr.mxu0 0.0
        %704 = vmatpush2.xpose.msra.mxu0 0.0
        %705 = vmatprep.subr.mxu0 0.0
        %706 = vmatpush2.xpose.msra.mxu0 0.0
        %707 = vmatprep.subr.mxu0 0.0
        %708 = vmatpush2.xpose.msra.mxu0 0.0
        %709 = vmatprep.subr.mxu0 0.0
        %710 = vmatpush2.xpose.msra.mxu0 0.0
        %711 = vmatprep.subr.mxu0 0.0
        %712 = vmatpush2.xpose.msra.mxu0 0.0
        %713 = vmatprep.subr.mxu0 0.0
        %714 = vmatpush2.xpose.msra.mxu0 0.0
        %715 = vmatprep.mubr.f32.mxu0 0.0
        %716 = vmatmul.mubr.f32.gmra.mxu0 %v646
        %v717 = vpop.f32.mrf.mxu0
        %v718 = vadd.f32 0.0, %v717
        %v719 = vpop.f32.mrf.mxu0
        %720 = vdwg.mxu0
        %v721 = vmax.f32 %v718, 0.0
        %vm722 = vcmask 60416
        %723 = vst.msk [vmem:[%s464] sm:$0xf] %vm722, %v721
        %724 = vxpose.xlu0.b32.start [1/16] %v640, 128
        %725 = vxpose.xlu0.b32.cont [2/16] 0.0, 128
        %726 = vxpose.xlu0.b32.cont [3/16] 0.0, 128
        %727 = vxpose.xlu0.b32.cont [4/16] 0.0, 128
        %728 = vxpose.xlu0.b32.cont [5/16] 0.0, 128
        %729 = vxpose.xlu0.b32.cont [6/16] 0.0, 128
        %730 = vxpose.xlu0.b32.cont [7/16] 0.0, 128
        %731 = vxpose.xlu0.b32.cont [8/16] 0.0, 128
        %732 = vxpose.xlu0.b32.cont [9/16] 0.0, 128
        %733 = vxpose.xlu0.b32.cont [10/16] 0.0, 128
        %734 = vxpose.xlu0.b32.cont [11/16] 0.0, 128
        %735 = vxpose.xlu0.b32.cont [12/16] 0.0, 128
        %736 = vxpose.xlu0.b32.cont [13/16] 0.0, 128
        %737 = vxpose.xlu0.b32.cont [14/16] 0.0, 128
        %738 = vxpose.xlu0.b32.cont [15/16] 0.0, 128
        %739 = vxpose.xlu0.b32.end [16/16] 0.0, 128
        %v740 = vpop.trf.xlu0
        %v741 = vpop.trf.xlu0
        %v742 = vpop.trf.xlu0
        %v743 = vpop.trf.xlu0
        %v744 = vpop.trf.xlu0
        %v745 = vpop.trf.xlu0
        %v746 = vpop.trf.xlu0
        %v747 = vpop.trf.xlu0
        %v748 = vpop.trf.xlu0
        %v749 = vpop.trf.xlu0
        %v750 = vpop.trf.xlu0
        %v751 = vpop.trf.xlu0
        %v752 = vpop.trf.xlu0
        %v753 = vpop.trf.xlu0
        %v754 = vpop.trf.xlu0
        %v755 = vpop.trf.xlu0
        %vm756 = vcmask 31744
        %v758 = vsel %vm756, %v740, 0
        %v761 = vsel %vm756, %v741, 0
        %v764 = vsel %vm756, %v742, 0
        %v767 = vsel %vm756, %v743, 0
        %vm769 = vcmask 1043456
        %v770 = vsel %vm769, %v556, 0
        %772 = vmatprep.subr.mxu0 0.0
        %773 = vmatpush1.msra.mxu0 0.0
        %774 = vmatprep.subr.mxu0 0.0
        %775 = vmatpush1.msra.mxu0 0.0
        %776 = vmatprep.subr.mxu0 0.0
        %777 = vmatpush1.msra.mxu0 0.0
        %778 = vmatprep.subr.mxu0 0.0
        %779 = vmatpush1.msra.mxu0 0.0
        %780 = vmatprep.subr.mxu0 0.0
        %781 = vmatpush1.msra.mxu0 0.0
        %782 = vmatprep.subr.mxu0 0.0
        %783 = vmatpush1.msra.mxu0 0.0
        %784 = vmatprep.subr.mxu0 0.0
        %785 = vmatpush1.msra.mxu0 0.0
        %786 = vmatprep.subr.mxu0 0.0
        %787 = vmatpush1.msra.mxu0 0.0
        %788 = vmatprep.subr.mxu0 0.0
        %789 = vmatpush1.msra.mxu0 0.0
        %790 = vmatprep.subr.mxu0 0.0
        %791 = vmatpush1.msra.mxu0 0.0
        %792 = vmatprep.subr.mxu0 0.0
        %793 = vmatpush1.msra.mxu0 0.0
        %794 = vmatprep.subr.mxu0 0.0
        %795 = vmatpush1.msra.mxu0 0.0
        %796 = vmatprep.subr.mxu0 0.0
        %797 = vmatpush1.msra.mxu0 0.0
        %798 = vmatprep.subr.mxu0 0.0
        %799 = vmatpush1.msra.mxu0 0.0
        %800 = vmatprep.subr.mxu0 0.0
        %801 = vmatpush1.msra.mxu0 0.0
        %802 = vmatprep.subr.mxu0 0.0
        %803 = vmatpush1.msra.mxu0 %v770
        %804 = vmatprep.subr.mxu0 0.0
        %805 = vmatpush2.msra.mxu0 0.0
        %806 = vmatprep.subr.mxu0 0.0
        %807 = vmatpush2.msra.mxu0 0.0
        %808 = vmatprep.subr.mxu0 0.0
        %809 = vmatpush2.msra.mxu0 0.0
        %810 = vmatprep.subr.mxu0 0.0
        %811 = vmatpush2.msra.mxu0 0.0
        %812 = vmatprep.subr.mxu0 0.0
        %813 = vmatpush2.msra.mxu0 0.0
        %814 = vmatprep.subr.mxu0 0.0
        %815 = vmatpush2.msra.mxu0 0.0
        %816 = vmatprep.subr.mxu0 0.0
        %817 = vmatpush2.msra.mxu0 0.0
        %818 = vmatprep.subr.mxu0 0.0
        %819 = vmatpush2.msra.mxu0 0.0
        %820 = vmatprep.subr.mxu0 0.0
        %821 = vmatpush2.msra.mxu0 0.0
        %822 = vmatprep.subr.mxu0 0.0
        %823 = vmatpush2.msra.mxu0 0.0
        %824 = vmatprep.subr.mxu0 0.0
        %825 = vmatpush2.msra.mxu0 0.0
        %826 = vmatprep.subr.mxu0 0.0
        %827 = vmatpush2.msra.mxu0 0.0
        %828 = vmatprep.subr.mxu0 0.0
        %829 = vmatpush2.msra.mxu0 0.0
        %830 = vmatprep.subr.mxu0 0.0
        %831 = vmatpush2.msra.mxu0 0.0
        %832 = vmatprep.subr.mxu0 0.0
        %833 = vmatpush2.msra.mxu0 0.0
        %834 = vmatprep.subr.mxu0 0.0
        %835 = vmatpush2.msra.mxu0 0.0
        %836 = vmatprep.mubr.f32.mxu0 0.0
        %837 = vmatmul.mubr.f32.gmra.mxu0 %v758
        %v838 = vpop.f32.mrf.mxu0
        %v839 = vadd.f32 0.0, %v838
        %v840 = vpop.f32.mrf.mxu0
        %841 = vmatprep.mubr.f32.mxu0 0.0
        %842 = vmatmul.mubr.f32.gmra.mxu0 %v761
        %v843 = vpop.f32.mrf.mxu0
        %v844 = vadd.f32 0.0, %v843
        %v845 = vpop.f32.mrf.mxu0
        %846 = vmatprep.mubr.f32.mxu0 0.0
        %847 = vmatmul.mubr.f32.gmra.mxu0 %v764
        %v848 = vpop.f32.mrf.mxu0
        %v849 = vadd.f32 0.0, %v848
        %v850 = vpop.f32.mrf.mxu0
        %851 = vmatprep.mubr.f32.mxu0 0.0
        %852 = vmatmul.mubr.f32.gmra.mxu0 %v767
        %v853 = vpop.f32.mrf.mxu0
        %v854 = vadd.f32 0.0, %v853
        %v855 = vpop.f32.mrf.mxu0
        %856 = vdwg.mxu0
        %857 = vxpose.xlu0.b32.start [1/16] %v718, 128
        %858 = vxpose.xlu0.b32.cont [2/16] 0.0, 128
        %859 = vxpose.xlu0.b32.cont [3/16] 0.0, 128
        %860 = vxpose.xlu0.b32.cont [4/16] 0.0, 128
        %861 = vxpose.xlu0.b32.cont [5/16] 0.0, 128
        %862 = vxpose.xlu0.b32.cont [6/16] 0.0, 128
        %863 = vxpose.xlu0.b32.cont [7/16] 0.0, 128
        %864 = vxpose.xlu0.b32.cont [8/16] 0.0, 128
        %865 = vxpose.xlu0.b32.cont [9/16] 0.0, 128
        %866 = vxpose.xlu0.b32.cont [10/16] 0.0, 128
        %867 = vxpose.xlu0.b32.cont [11/16] 0.0, 128
        %868 = vxpose.xlu0.b32.cont [12/16] 0.0, 128
        %869 = vxpose.xlu0.b32.cont [13/16] 0.0, 128
        %870 = vxpose.xlu0.b32.cont [14/16] 0.0, 128
        %871 = vxpose.xlu0.b32.cont [15/16] 0.0, 128
        %872 = vxpose.xlu0.b32.end [16/16] 0.0, 128
        %v873 = vpop.trf.xlu0
        %v874 = vpop.trf.xlu0
        %v875 = vpop.trf.xlu0
        %v876 = vpop.trf.xlu0
        %v877 = vpop.trf.xlu0
        %v878 = vpop.trf.xlu0
        %v879 = vpop.trf.xlu0
        %v880 = vpop.trf.xlu0
        %v881 = vpop.trf.xlu0
        %v882 = vpop.trf.xlu0
        %v883 = vpop.trf.xlu0
        %v884 = vpop.trf.xlu0
        %v885 = vpop.trf.xlu0
        %v886 = vpop.trf.xlu0
        %v887 = vpop.trf.xlu0
        %v888 = vpop.trf.xlu0
        %v890 = vsel %vm756, %v873, 0
        %v893 = vsel %vm769, %v640, 0
        %895 = vmatprep.subr.mxu0 0.0
        %896 = vmatpush1.msra.mxu0 0.0
        %897 = vmatprep.subr.mxu0 0.0
        %898 = vmatpush1.msra.mxu0 0.0
        %899 = vmatprep.subr.mxu0 0.0
        %900 = vmatpush1.msra.mxu0 0.0
        %901 = vmatprep.subr.mxu0 0.0
        %902 = vmatpush1.msra.mxu0 0.0
        %903 = vmatprep.subr.mxu0 0.0
        %904 = vmatpush1.msra.mxu0 0.0
        %905 = vmatprep.subr.mxu0 0.0
        %906 = vmatpush1.msra.mxu0 0.0
        %907 = vmatprep.subr.mxu0 0.0
        %908 = vmatpush1.msra.mxu0 0.0
        %909 = vmatprep.subr.mxu0 0.0
        %910 = vmatpush1.msra.mxu0 0.0
        %911 = vmatprep.subr.mxu0 0.0
        %912 = vmatpush1.msra.mxu0 0.0
        %913 = vmatprep.subr.mxu0 0.0
        %914 = vmatpush1.msra.mxu0 0.0
        %915 = vmatprep.subr.mxu0 0.0
        %916 = vmatpush1.msra.mxu0 0.0
        %917 = vmatprep.subr.mxu0 0.0
        %918 = vmatpush1.msra.mxu0 0.0
        %919 = vmatprep.subr.mxu0 0.0
        %920 = vmatpush1.msra.mxu0 0.0
        %921 = vmatprep.subr.mxu0 0.0
        %922 = vmatpush1.msra.mxu0 0.0
        %923 = vmatprep.subr.mxu0 0.0
        %924 = vmatpush1.msra.mxu0 0.0
        %925 = vmatprep.subr.mxu0 0.0
        %926 = vmatpush1.msra.mxu0 %v893
        %927 = vmatprep.subr.mxu0 0.0
        %928 = vmatpush2.msra.mxu0 0.0
        %929 = vmatprep.subr.mxu0 0.0
        %930 = vmatpush2.msra.mxu0 0.0
        %931 = vmatprep.subr.mxu0 0.0
        %932 = vmatpush2.msra.mxu0 0.0
        %933 = vmatprep.subr.mxu0 0.0
        %934 = vmatpush2.msra.mxu0 0.0
        %935 = vmatprep.subr.mxu0 0.0
        %936 = vmatpush2.msra.mxu0 0.0
        %937 = vmatprep.subr.mxu0 0.0
        %938 = vmatpush2.msra.mxu0 0.0
        %939 = vmatprep.subr.mxu0 0.0
        %940 = vmatpush2.msra.mxu0 0.0
        %941 = vmatprep.subr.mxu0 0.0
        %942 = vmatpush2.msra.mxu0 0.0
        %943 = vmatprep.subr.mxu0 0.0
        %944 = vmatpush2.msra.mxu0 0.0
        %945 = vmatprep.subr.mxu0 0.0
        %946 = vmatpush2.msra.mxu0 0.0
        %947 = vmatprep.subr.mxu0 0.0
        %948 = vmatpush2.msra.mxu0 0.0
        %949 = vmatprep.subr.mxu0 0.0
        %950 = vmatpush2.msra.mxu0 0.0
        %951 = vmatprep.subr.mxu0 0.0
        %952 = vmatpush2.msra.mxu0 0.0
        %953 = vmatprep.subr.mxu0 0.0
        %954 = vmatpush2.msra.mxu0 0.0
        %955 = vmatprep.subr.mxu0 0.0
        %956 = vmatpush2.msra.mxu0 0.0
        %957 = vmatprep.subr.mxu0 0.0
        %958 = vmatpush2.msra.mxu0 0.0
        %959 = vmatprep.mubr.f32.mxu0 0.0
        %960 = vmatmul.mubr.f32.gmra.mxu0 %v890
        %v961 = vpop.f32.mrf.mxu0
        %v962 = vadd.f32 0.0, %v961
        %v963 = vpop.f32.mrf.mxu0
        %964 = vdwg.mxu0
        %v965 = vadd.f32 %v551, %v839
        %v966 = vadd.f32 %v552, %v844
        %v967 = vadd.f32 %v553, %v849
        %v968 = vadd.f32 %v554, %v854
        %v969 = vmax.f32 %v965, -1.0
        %v970 = vmax.f32 %v966, -1.0
        %v971 = vmax.f32 %v967, -1.0
        %v972 = vmax.f32 %v968, -1.0
        %v973 = vmin.f32 %v969, 1.0
        %v974 = vmin.f32 %v970, 1.0
        %v975 = vmin.f32 %v971, 1.0
        %v976 = vmin.f32 %v972, 1.0
        %v977 = vadd.f32 %v555, %v962
        %v978 = vmax.f32 %v977, -1.0
        %v979 = vmin.f32 %v978, 1.0
        %v980 = vmul.f32 %v546, %v973
        %v981 = vmul.f32 %v547, %v974
        %v982 = vmul.f32 %v548, %v975
        %v983 = vmul.f32 %v549, %v976
        %v984 = vadd.f32 %v541, %v980
        %v985 = vadd.f32 %v542, %v981
        %v986 = vadd.f32 %v543, %v982
        %v987 = vadd.f32 %v544, %v983
        %v988 = vmul.f32 %v550, %v979
        %v989 = vadd.f32 %v545, %v988
        %s990 = scalar_lea.vmem %s495, 4
        %v991 = vld [vmem:[%s990] sm:$0xf]
        %v993 = vsel %vm557, %v991, 0
        %v996 = vsel %vm557, %v984, 0
        %v999 = vsel %vm557, %v985, 0
        %v1002 = vsel %vm557, %v986, 0
        %v1005 = vsel %vm557, %v987, 0
        %1007 = vmatprep.subr.mxu0 0.0
        %1008 = vmatpush1.xpose.msra.mxu0 0.0
        %1009 = vmatprep.subr.mxu0 0.0
        %1010 = vmatpush1.xpose.msra.mxu0 0.0
        %1011 = vmatprep.subr.mxu0 0.0
        %1012 = vmatpush1.xpose.msra.mxu0 0.0
        %1013 = vmatprep.subr.mxu0 0.0
        %1014 = vmatpush1.xpose.msra.mxu0 0.0
        %1015 = vmatprep.subr.mxu0 0.0
        %1016 = vmatpush1.xpose.msra.mxu0 0.0
        %1017 = vmatprep.subr.mxu0 0.0
        %1018 = vmatpush1.xpose.msra.mxu0 0.0
        %1019 = vmatprep.subr.mxu0 0.0
        %1020 = vmatpush1.xpose.msra.mxu0 0.0
        %1021 = vmatprep.subr.mxu0 0.0
        %1022 = vmatpush1.xpose.msra.mxu0 0.0
        %1023 = vmatprep.subr.mxu0 0.0
        %1024 = vmatpush1.xpose.msra.mxu0 0.0
        %1025 = vmatprep.subr.mxu0 0.0
        %1026 = vmatpush1.xpose.msra.mxu0 0.0
        %1027 = vmatprep.subr.mxu0 0.0
        %1028 = vmatpush1.xpose.msra.mxu0 0.0
        %1029 = vmatprep.subr.mxu0 0.0
        %1030 = vmatpush1.xpose.msra.mxu0 0.0
        %1031 = vmatprep.subr.mxu0 0.0
        %1032 = vmatpush1.xpose.msra.mxu0 %v1005
        %1033 = vmatprep.subr.mxu0 0.0
        %1034 = vmatpush1.xpose.msra.mxu0 %v1002
        %1035 = vmatprep.subr.mxu0 0.0
        %1036 = vmatpush1.xpose.msra.mxu0 %v999
        %1037 = vmatprep.subr.mxu0 0.0
        %1038 = vmatpush1.xpose.msra.mxu0 %v996
        %1039 = vmatprep.subr.mxu0 0.0
        %1040 = vmatpush2.xpose.msra.mxu0 0.0
        %1041 = vmatprep.subr.mxu0 0.0
        %1042 = vmatpush2.xpose.msra.mxu0 0.0
        %1043 = vmatprep.subr.mxu0 0.0
        %1044 = vmatpush2.xpose.msra.mxu0 0.0
        %1045 = vmatprep.subr.mxu0 0.0
        %1046 = vmatpush2.xpose.msra.mxu0 0.0
        %1047 = vmatprep.subr.mxu0 0.0
        %1048 = vmatpush2.xpose.msra.mxu0 0.0
        %1049 = vmatprep.subr.mxu0 0.0
        %1050 = vmatpush2.xpose.msra.mxu0 0.0
        %1051 = vmatprep.subr.mxu0 0.0
        %1052 = vmatpush2.xpose.msra.mxu0 0.0
        %1053 = vmatprep.subr.mxu0 0.0
        %1054 = vmatpush2.xpose.msra.mxu0 0.0
        %1055 = vmatprep.subr.mxu0 0.0
        %1056 = vmatpush2.xpose.msra.mxu0 0.0
        %1057 = vmatprep.subr.mxu0 0.0
        %1058 = vmatpush2.xpose.msra.mxu0 0.0
        %1059 = vmatprep.subr.mxu0 0.0
        %1060 = vmatpush2.xpose.msra.mxu0 0.0
        %1061 = vmatprep.subr.mxu0 0.0
        %1062 = vmatpush2.xpose.msra.mxu0 0.0
        %1063 = vmatprep.subr.mxu0 0.0
        %1064 = vmatpush2.xpose.msra.mxu0 0.0
        %1065 = vmatprep.subr.mxu0 0.0
        %1066 = vmatpush2.xpose.msra.mxu0 0.0
        %1067 = vmatprep.subr.mxu0 0.0
        %1068 = vmatpush2.xpose.msra.mxu0 0.0
        %1069 = vmatprep.subr.mxu0 0.0
        %1070 = vmatpush2.xpose.msra.mxu0 0.0
        %1071 = vmatprep.mubr.f32.mxu0 0.0
        %1072 = vmatmul.mubr.f32.gmra.mxu0 %v993
        %v1073 = vpop.f32.mrf.mxu0
        %v1074 = vadd.f32 0.0, %v1073
        %v1075 = vpop.f32.mrf.mxu0
        %1076 = vdwg.mxu0
        %v1077 = vmax.f32 %v1074, 0.0
        %v1079 = vsel %vm644, %v1077, 0
        %v1082 = vsel %vm644, %v989, 0
        %1084 = vmatprep.subr.mxu0 0.0
        %1085 = vmatpush1.xpose.msra.mxu0 0.0
        %1086 = vmatprep.subr.mxu0 0.0
        %1087 = vmatpush1.xpose.msra.mxu0 0.0
        %1088 = vmatprep.subr.mxu0 0.0
        %1089 = vmatpush1.xpose.msra.mxu0 0.0
        %1090 = vmatprep.subr.mxu0 0.0
        %1091 = vmatpush1.xpose.msra.mxu0 0.0
        %1092 = vmatprep.subr.mxu0 0.0
        %1093 = vmatpush1.xpose.msra.mxu0 0.0
        %1094 = vmatprep.subr.mxu0 0.0
        %1095 = vmatpush1.xpose.msra.mxu0 0.0
        %1096 = vmatprep.subr.mxu0 0.0
        %1097 = vmatpush1.xpose.msra.mxu0 0.0
        %1098 = vmatprep.subr.mxu0 0.0
        %1099 = vmatpush1.xpose.msra.mxu0 0.0
        %1100 = vmatprep.subr.mxu0 0.0
        %1101 = vmatpush1.xpose.msra.mxu0 0.0
        %1102 = vmatprep.subr.mxu0 0.0
        %1103 = vmatpush1.xpose.msra.mxu0 0.0
        %1104 = vmatprep.subr.mxu0 0.0
        %1105 = vmatpush1.xpose.msra.mxu0 0.0
        %1106 = vmatprep.subr.mxu0 0.0
        %1107 = vmatpush1.xpose.msra.mxu0 0.0
        %1108 = vmatprep.subr.mxu0 0.0
        %1109 = vmatpush1.xpose.msra.mxu0 0.0
        %1110 = vmatprep.subr.mxu0 0.0
        %1111 = vmatpush1.xpose.msra.mxu0 0.0
        %1112 = vmatprep.subr.mxu0 0.0
        %1113 = vmatpush1.xpose.msra.mxu0 0.0
        %1114 = vmatprep.subr.mxu0 0.0
        %1115 = vmatpush1.xpose.msra.mxu0 %v1082
        %1116 = vmatprep.subr.mxu0 0.0
        %1117 = vmatpush2.xpose.msra.mxu0 0.0
        %1118 = vmatprep.subr.mxu0 0.0
        %1119 = vmatpush2.xpose.msra.mxu0 0.0
        %1120 = vmatprep.subr.mxu0 0.0
        %1121 = vmatpush2.xpose.msra.mxu0 0.0
        %1122 = vmatprep.subr.mxu0 0.0
        %1123 = vmatpush2.xpose.msra.mxu0 0.0
        %1124 = vmatprep.subr.mxu0 0.0
        %1125 = vmatpush2.xpose.msra.mxu0 0.0
        %1126 = vmatprep.subr.mxu0 0.0
        %1127 = vmatpush2.xpose.msra.mxu0 0.0
        %1128 = vmatprep.subr.mxu0 0.0
        %1129 = vmatpush2.xpose.msra.mxu0 0.0
        %1130 = vmatprep.subr.mxu0 0.0
        %1131 = vmatpush2.xpose.msra.mxu0 0.0
        %1132 = vmatprep.subr.mxu0 0.0
        %1133 = vmatpush2.xpose.msra.mxu0 0.0
        %1134 = vmatprep.subr.mxu0 0.0
        %1135 = vmatpush2.xpose.msra.mxu0 0.0
        %1136 = vmatprep.subr.mxu0 0.0
        %1137 = vmatpush2.xpose.msra.mxu0 0.0
        %1138 = vmatprep.subr.mxu0 0.0
        %1139 = vmatpush2.xpose.msra.mxu0 0.0
        %1140 = vmatprep.subr.mxu0 0.0
        %1141 = vmatpush2.xpose.msra.mxu0 0.0
        %1142 = vmatprep.subr.mxu0 0.0
        %1143 = vmatpush2.xpose.msra.mxu0 0.0
        %1144 = vmatprep.subr.mxu0 0.0
        %1145 = vmatpush2.xpose.msra.mxu0 0.0
        %1146 = vmatprep.subr.mxu0 0.0
        %1147 = vmatpush2.xpose.msra.mxu0 0.0
        %1148 = vmatprep.mubr.f32.mxu0 0.0
        %1149 = vmatmul.mubr.f32.gmra.mxu0 %v1079
        %v1150 = vpop.f32.mrf.mxu0
        %v1151 = vadd.f32 0.0, %v1150
        %v1152 = vpop.f32.mrf.mxu0
        %1153 = vdwg.mxu0
        %v1154 = vmax.f32 %v1151, 0.0
        %s1155 = scalar_lea.vmem %s464, 4 [#allocation2]
        %1156 = vst.msk [vmem:[%s1155] sm:$0xf] %vm722, %v1154
        %1157 = vxpose.xlu0.b32.start [1/16] %v1074, 128
        %1158 = vxpose.xlu0.b32.cont [2/16] 0.0, 128
        %1159 = vxpose.xlu0.b32.cont [3/16] 0.0, 128
        %1160 = vxpose.xlu0.b32.cont [4/16] 0.0, 128
        %1161 = vxpose.xlu0.b32.cont [5/16] 0.0, 128
        %1162 = vxpose.xlu0.b32.cont [6/16] 0.0, 128
        %1163 = vxpose.xlu0.b32.cont [7/16] 0.0, 128
        %1164 = vxpose.xlu0.b32.cont [8/16] 0.0, 128
        %1165 = vxpose.xlu0.b32.cont [9/16] 0.0, 128
        %1166 = vxpose.xlu0.b32.cont [10/16] 0.0, 128
        %1167 = vxpose.xlu0.b32.cont [11/16] 0.0, 128
        %1168 = vxpose.xlu0.b32.cont [12/16] 0.0, 128
        %1169 = vxpose.xlu0.b32.cont [13/16] 0.0, 128
        %1170 = vxpose.xlu0.b32.cont [14/16] 0.0, 128
        %1171 = vxpose.xlu0.b32.cont [15/16] 0.0, 128
        %1172 = vxpose.xlu0.b32.end [16/16] 0.0, 128
        %v1173 = vpop.trf.xlu0
        %v1174 = vpop.trf.xlu0
        %v1175 = vpop.trf.xlu0
        %v1176 = vpop.trf.xlu0
        %v1177 = vpop.trf.xlu0
        %v1178 = vpop.trf.xlu0
        %v1179 = vpop.trf.xlu0
        %v1180 = vpop.trf.xlu0
        %v1181 = vpop.trf.xlu0
        %v1182 = vpop.trf.xlu0
        %v1183 = vpop.trf.xlu0
        %v1184 = vpop.trf.xlu0
        %v1185 = vpop.trf.xlu0
        %v1186 = vpop.trf.xlu0
        %v1187 = vpop.trf.xlu0
        %v1188 = vpop.trf.xlu0
        %v1190 = vsel %vm756, %v1173, 0
        %v1193 = vsel %vm756, %v1174, 0
        %v1196 = vsel %vm756, %v1175, 0
        %v1199 = vsel %vm756, %v1176, 0
        %v1201 = vsel %vm769, %v991, 0
        %1203 = vmatprep.subr.mxu0 0.0
        %1204 = vmatpush1.msra.mxu0 0.0
        %1205 = vmatprep.subr.mxu0 0.0
        %1206 = vmatpush1.msra.mxu0 0.0
        %1207 = vmatprep.subr.mxu0 0.0
        %1208 = vmatpush1.msra.mxu0 0.0
        %1209 = vmatprep.subr.mxu0 0.0
        %1210 = vmatpush1.msra.mxu0 0.0
        %1211 = vmatprep.subr.mxu0 0.0
        %1212 = vmatpush1.msra.mxu0 0.0
        %1213 = vmatprep.subr.mxu0 0.0
        %1214 = vmatpush1.msra.mxu0 0.0
        %1215 = vmatprep.subr.mxu0 0.0
        %1216 = vmatpush1.msra.mxu0 0.0
        %1217 = vmatprep.subr.mxu0 0.0
        %1218 = vmatpush1.msra.mxu0 0.0
        %1219 = vmatprep.subr.mxu0 0.0
        %1220 = vmatpush1.msra.mxu0 0.0
        %1221 = vmatprep.subr.mxu0 0.0
        %1222 = vmatpush1.msra.mxu0 0.0
        %1223 = vmatprep.subr.mxu0 0.0
        %1224 = vmatpush1.msra.mxu0 0.0
        %1225 = vmatprep.subr.mxu0 0.0
        %1226 = vmatpush1.msra.mxu0 0.0
        %1227 = vmatprep.subr.mxu0 0.0
        %1228 = vmatpush1.msra.mxu0 0.0
        %1229 = vmatprep.subr.mxu0 0.0
        %1230 = vmatpush1.msra.mxu0 0.0
        %1231 = vmatprep.subr.mxu0 0.0
        %1232 = vmatpush1.msra.mxu0 0.0
        %1233 = vmatprep.subr.mxu0 0.0
        %1234 = vmatpush1.msra.mxu0 %v1201
        %1235 = vmatprep.subr.mxu0 0.0
        %1236 = vmatpush2.msra.mxu0 0.0
        %1237 = vmatprep.subr.mxu0 0.0
        %1238 = vmatpush2.msra.mxu0 0.0
        %1239 = vmatprep.subr.mxu0 0.0
        %1240 = vmatpush2.msra.mxu0 0.0
        %1241 = vmatprep.subr.mxu0 0.0
        %1242 = vmatpush2.msra.mxu0 0.0
        %1243 = vmatprep.subr.mxu0 0.0
        %1244 = vmatpush2.msra.mxu0 0.0
        %1245 = vmatprep.subr.mxu0 0.0
        %1246 = vmatpush2.msra.mxu0 0.0
        %1247 = vmatprep.subr.mxu0 0.0
        %1248 = vmatpush2.msra.mxu0 0.0
        %1249 = vmatprep.subr.mxu0 0.0
        %1250 = vmatpush2.msra.mxu0 0.0
        %1251 = vmatprep.subr.mxu0 0.0
        %1252 = vmatpush2.msra.mxu0 0.0
        %1253 = vmatprep.subr.mxu0 0.0
        %1254 = vmatpush2.msra.mxu0 0.0
        %1255 = vmatprep.subr.mxu0 0.0
        %1256 = vmatpush2.msra.mxu0 0.0
        %1257 = vmatprep.subr.mxu0 0.0
        %1258 = vmatpush2.msra.mxu0 0.0
        %1259 = vmatprep.subr.mxu0 0.0
        %1260 = vmatpush2.msra.mxu0 0.0
        %1261 = vmatprep.subr.mxu0 0.0
        %1262 = vmatpush2.msra.mxu0 0.0
        %1263 = vmatprep.subr.mxu0 0.0
        %1264 = vmatpush2.msra.mxu0 0.0
        %1265 = vmatprep.subr.mxu0 0.0
        %1266 = vmatpush2.msra.mxu0 0.0
        %1267 = vmatprep.mubr.f32.mxu0 0.0
        %1268 = vmatmul.mubr.f32.gmra.mxu0 %v1190
        %v1269 = vpop.f32.mrf.mxu0
        %v1270 = vadd.f32 0.0, %v1269
        %v1271 = vpop.f32.mrf.mxu0
        %1272 = vmatprep.mubr.f32.mxu0 0.0
        %1273 = vmatmul.mubr.f32.gmra.mxu0 %v1193
        %v1274 = vpop.f32.mrf.mxu0
        %v1275 = vadd.f32 0.0, %v1274
        %v1276 = vpop.f32.mrf.mxu0
        %1277 = vmatprep.mubr.f32.mxu0 0.0
        %1278 = vmatmul.mubr.f32.gmra.mxu0 %v1196
        %v1279 = vpop.f32.mrf.mxu0
        %v1280 = vadd.f32 0.0, %v1279
        %v1281 = vpop.f32.mrf.mxu0
        %1282 = vmatprep.mubr.f32.mxu0 0.0
        %1283 = vmatmul.mubr.f32.gmra.mxu0 %v1199
        %v1284 = vpop.f32.mrf.mxu0
        %v1285 = vadd.f32 0.0, %v1284
        %v1286 = vpop.f32.mrf.mxu0
        %1287 = vdwg.mxu0
        %1288 = vxpose.xlu0.b32.start [1/16] %v1151, 128
        %1289 = vxpose.xlu0.b32.cont [2/16] 0.0, 128
        %1290 = vxpose.xlu0.b32.cont [3/16] 0.0, 128
        %1291 = vxpose.xlu0.b32.cont [4/16] 0.0, 128
        %1292 = vxpose.xlu0.b32.cont [5/16] 0.0, 128
        %1293 = vxpose.xlu0.b32.cont [6/16] 0.0, 128
        %1294 = vxpose.xlu0.b32.cont [7/16] 0.0, 128
        %1295 = vxpose.xlu0.b32.cont [8/16] 0.0, 128
        %1296 = vxpose.xlu0.b32.cont [9/16] 0.0, 128
        %1297 = vxpose.xlu0.b32.cont [10/16] 0.0, 128
        %1298 = vxpose.xlu0.b32.cont [11/16] 0.0, 128
        %1299 = vxpose.xlu0.b32.cont [12/16] 0.0, 128
        %1300 = vxpose.xlu0.b32.cont [13/16] 0.0, 128
        %1301 = vxpose.xlu0.b32.cont [14/16] 0.0, 128
        %1302 = vxpose.xlu0.b32.cont [15/16] 0.0, 128
        %1303 = vxpose.xlu0.b32.end [16/16] 0.0, 128
        %v1304 = vpop.trf.xlu0
        %v1305 = vpop.trf.xlu0
        %v1306 = vpop.trf.xlu0
        %v1307 = vpop.trf.xlu0
        %v1308 = vpop.trf.xlu0
        %v1309 = vpop.trf.xlu0
        %v1310 = vpop.trf.xlu0
        %v1311 = vpop.trf.xlu0
        %v1312 = vpop.trf.xlu0
        %v1313 = vpop.trf.xlu0
        %v1314 = vpop.trf.xlu0
        %v1315 = vpop.trf.xlu0
        %v1316 = vpop.trf.xlu0
        %v1317 = vpop.trf.xlu0
        %v1318 = vpop.trf.xlu0
        %v1319 = vpop.trf.xlu0
        %v1321 = vsel %vm756, %v1304, 0
        %v1324 = vsel %vm769, %v1074, 0
        %1326 = vmatprep.subr.mxu0 0.0
        %1327 = vmatpush1.msra.mxu0 0.0
        %1328 = vmatprep.subr.mxu0 0.0
        %1329 = vmatpush1.msra.mxu0 0.0
        %1330 = vmatprep.subr.mxu0 0.0
        %1331 = vmatpush1.msra.mxu0 0.0
        %1332 = vmatprep.subr.mxu0 0.0
        %1333 = vmatpush1.msra.mxu0 0.0
        %1334 = vmatprep.subr.mxu0 0.0
        %1335 = vmatpush1.msra.mxu0 0.0
        %1336 = vmatprep.subr.mxu0 0.0
        %1337 = vmatpush1.msra.mxu0 0.0
        %1338 = vmatprep.subr.mxu0 0.0
        %1339 = vmatpush1.msra.mxu0 0.0
        %1340 = vmatprep.subr.mxu0 0.0
        %1341 = vmatpush1.msra.mxu0 0.0
        %1342 = vmatprep.subr.mxu0 0.0
        %1343 = vmatpush1.msra.mxu0 0.0
        %1344 = vmatprep.subr.mxu0 0.0
        %1345 = vmatpush1.msra.mxu0 0.0
        %1346 = vmatprep.subr.mxu0 0.0
        %1347 = vmatpush1.msra.mxu0 0.0
        %1348 = vmatprep.subr.mxu0 0.0
        %1349 = vmatpush1.msra.mxu0 0.0
        %1350 = vmatprep.subr.mxu0 0.0
        %1351 = vmatpush1.msra.mxu0 0.0
        %1352 = vmatprep.subr.mxu0 0.0
        %1353 = vmatpush1.msra.mxu0 0.0
        %1354 = vmatprep.subr.mxu0 0.0
        %1355 = vmatpush1.msra.mxu0 0.0
        %1356 = vmatprep.subr.mxu0 0.0
        %1357 = vmatpush1.msra.mxu0 %v1324
        %1358 = vmatprep.subr.mxu0 0.0
        %1359 = vmatpush2.msra.mxu0 0.0
        %1360 = vmatprep.subr.mxu0 0.0
        %1361 = vmatpush2.msra.mxu0 0.0
        %1362 = vmatprep.subr.mxu0 0.0
        %1363 = vmatpush2.msra.mxu0 0.0
        %1364 = vmatprep.subr.mxu0 0.0
        %1365 = vmatpush2.msra.mxu0 0.0
        %1366 = vmatprep.subr.mxu0 0.0
        %1367 = vmatpush2.msra.mxu0 0.0
        %1368 = vmatprep.subr.mxu0 0.0
        %1369 = vmatpush2.msra.mxu0 0.0
        %1370 = vmatprep.subr.mxu0 0.0
        %1371 = vmatpush2.msra.mxu0 0.0
        %1372 = vmatprep.subr.mxu0 0.0
        %1373 = vmatpush2.msra.mxu0 0.0
        %1374 = vmatprep.subr.mxu0 0.0
        %1375 = vmatpush2.msra.mxu0 0.0
        %1376 = vmatprep.subr.mxu0 0.0
        %1377 = vmatpush2.msra.mxu0 0.0
        %1378 = vmatprep.subr.mxu0 0.0
        %1379 = vmatpush2.msra.mxu0 0.0
        %1380 = vmatprep.subr.mxu0 0.0
        %1381 = vmatpush2.msra.mxu0 0.0
        %1382 = vmatprep.subr.mxu0 0.0
        %1383 = vmatpush2.msra.mxu0 0.0
        %1384 = vmatprep.subr.mxu0 0.0
        %1385 = vmatpush2.msra.mxu0 0.0
        %1386 = vmatprep.subr.mxu0 0.0
        %1387 = vmatpush2.msra.mxu0 0.0
        %1388 = vmatprep.subr.mxu0 0.0
        %1389 = vmatpush2.msra.mxu0 0.0
        %1390 = vmatprep.mubr.f32.mxu0 0.0
        %1391 = vmatmul.mubr.f32.gmra.mxu0 %v1321
        %v1392 = vpop.f32.mrf.mxu0
        %v1393 = vadd.f32 0.0, %v1392
        %v1394 = vpop.f32.mrf.mxu0
        %1395 = vdwg.mxu0
        %v1396 = vadd.f32 %v973, %v1270
        %v1397 = vadd.f32 %v974, %v1275
        %v1398 = vadd.f32 %v975, %v1280
        %v1399 = vadd.f32 %v976, %v1285
        %v1400 = vmax.f32 %v1396, -1.0
        %v1401 = vmax.f32 %v1397, -1.0
        %v1402 = vmax.f32 %v1398, -1.0
        %v1403 = vmax.f32 %v1399, -1.0
        %v1404 = vmin.f32 %v1400, 1.0
        %v1405 = vmin.f32 %v1401, 1.0
        %v1406 = vmin.f32 %v1402, 1.0
        %v1407 = vmin.f32 %v1403, 1.0
        %v1408 = vadd.f32 %v979, %v1393
        %v1409 = vmax.f32 %v1408, -1.0
        %v1410 = vmin.f32 %v1409, 1.0
        %v1411 = vmul.f32 %v546, %v1404
        %v1412 = vmul.f32 %v547, %v1405
        %v1413 = vmul.f32 %v548, %v1406
        %v1414 = vmul.f32 %v549, %v1407
        %v1415 = vadd.f32 %v984, %v1411
        %v1416 = vadd.f32 %v985, %v1412
        %v1417 = vadd.f32 %v986, %v1413
        %v1418 = vadd.f32 %v987, %v1414
        %v1419 = vmul.f32 %v550, %v1410
        %v1420 = vadd.f32 %v989, %v1419
        %s1421 = scalar_lea.vmem %s495, 8
        %v1422 = vld [vmem:[%s1421] sm:$0xf]
        %v1424 = vsel %vm557, %v1422, 0
        %v1427 = vsel %vm557, %v1415, 0
        %v1430 = vsel %vm557, %v1416, 0
        %v1433 = vsel %vm557, %v1417, 0
        %v1436 = vsel %vm557, %v1418, 0
        %1438 = vmatprep.subr.mxu0 0.0
        %1439 = vmatpush1.xpose.msra.mxu0 0.0
        %1440 = vmatprep.subr.mxu0 0.0
        %1441 = vmatpush1.xpose.msra.mxu0 0.0
        %1442 = vmatprep.subr.mxu0 0.0
        %1443 = vmatpush1.xpose.msra.mxu0 0.0
        %1444 = vmatprep.subr.mxu0 0.0
        %1445 = vmatpush1.xpose.msra.mxu0 0.0
        %1446 = vmatprep.subr.mxu0 0.0
        %1447 = vmatpush1.xpose.msra.mxu0 0.0
        %1448 = vmatprep.subr.mxu0 0.0
        %1449 = vmatpush1.xpose.msra.mxu0 0.0
        %1450 = vmatprep.subr.mxu0 0.0
        %1451 = vmatpush1.xpose.msra.mxu0 0.0
        %1452 = vmatprep.subr.mxu0 0.0
        %1453 = vmatpush1.xpose.msra.mxu0 0.0
        %1454 = vmatprep.subr.mxu0 0.0
        %1455 = vmatpush1.xpose.msra.mxu0 0.0
        %1456 = vmatprep.subr.mxu0 0.0
        %1457 = vmatpush1.xpose.msra.mxu0 0.0
        %1458 = vmatprep.subr.mxu0 0.0
        %1459 = vmatpush1.xpose.msra.mxu0 0.0
        %1460 = vmatprep.subr.mxu0 0.0
        %1461 = vmatpush1.xpose.msra.mxu0 0.0
        %1462 = vmatprep.subr.mxu0 0.0
        %1463 = vmatpush1.xpose.msra.mxu0 %v1436
        %1464 = vmatprep.subr.mxu0 0.0
        %1465 = vmatpush1.xpose.msra.mxu0 %v1433
        %1466 = vmatprep.subr.mxu0 0.0
        %1467 = vmatpush1.xpose.msra.mxu0 %v1430
        %1468 = vmatprep.subr.mxu0 0.0
        %1469 = vmatpush1.xpose.msra.mxu0 %v1427
        %1470 = vmatprep.subr.mxu0 0.0
        %1471 = vmatpush2.xpose.msra.mxu0 0.0
        %1472 = vmatprep.subr.mxu0 0.0
        %1473 = vmatpush2.xpose.msra.mxu0 0.0
        %1474 = vmatprep.subr.mxu0 0.0
        %1475 = vmatpush2.xpose.msra.mxu0 0.0
        %1476 = vmatprep.subr.mxu0 0.0
        %1477 = vmatpush2.xpose.msra.mxu0 0.0
        %1478 = vmatprep.subr.mxu0 0.0
        %1479 = vmatpush2.xpose.msra.mxu0 0.0
        %1480 = vmatprep.subr.mxu0 0.0
        %1481 = vmatpush2.xpose.msra.mxu0 0.0
        %1482 = vmatprep.subr.mxu0 0.0
        %1483 = vmatpush2.xpose.msra.mxu0 0.0
        %1484 = vmatprep.subr.mxu0 0.0
        %1485 = vmatpush2.xpose.msra.mxu0 0.0
        %1486 = vmatprep.subr.mxu0 0.0
        %1487 = vmatpush2.xpose.msra.mxu0 0.0
        %1488 = vmatprep.subr.mxu0 0.0
        %1489 = vmatpush2.xpose.msra.mxu0 0.0
        %1490 = vmatprep.subr.mxu0 0.0
        %1491 = vmatpush2.xpose.msra.mxu0 0.0
        %1492 = vmatprep.subr.mxu0 0.0
        %1493 = vmatpush2.xpose.msra.mxu0 0.0
        %1494 = vmatprep.subr.mxu0 0.0
        %1495 = vmatpush2.xpose.msra.mxu0 0.0
        %1496 = vmatprep.subr.mxu0 0.0
        %1497 = vmatpush2.xpose.msra.mxu0 0.0
        %1498 = vmatprep.subr.mxu0 0.0
        %1499 = vmatpush2.xpose.msra.mxu0 0.0
        %1500 = vmatprep.subr.mxu0 0.0
        %1501 = vmatpush2.xpose.msra.mxu0 0.0
        %1502 = vmatprep.mubr.f32.mxu0 0.0
        %1503 = vmatmul.mubr.f32.gmra.mxu0 %v1424
        %v1504 = vpop.f32.mrf.mxu0
        %v1505 = vadd.f32 0.0, %v1504
        %v1506 = vpop.f32.mrf.mxu0
        %1507 = vdwg.mxu0
        %v1508 = vmax.f32 %v1505, 0.0
        %v1510 = vsel %vm644, %v1508, 0
        %v1513 = vsel %vm644, %v1420, 0
        %1515 = vmatprep.subr.mxu0 0.0
        %1516 = vmatpush1.xpose.msra.mxu0 0.0
        %1517 = vmatprep.subr.mxu0 0.0
        %1518 = vmatpush1.xpose.msra.mxu0 0.0
        %1519 = vmatprep.subr.mxu0 0.0
        %1520 = vmatpush1.xpose.msra.mxu0 0.0
        %1521 = vmatprep.subr.mxu0 0.0
        %1522 = vmatpush1.xpose.msra.mxu0 0.0
        %1523 = vmatprep.subr.mxu0 0.0
        %1524 = vmatpush1.xpose.msra.mxu0 0.0
        %1525 = vmatprep.subr.mxu0 0.0
        %1526 = vmatpush1.xpose.msra.mxu0 0.0
        %1527 = vmatprep.subr.mxu0 0.0
        %1528 = vmatpush1.xpose.msra.mxu0 0.0
        %1529 = vmatprep.subr.mxu0 0.0
        %1530 = vmatpush1.xpose.msra.mxu0 0.0
        %1531 = vmatprep.subr.mxu0 0.0
        %1532 = vmatpush1.xpose.msra.mxu0 0.0
        %1533 = vmatprep.subr.mxu0 0.0
        %1534 = vmatpush1.xpose.msra.mxu0 0.0
        %1535 = vmatprep.subr.mxu0 0.0
        %1536 = vmatpush1.xpose.msra.mxu0 0.0
        %1537 = vmatprep.subr.mxu0 0.0
        %1538 = vmatpush1.xpose.msra.mxu0 0.0
        %1539 = vmatprep.subr.mxu0 0.0
        %1540 = vmatpush1.xpose.msra.mxu0 0.0
        %1541 = vmatprep.subr.mxu0 0.0
        %1542 = vmatpush1.xpose.msra.mxu0 0.0
        %1543 = vmatprep.subr.mxu0 0.0
        %1544 = vmatpush1.xpose.msra.mxu0 0.0
        %1545 = vmatprep.subr.mxu0 0.0
        %1546 = vmatpush1.xpose.msra.mxu0 %v1513
        %1547 = vmatprep.subr.mxu0 0.0
        %1548 = vmatpush2.xpose.msra.mxu0 0.0
        %1549 = vmatprep.subr.mxu0 0.0
        %1550 = vmatpush2.xpose.msra.mxu0 0.0
        %1551 = vmatprep.subr.mxu0 0.0
        %1552 = vmatpush2.xpose.msra.mxu0 0.0
        %1553 = vmatprep.subr.mxu0 0.0
        %1554 = vmatpush2.xpose.msra.mxu0 0.0
        %1555 = vmatprep.subr.mxu0 0.0
        %1556 = vmatpush2.xpose.msra.mxu0 0.0
        %1557 = vmatprep.subr.mxu0 0.0
        %1558 = vmatpush2.xpose.msra.mxu0 0.0
        %1559 = vmatprep.subr.mxu0 0.0
        %1560 = vmatpush2.xpose.msra.mxu0 0.0
        %1561 = vmatprep.subr.mxu0 0.0
        %1562 = vmatpush2.xpose.msra.mxu0 0.0
        %1563 = vmatprep.subr.mxu0 0.0
        %1564 = vmatpush2.xpose.msra.mxu0 0.0
        %1565 = vmatprep.subr.mxu0 0.0
        %1566 = vmatpush2.xpose.msra.mxu0 0.0
        %1567 = vmatprep.subr.mxu0 0.0
        %1568 = vmatpush2.xpose.msra.mxu0 0.0
        %1569 = vmatprep.subr.mxu0 0.0
        %1570 = vmatpush2.xpose.msra.mxu0 0.0
        %1571 = vmatprep.subr.mxu0 0.0
        %1572 = vmatpush2.xpose.msra.mxu0 0.0
        %1573 = vmatprep.subr.mxu0 0.0
        %1574 = vmatpush2.xpose.msra.mxu0 0.0
        %1575 = vmatprep.subr.mxu0 0.0
        %1576 = vmatpush2.xpose.msra.mxu0 0.0
        %1577 = vmatprep.subr.mxu0 0.0
        %1578 = vmatpush2.xpose.msra.mxu0 0.0
        %1579 = vmatprep.mubr.f32.mxu0 0.0
        %1580 = vmatmul.mubr.f32.gmra.mxu0 %v1510
        %v1581 = vpop.f32.mrf.mxu0
        %v1582 = vadd.f32 0.0, %v1581
        %v1583 = vpop.f32.mrf.mxu0
        %1584 = vdwg.mxu0
        %v1585 = vmax.f32 %v1582, 0.0
        %s1586 = scalar_lea.vmem %s464, 8 [#allocation2]
        %1587 = vst.msk [vmem:[%s1586] sm:$0xf] %vm722, %v1585
        %1588 = vxpose.xlu0.b32.start [1/16] %v1505, 128
        %1589 = vxpose.xlu0.b32.cont [2/16] 0.0, 128
        %1590 = vxpose.xlu0.b32.cont [3/16] 0.0, 128
        %1591 = vxpose.xlu0.b32.cont [4/16] 0.0, 128
        %1592 = vxpose.xlu0.b32.cont [5/16] 0.0, 128
        %1593 = vxpose.xlu0.b32.cont [6/16] 0.0, 128
        %1594 = vxpose.xlu0.b32.cont [7/16] 0.0, 128
        %1595 = vxpose.xlu0.b32.cont [8/16] 0.0, 128
        %1596 = vxpose.xlu0.b32.cont [9/16] 0.0, 128
        %1597 = vxpose.xlu0.b32.cont [10/16] 0.0, 128
        %1598 = vxpose.xlu0.b32.cont [11/16] 0.0, 128
        %1599 = vxpose.xlu0.b32.cont [12/16] 0.0, 128
        %1600 = vxpose.xlu0.b32.cont [13/16] 0.0, 128
        %1601 = vxpose.xlu0.b32.cont [14/16] 0.0, 128
        %1602 = vxpose.xlu0.b32.cont [15/16] 0.0, 128
        %1603 = vxpose.xlu0.b32.end [16/16] 0.0, 128
        %v1604 = vpop.trf.xlu0
        %v1605 = vpop.trf.xlu0
        %v1606 = vpop.trf.xlu0
        %v1607 = vpop.trf.xlu0
        %v1608 = vpop.trf.xlu0
        %v1609 = vpop.trf.xlu0
        %v1610 = vpop.trf.xlu0
        %v1611 = vpop.trf.xlu0
        %v1612 = vpop.trf.xlu0
        %v1613 = vpop.trf.xlu0
        %v1614 = vpop.trf.xlu0
        %v1615 = vpop.trf.xlu0
        %v1616 = vpop.trf.xlu0
        %v1617 = vpop.trf.xlu0
        %v1618 = vpop.trf.xlu0
        %v1619 = vpop.trf.xlu0
        %v1621 = vsel %vm756, %v1604, 0
        %v1624 = vsel %vm756, %v1605, 0
        %v1627 = vsel %vm756, %v1606, 0
        %v1630 = vsel %vm756, %v1607, 0
        %v1632 = vsel %vm769, %v1422, 0
        %1634 = vmatprep.subr.mxu0 0.0
        %1635 = vmatpush1.msra.mxu0 0.0
        %1636 = vmatprep.subr.mxu0 0.0
        %1637 = vmatpush1.msra.mxu0 0.0
        %1638 = vmatprep.subr.mxu0 0.0
        %1639 = vmatpush1.msra.mxu0 0.0
        %1640 = vmatprep.subr.mxu0 0.0
        %1641 = vmatpush1.msra.mxu0 0.0
        %1642 = vmatprep.subr.mxu0 0.0
        %1643 = vmatpush1.msra.mxu0 0.0
        %1644 = vmatprep.subr.mxu0 0.0
        %1645 = vmatpush1.msra.mxu0 0.0
        %1646 = vmatprep.subr.mxu0 0.0
        %1647 = vmatpush1.msra.mxu0 0.0
        %1648 = vmatprep.subr.mxu0 0.0
        %1649 = vmatpush1.msra.mxu0 0.0
        %1650 = vmatprep.subr.mxu0 0.0
        %1651 = vmatpush1.msra.mxu0 0.0
        %1652 = vmatprep.subr.mxu0 0.0
        %1653 = vmatpush1.msra.mxu0 0.0
        %1654 = vmatprep.subr.mxu0 0.0
        %1655 = vmatpush1.msra.mxu0 0.0
        %1656 = vmatprep.subr.mxu0 0.0
        %1657 = vmatpush1.msra.mxu0 0.0
        %1658 = vmatprep.subr.mxu0 0.0
        %1659 = vmatpush1.msra.mxu0 0.0
        %1660 = vmatprep.subr.mxu0 0.0
        %1661 = vmatpush1.msra.mxu0 0.0
        %1662 = vmatprep.subr.mxu0 0.0
        %1663 = vmatpush1.msra.mxu0 0.0
        %1664 = vmatprep.subr.mxu0 0.0
        %1665 = vmatpush1.msra.mxu0 %v1632
        %1666 = vmatprep.subr.mxu0 0.0
        %1667 = vmatpush2.msra.mxu0 0.0
        %1668 = vmatprep.subr.mxu0 0.0
        %1669 = vmatpush2.msra.mxu0 0.0
        %1670 = vmatprep.subr.mxu0 0.0
        %1671 = vmatpush2.msra.mxu0 0.0
        %1672 = vmatprep.subr.mxu0 0.0
        %1673 = vmatpush2.msra.mxu0 0.0
        %1674 = vmatprep.subr.mxu0 0.0
        %1675 = vmatpush2.msra.mxu0 0.0
        %1676 = vmatprep.subr.mxu0 0.0
        %1677 = vmatpush2.msra.mxu0 0.0
        %1678 = vmatprep.subr.mxu0 0.0
        %1679 = vmatpush2.msra.mxu0 0.0
        %1680 = vmatprep.subr.mxu0 0.0
        %1681 = vmatpush2.msra.mxu0 0.0
        %1682 = vmatprep.subr.mxu0 0.0
        %1683 = vmatpush2.msra.mxu0 0.0
        %1684 = vmatprep.subr.mxu0 0.0
        %1685 = vmatpush2.msra.mxu0 0.0
        %1686 = vmatprep.subr.mxu0 0.0
        %1687 = vmatpush2.msra.mxu0 0.0
        %1688 = vmatprep.subr.mxu0 0.0
        %1689 = vmatpush2.msra.mxu0 0.0
        %1690 = vmatprep.subr.mxu0 0.0
        %1691 = vmatpush2.msra.mxu0 0.0
        %1692 = vmatprep.subr.mxu0 0.0
        %1693 = vmatpush2.msra.mxu0 0.0
        %1694 = vmatprep.subr.mxu0 0.0
        %1695 = vmatpush2.msra.mxu0 0.0
        %1696 = vmatprep.subr.mxu0 0.0
        %1697 = vmatpush2.msra.mxu0 0.0
        %1698 = vmatprep.mubr.f32.mxu0 0.0
        %1699 = vmatmul.mubr.f32.gmra.mxu0 %v1621
        %v1700 = vpop.f32.mrf.mxu0
        %v1701 = vadd.f32 0.0, %v1700
        %v1702 = vpop.f32.mrf.mxu0
        %1703 = vmatprep.mubr.f32.mxu0 0.0
        %1704 = vmatmul.mubr.f32.gmra.mxu0 %v1624
        %v1705 = vpop.f32.mrf.mxu0
        %v1706 = vadd.f32 0.0, %v1705
        %v1707 = vpop.f32.mrf.mxu0
        %1708 = vmatprep.mubr.f32.mxu0 0.0
        %1709 = vmatmul.mubr.f32.gmra.mxu0 %v1627
        %v1710 = vpop.f32.mrf.mxu0
        %v1711 = vadd.f32 0.0, %v1710
        %v1712 = vpop.f32.mrf.mxu0
        %1713 = vmatprep.mubr.f32.mxu0 0.0
        %1714 = vmatmul.mubr.f32.gmra.mxu0 %v1630
        %v1715 = vpop.f32.mrf.mxu0
        %v1716 = vadd.f32 0.0, %v1715
        %v1717 = vpop.f32.mrf.mxu0
        %1718 = vdwg.mxu0
        %1719 = vxpose.xlu0.b32.start [1/16] %v1582, 128
        %1720 = vxpose.xlu0.b32.cont [2/16] 0.0, 128
        %1721 = vxpose.xlu0.b32.cont [3/16] 0.0, 128
        %1722 = vxpose.xlu0.b32.cont [4/16] 0.0, 128
        %1723 = vxpose.xlu0.b32.cont [5/16] 0.0, 128
        %1724 = vxpose.xlu0.b32.cont [6/16] 0.0, 128
        %1725 = vxpose.xlu0.b32.cont [7/16] 0.0, 128
        %1726 = vxpose.xlu0.b32.cont [8/16] 0.0, 128
        %1727 = vxpose.xlu0.b32.cont [9/16] 0.0, 128
        %1728 = vxpose.xlu0.b32.cont [10/16] 0.0, 128
        %1729 = vxpose.xlu0.b32.cont [11/16] 0.0, 128
        %1730 = vxpose.xlu0.b32.cont [12/16] 0.0, 128
        %1731 = vxpose.xlu0.b32.cont [13/16] 0.0, 128
        %1732 = vxpose.xlu0.b32.cont [14/16] 0.0, 128
        %1733 = vxpose.xlu0.b32.cont [15/16] 0.0, 128
        %1734 = vxpose.xlu0.b32.end [16/16] 0.0, 128
        %v1735 = vpop.trf.xlu0
        %v1736 = vpop.trf.xlu0
        %v1737 = vpop.trf.xlu0
        %v1738 = vpop.trf.xlu0
        %v1739 = vpop.trf.xlu0
        %v1740 = vpop.trf.xlu0
        %v1741 = vpop.trf.xlu0
        %v1742 = vpop.trf.xlu0
        %v1743 = vpop.trf.xlu0
        %v1744 = vpop.trf.xlu0
        %v1745 = vpop.trf.xlu0
        %v1746 = vpop.trf.xlu0
        %v1747 = vpop.trf.xlu0
        %v1748 = vpop.trf.xlu0
        %v1749 = vpop.trf.xlu0
        %v1750 = vpop.trf.xlu0
        %v1752 = vsel %vm756, %v1735, 0
        %v1755 = vsel %vm769, %v1505, 0
        %1757 = vmatprep.subr.mxu0 0.0
        %1758 = vmatpush1.msra.mxu0 0.0
        %1759 = vmatprep.subr.mxu0 0.0
        %1760 = vmatpush1.msra.mxu0 0.0
        %1761 = vmatprep.subr.mxu0 0.0
        %1762 = vmatpush1.msra.mxu0 0.0
        %1763 = vmatprep.subr.mxu0 0.0
        %1764 = vmatpush1.msra.mxu0 0.0
        %1765 = vmatprep.subr.mxu0 0.0
        %1766 = vmatpush1.msra.mxu0 0.0
        %1767 = vmatprep.subr.mxu0 0.0
        %1768 = vmatpush1.msra.mxu0 0.0
        %1769 = vmatprep.subr.mxu0 0.0
        %1770 = vmatpush1.msra.mxu0 0.0
        %1771 = vmatprep.subr.mxu0 0.0
        %1772 = vmatpush1.msra.mxu0 0.0
        %1773 = vmatprep.subr.mxu0 0.0
        %1774 = vmatpush1.msra.mxu0 0.0
        %1775 = vmatprep.subr.mxu0 0.0
        %1776 = vmatpush1.msra.mxu0 0.0
        %1777 = vmatprep.subr.mxu0 0.0
        %1778 = vmatpush1.msra.mxu0 0.0
        %1779 = vmatprep.subr.mxu0 0.0
        %1780 = vmatpush1.msra.mxu0 0.0
        %1781 = vmatprep.subr.mxu0 0.0
        %1782 = vmatpush1.msra.mxu0 0.0
        %1783 = vmatprep.subr.mxu0 0.0
        %1784 = vmatpush1.msra.mxu0 0.0
        %1785 = vmatprep.subr.mxu0 0.0
        %1786 = vmatpush1.msra.mxu0 0.0
        %1787 = vmatprep.subr.mxu0 0.0
        %1788 = vmatpush1.msra.mxu0 %v1755
        %1789 = vmatprep.subr.mxu0 0.0
        %1790 = vmatpush2.msra.mxu0 0.0
        %1791 = vmatprep.subr.mxu0 0.0
        %1792 = vmatpush2.msra.mxu0 0.0
        %1793 = vmatprep.subr.mxu0 0.0
        %1794 = vmatpush2.msra.mxu0 0.0
        %1795 = vmatprep.subr.mxu0 0.0
        %1796 = vmatpush2.msra.mxu0 0.0
        %1797 = vmatprep.subr.mxu0 0.0
        %1798 = vmatpush2.msra.mxu0 0.0
        %1799 = vmatprep.subr.mxu0 0.0
        %1800 = vmatpush2.msra.mxu0 0.0
        %1801 = vmatprep.subr.mxu0 0.0
        %1802 = vmatpush2.msra.mxu0 0.0
        %1803 = vmatprep.subr.mxu0 0.0
        %1804 = vmatpush2.msra.mxu0 0.0
        %1805 = vmatprep.subr.mxu0 0.0
        %1806 = vmatpush2.msra.mxu0 0.0
        %1807 = vmatprep.subr.mxu0 0.0
        %1808 = vmatpush2.msra.mxu0 0.0
        %1809 = vmatprep.subr.mxu0 0.0
        %1810 = vmatpush2.msra.mxu0 0.0
        %1811 = vmatprep.subr.mxu0 0.0
        %1812 = vmatpush2.msra.mxu0 0.0
        %1813 = vmatprep.subr.mxu0 0.0
        %1814 = vmatpush2.msra.mxu0 0.0
        %1815 = vmatprep.subr.mxu0 0.0
        %1816 = vmatpush2.msra.mxu0 0.0
        %1817 = vmatprep.subr.mxu0 0.0
        %1818 = vmatpush2.msra.mxu0 0.0
        %1819 = vmatprep.subr.mxu0 0.0
        %1820 = vmatpush2.msra.mxu0 0.0
        %1821 = vmatprep.mubr.f32.mxu0 0.0
        %1822 = vmatmul.mubr.f32.gmra.mxu0 %v1752
        %v1823 = vpop.f32.mrf.mxu0
        %v1824 = vadd.f32 0.0, %v1823
        %v1825 = vpop.f32.mrf.mxu0
        %1826 = vdwg.mxu0
        %v1827 = vadd.f32 %v1404, %v1701
        %v1828 = vadd.f32 %v1405, %v1706
        %v1829 = vadd.f32 %v1406, %v1711
        %v1830 = vadd.f32 %v1407, %v1716
        %v1831 = vmax.f32 %v1827, -1.0
        %v1832 = vmax.f32 %v1828, -1.0
        %v1833 = vmax.f32 %v1829, -1.0
        %v1834 = vmax.f32 %v1830, -1.0
        %v1835 = vmin.f32 %v1831, 1.0
        %v1836 = vmin.f32 %v1832, 1.0
        %v1837 = vmin.f32 %v1833, 1.0
        %v1838 = vmin.f32 %v1834, 1.0
        %v1839 = vadd.f32 %v1410, %v1824
        %v1840 = vmax.f32 %v1839, -1.0
        %v1841 = vmin.f32 %v1840, 1.0
        %v1842 = vmul.f32 %v546, %v1835
        %v1843 = vmul.f32 %v547, %v1836
        %v1844 = vmul.f32 %v548, %v1837
        %v1845 = vmul.f32 %v549, %v1838
        %v1846 = vadd.f32 %v1415, %v1842
        %v1847 = vadd.f32 %v1416, %v1843
        %v1848 = vadd.f32 %v1417, %v1844
        %v1849 = vadd.f32 %v1418, %v1845
        %v1850 = vmul.f32 %v550, %v1841
        %v1851 = vadd.f32 %v1420, %v1850
        %s1852 = scalar_lea.vmem %s495, 12
        %v1853 = vld [vmem:[%s1852] sm:$0xf]
        %v1855 = vsel %vm557, %v1853, 0
        %v1858 = vsel %vm557, %v1846, 0
        %v1861 = vsel %vm557, %v1847, 0
        %v1864 = vsel %vm557, %v1848, 0
        %v1867 = vsel %vm557, %v1849, 0
        %1869 = vmatprep.subr.mxu0 0.0
        %1870 = vmatpush1.xpose.msra.mxu0 0.0
        %1871 = vmatprep.subr.mxu0 0.0
        %1872 = vmatpush1.xpose.msra.mxu0 0.0
        %1873 = vmatprep.subr.mxu0 0.0
        %1874 = vmatpush1.xpose.msra.mxu0 0.0
        %1875 = vmatprep.subr.mxu0 0.0
        %1876 = vmatpush1.xpose.msra.mxu0 0.0
        %1877 = vmatprep.subr.mxu0 0.0
        %1878 = vmatpush1.xpose.msra.mxu0 0.0
        %1879 = vmatprep.subr.mxu0 0.0
        %1880 = vmatpush1.xpose.msra.mxu0 0.0
        %1881 = vmatprep.subr.mxu0 0.0
        %1882 = vmatpush1.xpose.msra.mxu0 0.0
        %1883 = vmatprep.subr.mxu0 0.0
        %1884 = vmatpush1.xpose.msra.mxu0 0.0
        %1885 = vmatprep.subr.mxu0 0.0
        %1886 = vmatpush1.xpose.msra.mxu0 0.0
        %1887 = vmatprep.subr.mxu0 0.0
        %1888 = vmatpush1.xpose.msra.mxu0 0.0
        %1889 = vmatprep.subr.mxu0 0.0
        %1890 = vmatpush1.xpose.msra.mxu0 0.0
        %1891 = vmatprep.subr.mxu0 0.0
        %1892 = vmatpush1.xpose.msra.mxu0 0.0
        %1893 = vmatprep.subr.mxu0 0.0
        %1894 = vmatpush1.xpose.msra.mxu0 %v1867
        %1895 = vmatprep.subr.mxu0 0.0
        %1896 = vmatpush1.xpose.msra.mxu0 %v1864
        %1897 = vmatprep.subr.mxu0 0.0
        %1898 = vmatpush1.xpose.msra.mxu0 %v1861
        %1899 = vmatprep.subr.mxu0 0.0
        %1900 = vmatpush1.xpose.msra.mxu0 %v1858
        %1901 = vmatprep.subr.mxu0 0.0
        %1902 = vmatpush2.xpose.msra.mxu0 0.0
        %1903 = vmatprep.subr.mxu0 0.0
        %1904 = vmatpush2.xpose.msra.mxu0 0.0
        %1905 = vmatprep.subr.mxu0 0.0
        %1906 = vmatpush2.xpose.msra.mxu0 0.0
        %1907 = vmatprep.subr.mxu0 0.0
        %1908 = vmatpush2.xpose.msra.mxu0 0.0
        %1909 = vmatprep.subr.mxu0 0.0
        %1910 = vmatpush2.xpose.msra.mxu0 0.0
        %1911 = vmatprep.subr.mxu0 0.0
        %1912 = vmatpush2.xpose.msra.mxu0 0.0
        %1913 = vmatprep.subr.mxu0 0.0
        %1914 = vmatpush2.xpose.msra.mxu0 0.0
        %1915 = vmatprep.subr.mxu0 0.0
        %1916 = vmatpush2.xpose.msra.mxu0 0.0
        %1917 = vmatprep.subr.mxu0 0.0
        %1918 = vmatpush2.xpose.msra.mxu0 0.0
        %1919 = vmatprep.subr.mxu0 0.0
        %1920 = vmatpush2.xpose.msra.mxu0 0.0
        %1921 = vmatprep.subr.mxu0 0.0
        %1922 = vmatpush2.xpose.msra.mxu0 0.0
        %1923 = vmatprep.subr.mxu0 0.0
        %1924 = vmatpush2.xpose.msra.mxu0 0.0
        %1925 = vmatprep.subr.mxu0 0.0
        %1926 = vmatpush2.xpose.msra.mxu0 0.0
        %1927 = vmatprep.subr.mxu0 0.0
        %1928 = vmatpush2.xpose.msra.mxu0 0.0
        %1929 = vmatprep.subr.mxu0 0.0
        %1930 = vmatpush2.xpose.msra.mxu0 0.0
        %1931 = vmatprep.subr.mxu0 0.0
        %1932 = vmatpush2.xpose.msra.mxu0 0.0
        %1933 = vmatprep.mubr.f32.mxu0 0.0
        %1934 = vmatmul.mubr.f32.gmra.mxu0 %v1855
        %v1935 = vpop.f32.mrf.mxu0
        %v1936 = vadd.f32 0.0, %v1935
        %v1937 = vpop.f32.mrf.mxu0
        %1938 = vdwg.mxu0
        %v1939 = vmax.f32 %v1936, 0.0
        %v1941 = vsel %vm644, %v1939, 0
        %v1944 = vsel %vm644, %v1851, 0
        %1946 = vmatprep.subr.mxu0 0.0
        %1947 = vmatpush1.xpose.msra.mxu0 0.0
        %1948 = vmatprep.subr.mxu0 0.0
        %1949 = vmatpush1.xpose.msra.mxu0 0.0
        %1950 = vmatprep.subr.mxu0 0.0
        %1951 = vmatpush1.xpose.msra.mxu0 0.0
        %1952 = vmatprep.subr.mxu0 0.0
        %1953 = vmatpush1.xpose.msra.mxu0 0.0
        %1954 = vmatprep.subr.mxu0 0.0
        %1955 = vmatpush1.xpose.msra.mxu0 0.0
        %1956 = vmatprep.subr.mxu0 0.0
        %1957 = vmatpush1.xpose.msra.mxu0 0.0
        %1958 = vmatprep.subr.mxu0 0.0
        %1959 = vmatpush1.xpose.msra.mxu0 0.0
        %1960 = vmatprep.subr.mxu0 0.0
        %1961 = vmatpush1.xpose.msra.mxu0 0.0
        %1962 = vmatprep.subr.mxu0 0.0
        %1963 = vmatpush1.xpose.msra.mxu0 0.0
        %1964 = vmatprep.subr.mxu0 0.0
        %1965 = vmatpush1.xpose.msra.mxu0 0.0
        %1966 = vmatprep.subr.mxu0 0.0
        %1967 = vmatpush1.xpose.msra.mxu0 0.0
        %1968 = vmatprep.subr.mxu0 0.0
        %1969 = vmatpush1.xpose.msra.mxu0 0.0
        %1970 = vmatprep.subr.mxu0 0.0
        %1971 = vmatpush1.xpose.msra.mxu0 0.0
        %1972 = vmatprep.subr.mxu0 0.0
        %1973 = vmatpush1.xpose.msra.mxu0 0.0
        %1974 = vmatprep.subr.mxu0 0.0
        %1975 = vmatpush1.xpose.msra.mxu0 0.0
        %1976 = vmatprep.subr.mxu0 0.0
        %1977 = vmatpush1.xpose.msra.mxu0 %v1944
        %1978 = vmatprep.subr.mxu0 0.0
        %1979 = vmatpush2.xpose.msra.mxu0 0.0
        %1980 = vmatprep.subr.mxu0 0.0
        %1981 = vmatpush2.xpose.msra.mxu0 0.0
        %1982 = vmatprep.subr.mxu0 0.0
        %1983 = vmatpush2.xpose.msra.mxu0 0.0
        %1984 = vmatprep.subr.mxu0 0.0
        %1985 = vmatpush2.xpose.msra.mxu0 0.0
        %1986 = vmatprep.subr.mxu0 0.0
        %1987 = vmatpush2.xpose.msra.mxu0 0.0
        %1988 = vmatprep.subr.mxu0 0.0
        %1989 = vmatpush2.xpose.msra.mxu0 0.0
        %1990 = vmatprep.subr.mxu0 0.0
        %1991 = vmatpush2.xpose.msra.mxu0 0.0
        %1992 = vmatprep.subr.mxu0 0.0
        %1993 = vmatpush2.xpose.msra.mxu0 0.0
        %1994 = vmatprep.subr.mxu0 0.0
        %1995 = vmatpush2.xpose.msra.mxu0 0.0
        %1996 = vmatprep.subr.mxu0 0.0
        %1997 = vmatpush2.xpose.msra.mxu0 0.0
        %1998 = vmatprep.subr.mxu0 0.0
        %1999 = vmatpush2.xpose.msra.mxu0 0.0
        %2000 = vmatprep.subr.mxu0 0.0
        %2001 = vmatpush2.xpose.msra.mxu0 0.0
        %2002 = vmatprep.subr.mxu0 0.0
        %2003 = vmatpush2.xpose.msra.mxu0 0.0
        %2004 = vmatprep.subr.mxu0 0.0
        %2005 = vmatpush2.xpose.msra.mxu0 0.0
        %2006 = vmatprep.subr.mxu0 0.0
        %2007 = vmatpush2.xpose.msra.mxu0 0.0
        %2008 = vmatprep.subr.mxu0 0.0
        %2009 = vmatpush2.xpose.msra.mxu0 0.0
        %2010 = vmatprep.mubr.f32.mxu0 0.0
        %2011 = vmatmul.mubr.f32.gmra.mxu0 %v1941
        %v2012 = vpop.f32.mrf.mxu0
        %v2013 = vadd.f32 0.0, %v2012
        %v2014 = vpop.f32.mrf.mxu0
        %2015 = vdwg.mxu0
        %v2016 = vmax.f32 %v2013, 0.0
        %s2017 = scalar_lea.vmem %s464, 12 [#allocation2]
        %2018 = vst.msk [vmem:[%s2017] sm:$0xf] %vm722, %v2016
        %2019 = vxpose.xlu0.b32.start [1/16] %v1936, 128
        %2020 = vxpose.xlu0.b32.cont [2/16] 0.0, 128
        %2021 = vxpose.xlu0.b32.cont [3/16] 0.0, 128
        %2022 = vxpose.xlu0.b32.cont [4/16] 0.0, 128
        %2023 = vxpose.xlu0.b32.cont [5/16] 0.0, 128
        %2024 = vxpose.xlu0.b32.cont [6/16] 0.0, 128
        %2025 = vxpose.xlu0.b32.cont [7/16] 0.0, 128
        %2026 = vxpose.xlu0.b32.cont [8/16] 0.0, 128
        %2027 = vxpose.xlu0.b32.cont [9/16] 0.0, 128
        %2028 = vxpose.xlu0.b32.cont [10/16] 0.0, 128
        %2029 = vxpose.xlu0.b32.cont [11/16] 0.0, 128
        %2030 = vxpose.xlu0.b32.cont [12/16] 0.0, 128
        %2031 = vxpose.xlu0.b32.cont [13/16] 0.0, 128
        %2032 = vxpose.xlu0.b32.cont [14/16] 0.0, 128
        %2033 = vxpose.xlu0.b32.cont [15/16] 0.0, 128
        %2034 = vxpose.xlu0.b32.end [16/16] 0.0, 128
        %v2035 = vpop.trf.xlu0
        %v2036 = vpop.trf.xlu0
        %v2037 = vpop.trf.xlu0
        %v2038 = vpop.trf.xlu0
        %v2039 = vpop.trf.xlu0
        %v2040 = vpop.trf.xlu0
        %v2041 = vpop.trf.xlu0
        %v2042 = vpop.trf.xlu0
        %v2043 = vpop.trf.xlu0
        %v2044 = vpop.trf.xlu0
        %v2045 = vpop.trf.xlu0
        %v2046 = vpop.trf.xlu0
        %v2047 = vpop.trf.xlu0
        %v2048 = vpop.trf.xlu0
        %v2049 = vpop.trf.xlu0
        %v2050 = vpop.trf.xlu0
        %v2052 = vsel %vm756, %v2035, 0
        %v2055 = vsel %vm756, %v2036, 0
        %v2058 = vsel %vm756, %v2037, 0
        %v2061 = vsel %vm756, %v2038, 0
        %v2063 = vsel %vm769, %v1853, 0
        %2065 = vmatprep.subr.mxu0 0.0
        %2066 = vmatpush1.msra.mxu0 0.0
        %2067 = vmatprep.subr.mxu0 0.0
        %2068 = vmatpush1.msra.mxu0 0.0
        %2069 = vmatprep.subr.mxu0 0.0
        %2070 = vmatpush1.msra.mxu0 0.0
        %2071 = vmatprep.subr.mxu0 0.0
        %2072 = vmatpush1.msra.mxu0 0.0
        %2073 = vmatprep.subr.mxu0 0.0
        %2074 = vmatpush1.msra.mxu0 0.0
        %2075 = vmatprep.subr.mxu0 0.0
        %2076 = vmatpush1.msra.mxu0 0.0
        %2077 = vmatprep.subr.mxu0 0.0
        %2078 = vmatpush1.msra.mxu0 0.0
        %2079 = vmatprep.subr.mxu0 0.0
        %2080 = vmatpush1.msra.mxu0 0.0
        %2081 = vmatprep.subr.mxu0 0.0
        %2082 = vmatpush1.msra.mxu0 0.0
        %2083 = vmatprep.subr.mxu0 0.0
        %2084 = vmatpush1.msra.mxu0 0.0
        %2085 = vmatprep.subr.mxu0 0.0
        %2086 = vmatpush1.msra.mxu0 0.0
        %2087 = vmatprep.subr.mxu0 0.0
        %2088 = vmatpush1.msra.mxu0 0.0
        %2089 = vmatprep.subr.mxu0 0.0
        %2090 = vmatpush1.msra.mxu0 0.0
        %2091 = vmatprep.subr.mxu0 0.0
        %2092 = vmatpush1.msra.mxu0 0.0
        %2093 = vmatprep.subr.mxu0 0.0
        %2094 = vmatpush1.msra.mxu0 0.0
        %2095 = vmatprep.subr.mxu0 0.0
        %2096 = vmatpush1.msra.mxu0 %v2063
        %2097 = vmatprep.subr.mxu0 0.0
        %2098 = vmatpush2.msra.mxu0 0.0
        %2099 = vmatprep.subr.mxu0 0.0
        %2100 = vmatpush2.msra.mxu0 0.0
        %2101 = vmatprep.subr.mxu0 0.0
        %2102 = vmatpush2.msra.mxu0 0.0
        %2103 = vmatprep.subr.mxu0 0.0
        %2104 = vmatpush2.msra.mxu0 0.0
        %2105 = vmatprep.subr.mxu0 0.0
        %2106 = vmatpush2.msra.mxu0 0.0
        %2107 = vmatprep.subr.mxu0 0.0
        %2108 = vmatpush2.msra.mxu0 0.0
        %2109 = vmatprep.subr.mxu0 0.0
        %2110 = vmatpush2.msra.mxu0 0.0
        %2111 = vmatprep.subr.mxu0 0.0
        %2112 = vmatpush2.msra.mxu0 0.0
        %2113 = vmatprep.subr.mxu0 0.0
        %2114 = vmatpush2.msra.mxu0 0.0
        %2115 = vmatprep.subr.mxu0 0.0
        %2116 = vmatpush2.msra.mxu0 0.0
        %2117 = vmatprep.subr.mxu0 0.0
        %2118 = vmatpush2.msra.mxu0 0.0
        %2119 = vmatprep.subr.mxu0 0.0
        %2120 = vmatpush2.msra.mxu0 0.0
        %2121 = vmatprep.subr.mxu0 0.0
        %2122 = vmatpush2.msra.mxu0 0.0
        %2123 = vmatprep.subr.mxu0 0.0
        %2124 = vmatpush2.msra.mxu0 0.0
        %2125 = vmatprep.subr.mxu0 0.0
        %2126 = vmatpush2.msra.mxu0 0.0
        %2127 = vmatprep.subr.mxu0 0.0
        %2128 = vmatpush2.msra.mxu0 0.0
        %2129 = vmatprep.mubr.f32.mxu0 0.0
        %2130 = vmatmul.mubr.f32.gmra.mxu0 %v2052
        %v2131 = vpop.f32.mrf.mxu0
        %v2132 = vadd.f32 0.0, %v2131
        %v2133 = vpop.f32.mrf.mxu0
        %2134 = vmatprep.mubr.f32.mxu0 0.0
        %2135 = vmatmul.mubr.f32.gmra.mxu0 %v2055
        %v2136 = vpop.f32.mrf.mxu0
        %v2137 = vadd.f32 0.0, %v2136
        %v2138 = vpop.f32.mrf.mxu0
        %2139 = vmatprep.mubr.f32.mxu0 0.0
        %2140 = vmatmul.mubr.f32.gmra.mxu0 %v2058
        %v2141 = vpop.f32.mrf.mxu0
        %v2142 = vadd.f32 0.0, %v2141
        %v2143 = vpop.f32.mrf.mxu0
        %2144 = vmatprep.mubr.f32.mxu0 0.0
        %2145 = vmatmul.mubr.f32.gmra.mxu0 %v2061
        %v2146 = vpop.f32.mrf.mxu0
        %v2147 = vadd.f32 0.0, %v2146
        %v2148 = vpop.f32.mrf.mxu0
        %2149 = vdwg.mxu0
        %2150 = vxpose.xlu0.b32.start [1/16] %v2013, 128
        %2151 = vxpose.xlu0.b32.cont [2/16] 0.0, 128
        %2152 = vxpose.xlu0.b32.cont [3/16] 0.0, 128
        %2153 = vxpose.xlu0.b32.cont [4/16] 0.0, 128
        %2154 = vxpose.xlu0.b32.cont [5/16] 0.0, 128
        %2155 = vxpose.xlu0.b32.cont [6/16] 0.0, 128
        %2156 = vxpose.xlu0.b32.cont [7/16] 0.0, 128
        %2157 = vxpose.xlu0.b32.cont [8/16] 0.0, 128
        %2158 = vxpose.xlu0.b32.cont [9/16] 0.0, 128
        %2159 = vxpose.xlu0.b32.cont [10/16] 0.0, 128
        %2160 = vxpose.xlu0.b32.cont [11/16] 0.0, 128
        %2161 = vxpose.xlu0.b32.cont [12/16] 0.0, 128
        %2162 = vxpose.xlu0.b32.cont [13/16] 0.0, 128
        %2163 = vxpose.xlu0.b32.cont [14/16] 0.0, 128
        %2164 = vxpose.xlu0.b32.cont [15/16] 0.0, 128
        %2165 = vxpose.xlu0.b32.end [16/16] 0.0, 128
        %v2166 = vpop.trf.xlu0
        %v2167 = vpop.trf.xlu0
        %v2168 = vpop.trf.xlu0
        %v2169 = vpop.trf.xlu0
        %v2170 = vpop.trf.xlu0
        %v2171 = vpop.trf.xlu0
        %v2172 = vpop.trf.xlu0
        %v2173 = vpop.trf.xlu0
        %v2174 = vpop.trf.xlu0
        %v2175 = vpop.trf.xlu0
        %v2176 = vpop.trf.xlu0
        %v2177 = vpop.trf.xlu0
        %v2178 = vpop.trf.xlu0
        %v2179 = vpop.trf.xlu0
        %v2180 = vpop.trf.xlu0
        %v2181 = vpop.trf.xlu0
        %v2183 = vsel %vm756, %v2166, 0
        %v2186 = vsel %vm769, %v1936, 0
        %2188 = vmatprep.subr.mxu0 0.0
        %2189 = vmatpush1.msra.mxu0 0.0
        %2190 = vmatprep.subr.mxu0 0.0
        %2191 = vmatpush1.msra.mxu0 0.0
        %2192 = vmatprep.subr.mxu0 0.0
        %2193 = vmatpush1.msra.mxu0 0.0
        %2194 = vmatprep.subr.mxu0 0.0
        %2195 = vmatpush1.msra.mxu0 0.0
        %2196 = vmatprep.subr.mxu0 0.0
        %2197 = vmatpush1.msra.mxu0 0.0
        %2198 = vmatprep.subr.mxu0 0.0
        %2199 = vmatpush1.msra.mxu0 0.0
        %2200 = vmatprep.subr.mxu0 0.0
        %2201 = vmatpush1.msra.mxu0 0.0
        %2202 = vmatprep.subr.mxu0 0.0
        %2203 = vmatpush1.msra.mxu0 0.0
        %2204 = vmatprep.subr.mxu0 0.0
        %2205 = vmatpush1.msra.mxu0 0.0
        %2206 = vmatprep.subr.mxu0 0.0
        %2207 = vmatpush1.msra.mxu0 0.0
        %2208 = vmatprep.subr.mxu0 0.0
        %2209 = vmatpush1.msra.mxu0 0.0
        %2210 = vmatprep.subr.mxu0 0.0
        %2211 = vmatpush1.msra.mxu0 0.0
        %2212 = vmatprep.subr.mxu0 0.0
        %2213 = vmatpush1.msra.mxu0 0.0
        %2214 = vmatprep.subr.mxu0 0.0
        %2215 = vmatpush1.msra.mxu0 0.0
        %2216 = vmatprep.subr.mxu0 0.0
        %2217 = vmatpush1.msra.mxu0 0.0
        %2218 = vmatprep.subr.mxu0 0.0
        %2219 = vmatpush1.msra.mxu0 %v2186
        %2220 = vmatprep.subr.mxu0 0.0
        %2221 = vmatpush2.msra.mxu0 0.0
        %2222 = vmatprep.subr.mxu0 0.0
        %2223 = vmatpush2.msra.mxu0 0.0
        %2224 = vmatprep.subr.mxu0 0.0
        %2225 = vmatpush2.msra.mxu0 0.0
        %2226 = vmatprep.subr.mxu0 0.0
        %2227 = vmatpush2.msra.mxu0 0.0
        %2228 = vmatprep.subr.mxu0 0.0
        %2229 = vmatpush2.msra.mxu0 0.0
        %2230 = vmatprep.subr.mxu0 0.0
        %2231 = vmatpush2.msra.mxu0 0.0
        %2232 = vmatprep.subr.mxu0 0.0
        %2233 = vmatpush2.msra.mxu0 0.0
        %2234 = vmatprep.subr.mxu0 0.0
        %2235 = vmatpush2.msra.mxu0 0.0
        %2236 = vmatprep.subr.mxu0 0.0
        %2237 = vmatpush2.msra.mxu0 0.0
        %2238 = vmatprep.subr.mxu0 0.0
        %2239 = vmatpush2.msra.mxu0 0.0
        %2240 = vmatprep.subr.mxu0 0.0
        %2241 = vmatpush2.msra.mxu0 0.0
        %2242 = vmatprep.subr.mxu0 0.0
        %2243 = vmatpush2.msra.mxu0 0.0
        %2244 = vmatprep.subr.mxu0 0.0
        %2245 = vmatpush2.msra.mxu0 0.0
        %2246 = vmatprep.subr.mxu0 0.0
        %2247 = vmatpush2.msra.mxu0 0.0
        %2248 = vmatprep.subr.mxu0 0.0
        %2249 = vmatpush2.msra.mxu0 0.0
        %2250 = vmatprep.subr.mxu0 0.0
        %2251 = vmatpush2.msra.mxu0 0.0
        %2252 = vmatprep.mubr.f32.mxu0 0.0
        %2253 = vmatmul.mubr.f32.gmra.mxu0 %v2183
        %v2254 = vpop.f32.mrf.mxu0
        %v2255 = vadd.f32 0.0, %v2254
        %v2256 = vpop.f32.mrf.mxu0
        %2257 = vdwg.mxu0
        %v2258 = vadd.f32 %v1835, %v2132
        %v2259 = vadd.f32 %v1836, %v2137
        %v2260 = vadd.f32 %v1837, %v2142
        %v2261 = vadd.f32 %v1838, %v2147
        %v2262 = vmax.f32 %v2258, -1.0
        %v2263 = vmax.f32 %v2259, -1.0
        %v2264 = vmax.f32 %v2260, -1.0
        %v2265 = vmax.f32 %v2261, -1.0
        %v2266 = vmin.f32 %v2262, 1.0
        %v2267 = vmin.f32 %v2263, 1.0
        %v2268 = vmin.f32 %v2264, 1.0
        %v2269 = vmin.f32 %v2265, 1.0
        %v2270 = vadd.f32 %v1841, %v2255
        %v2271 = vmax.f32 %v2270, -1.0
        %v2272 = vmin.f32 %v2271, 1.0
        %v2273 = vmul.f32 %v546, %v2266
        %v2274 = vmul.f32 %v547, %v2267
        %v2275 = vmul.f32 %v548, %v2268
        %v2276 = vmul.f32 %v549, %v2269
        %v2277 = vadd.f32 %v1846, %v2273
        %v2278 = vadd.f32 %v1847, %v2274
        %v2279 = vadd.f32 %v1848, %v2275
        %v2280 = vadd.f32 %v1849, %v2276
        %v2281 = vmul.f32 %v550, %v2272
        %v2282 = vadd.f32 %v1851, %v2281
        %s2283 = scalar_lea.vmem %s495, 16
        %v2284 = vld [vmem:[%s2283] sm:$0xf]
        %v2286 = vsel %vm557, %v2284, 0
        %v2289 = vsel %vm557, %v2277, 0
        %v2292 = vsel %vm557, %v2278, 0
        %v2295 = vsel %vm557, %v2279, 0
        %v2298 = vsel %vm557, %v2280, 0
        %2300 = vmatprep.subr.mxu0 0.0
        %2301 = vmatpush1.xpose.msra.mxu0 0.0
        %2302 = vmatprep.subr.mxu0 0.0
        %2303 = vmatpush1.xpose.msra.mxu0 0.0
        %2304 = vmatprep.subr.mxu0 0.0
        %2305 = vmatpush1.xpose.msra.mxu0 0.0
        %2306 = vmatprep.subr.mxu0 0.0
        %2307 = vmatpush1.xpose.msra.mxu0 0.0
        %2308 = vmatprep.subr.mxu0 0.0
        %2309 = vmatpush1.xpose.msra.mxu0 0.0
        %2310 = vmatprep.subr.mxu0 0.0
        %2311 = vmatpush1.xpose.msra.mxu0 0.0
        %2312 = vmatprep.subr.mxu0 0.0
        %2313 = vmatpush1.xpose.msra.mxu0 0.0
        %2314 = vmatprep.subr.mxu0 0.0
        %2315 = vmatpush1.xpose.msra.mxu0 0.0
        %2316 = vmatprep.subr.mxu0 0.0
        %2317 = vmatpush1.xpose.msra.mxu0 0.0
        %2318 = vmatprep.subr.mxu0 0.0
        %2319 = vmatpush1.xpose.msra.mxu0 0.0
        %2320 = vmatprep.subr.mxu0 0.0
        %2321 = vmatpush1.xpose.msra.mxu0 0.0
        %2322 = vmatprep.subr.mxu0 0.0
        %2323 = vmatpush1.xpose.msra.mxu0 0.0
        %2324 = vmatprep.subr.mxu0 0.0
        %2325 = vmatpush1.xpose.msra.mxu0 %v2298
        %2326 = vmatprep.subr.mxu0 0.0
        %2327 = vmatpush1.xpose.msra.mxu0 %v2295
        %2328 = vmatprep.subr.mxu0 0.0
        %2329 = vmatpush1.xpose.msra.mxu0 %v2292
        %2330 = vmatprep.subr.mxu0 0.0
        %2331 = vmatpush1.xpose.msra.mxu0 %v2289
        %2332 = vmatprep.subr.mxu0 0.0
        %2333 = vmatpush2.xpose.msra.mxu0 0.0
        %2334 = vmatprep.subr.mxu0 0.0
        %2335 = vmatpush2.xpose.msra.mxu0 0.0
        %2336 = vmatprep.subr.mxu0 0.0
        %2337 = vmatpush2.xpose.msra.mxu0 0.0
        %2338 = vmatprep.subr.mxu0 0.0
        %2339 = vmatpush2.xpose.msra.mxu0 0.0
        %2340 = vmatprep.subr.mxu0 0.0
        %2341 = vmatpush2.xpose.msra.mxu0 0.0
        %2342 = vmatprep.subr.mxu0 0.0
        %2343 = vmatpush2.xpose.msra.mxu0 0.0
        %2344 = vmatprep.subr.mxu0 0.0
        %2345 = vmatpush2.xpose.msra.mxu0 0.0
        %2346 = vmatprep.subr.mxu0 0.0
        %2347 = vmatpush2.xpose.msra.mxu0 0.0
        %2348 = vmatprep.subr.mxu0 0.0
        %2349 = vmatpush2.xpose.msra.mxu0 0.0
        %2350 = vmatprep.subr.mxu0 0.0
        %2351 = vmatpush2.xpose.msra.mxu0 0.0
        %2352 = vmatprep.subr.mxu0 0.0
        %2353 = vmatpush2.xpose.msra.mxu0 0.0
        %2354 = vmatprep.subr.mxu0 0.0
        %2355 = vmatpush2.xpose.msra.mxu0 0.0
        %2356 = vmatprep.subr.mxu0 0.0
        %2357 = vmatpush2.xpose.msra.mxu0 0.0
        %2358 = vmatprep.subr.mxu0 0.0
        %2359 = vmatpush2.xpose.msra.mxu0 0.0
        %2360 = vmatprep.subr.mxu0 0.0
        %2361 = vmatpush2.xpose.msra.mxu0 0.0
        %2362 = vmatprep.subr.mxu0 0.0
        %2363 = vmatpush2.xpose.msra.mxu0 0.0
        %2364 = vmatprep.mubr.f32.mxu0 0.0
        %2365 = vmatmul.mubr.f32.gmra.mxu0 %v2286
        %v2366 = vpop.f32.mrf.mxu0
        %v2367 = vadd.f32 0.0, %v2366
        %v2368 = vpop.f32.mrf.mxu0
        %2369 = vdwg.mxu0
        %v2370 = vmax.f32 %v2367, 0.0
        %v2372 = vsel %vm644, %v2370, 0
        %v2375 = vsel %vm644, %v2282, 0
        %2377 = vmatprep.subr.mxu0 0.0
        %2378 = vmatpush1.xpose.msra.mxu0 0.0
        %2379 = vmatprep.subr.mxu0 0.0
        %2380 = vmatpush1.xpose.msra.mxu0 0.0
        %2381 = vmatprep.subr.mxu0 0.0
        %2382 = vmatpush1.xpose.msra.mxu0 0.0
        %2383 = vmatprep.subr.mxu0 0.0
        %2384 = vmatpush1.xpose.msra.mxu0 0.0
        %2385 = vmatprep.subr.mxu0 0.0
        %2386 = vmatpush1.xpose.msra.mxu0 0.0
        %2387 = vmatprep.subr.mxu0 0.0
        %2388 = vmatpush1.xpose.msra.mxu0 0.0
        %2389 = vmatprep.subr.mxu0 0.0
        %2390 = vmatpush1.xpose.msra.mxu0 0.0
        %2391 = vmatprep.subr.mxu0 0.0
        %2392 = vmatpush1.xpose.msra.mxu0 0.0
        %2393 = vmatprep.subr.mxu0 0.0
        %2394 = vmatpush1.xpose.msra.mxu0 0.0
        %2395 = vmatprep.subr.mxu0 0.0
        %2396 = vmatpush1.xpose.msra.mxu0 0.0
        %2397 = vmatprep.subr.mxu0 0.0
        %2398 = vmatpush1.xpose.msra.mxu0 0.0
        %2399 = vmatprep.subr.mxu0 0.0
        %2400 = vmatpush1.xpose.msra.mxu0 0.0
        %2401 = vmatprep.subr.mxu0 0.0
        %2402 = vmatpush1.xpose.msra.mxu0 0.0
        %2403 = vmatprep.subr.mxu0 0.0
        %2404 = vmatpush1.xpose.msra.mxu0 0.0
        %2405 = vmatprep.subr.mxu0 0.0
        %2406 = vmatpush1.xpose.msra.mxu0 0.0
        %2407 = vmatprep.subr.mxu0 0.0
        %2408 = vmatpush1.xpose.msra.mxu0 %v2375
        %2409 = vmatprep.subr.mxu0 0.0
        %2410 = vmatpush2.xpose.msra.mxu0 0.0
        %2411 = vmatprep.subr.mxu0 0.0
        %2412 = vmatpush2.xpose.msra.mxu0 0.0
        %2413 = vmatprep.subr.mxu0 0.0
        %2414 = vmatpush2.xpose.msra.mxu0 0.0
        %2415 = vmatprep.subr.mxu0 0.0
        %2416 = vmatpush2.xpose.msra.mxu0 0.0
        %2417 = vmatprep.subr.mxu0 0.0
        %2418 = vmatpush2.xpose.msra.mxu0 0.0
        %2419 = vmatprep.subr.mxu0 0.0
        %2420 = vmatpush2.xpose.msra.mxu0 0.0
        %2421 = vmatprep.subr.mxu0 0.0
        %2422 = vmatpush2.xpose.msra.mxu0 0.0
        %2423 = vmatprep.subr.mxu0 0.0
        %2424 = vmatpush2.xpose.msra.mxu0 0.0
        %2425 = vmatprep.subr.mxu0 0.0
        %2426 = vmatpush2.xpose.msra.mxu0 0.0
        %2427 = vmatprep.subr.mxu0 0.0
        %2428 = vmatpush2.xpose.msra.mxu0 0.0
        %2429 = vmatprep.subr.mxu0 0.0
        %2430 = vmatpush2.xpose.msra.mxu0 0.0
        %2431 = vmatprep.subr.mxu0 0.0
        %2432 = vmatpush2.xpose.msra.mxu0 0.0
        %2433 = vmatprep.subr.mxu0 0.0
        %2434 = vmatpush2.xpose.msra.mxu0 0.0
        %2435 = vmatprep.subr.mxu0 0.0
        %2436 = vmatpush2.xpose.msra.mxu0 0.0
        %2437 = vmatprep.subr.mxu0 0.0
        %2438 = vmatpush2.xpose.msra.mxu0 0.0
        %2439 = vmatprep.subr.mxu0 0.0
        %2440 = vmatpush2.xpose.msra.mxu0 0.0
        %2441 = vmatprep.mubr.f32.mxu0 0.0
        %2442 = vmatmul.mubr.f32.gmra.mxu0 %v2372
        %v2443 = vpop.f32.mrf.mxu0
        %v2444 = vadd.f32 0.0, %v2443
        %v2445 = vpop.f32.mrf.mxu0
        %2446 = vdwg.mxu0
        %v2447 = vmax.f32 %v2444, 0.0
        %s2448 = scalar_lea.vmem %s464, 16 [#allocation2]
        %2449 = vst.msk [vmem:[%s2448] sm:$0xf] %vm722, %v2447
        %2450 = vxpose.xlu0.b32.start [1/16] %v2367, 128
        %2451 = vxpose.xlu0.b32.cont [2/16] 0.0, 128
        %2452 = vxpose.xlu0.b32.cont [3/16] 0.0, 128
        %2453 = vxpose.xlu0.b32.cont [4/16] 0.0, 128
        %2454 = vxpose.xlu0.b32.cont [5/16] 0.0, 128
        %2455 = vxpose.xlu0.b32.cont [6/16] 0.0, 128
        %2456 = vxpose.xlu0.b32.cont [7/16] 0.0, 128
        %2457 = vxpose.xlu0.b32.cont [8/16] 0.0, 128
        %2458 = vxpose.xlu0.b32.cont [9/16] 0.0, 128
        %2459 = vxpose.xlu0.b32.cont [10/16] 0.0, 128
        %2460 = vxpose.xlu0.b32.cont [11/16] 0.0, 128
        %2461 = vxpose.xlu0.b32.cont [12/16] 0.0, 128
        %2462 = vxpose.xlu0.b32.cont [13/16] 0.0, 128
        %2463 = vxpose.xlu0.b32.cont [14/16] 0.0, 128
        %2464 = vxpose.xlu0.b32.cont [15/16] 0.0, 128
        %2465 = vxpose.xlu0.b32.end [16/16] 0.0, 128
        %v2466 = vpop.trf.xlu0
        %v2467 = vpop.trf.xlu0
        %v2468 = vpop.trf.xlu0
        %v2469 = vpop.trf.xlu0
        %v2470 = vpop.trf.xlu0
        %v2471 = vpop.trf.xlu0
        %v2472 = vpop.trf.xlu0
        %v2473 = vpop.trf.xlu0
        %v2474 = vpop.trf.xlu0
        %v2475 = vpop.trf.xlu0
        %v2476 = vpop.trf.xlu0
        %v2477 = vpop.trf.xlu0
        %v2478 = vpop.trf.xlu0
        %v2479 = vpop.trf.xlu0
        %v2480 = vpop.trf.xlu0
        %v2481 = vpop.trf.xlu0
        %v2483 = vsel %vm756, %v2466, 0
        %v2486 = vsel %vm756, %v2467, 0
        %v2489 = vsel %vm756, %v2468, 0
        %v2492 = vsel %vm756, %v2469, 0
        %v2494 = vsel %vm769, %v2284, 0
        %2496 = vmatprep.subr.mxu0 0.0
        %2497 = vmatpush1.msra.mxu0 0.0
        %2498 = vmatprep.subr.mxu0 0.0
        %2499 = vmatpush1.msra.mxu0 0.0
        %2500 = vmatprep.subr.mxu0 0.0
        %2501 = vmatpush1.msra.mxu0 0.0
        %2502 = vmatprep.subr.mxu0 0.0
        %2503 = vmatpush1.msra.mxu0 0.0
        %2504 = vmatprep.subr.mxu0 0.0
        %2505 = vmatpush1.msra.mxu0 0.0
        %2506 = vmatprep.subr.mxu0 0.0
        %2507 = vmatpush1.msra.mxu0 0.0
        %2508 = vmatprep.subr.mxu0 0.0
        %2509 = vmatpush1.msra.mxu0 0.0
        %2510 = vmatprep.subr.mxu0 0.0
        %2511 = vmatpush1.msra.mxu0 0.0
        %2512 = vmatprep.subr.mxu0 0.0
        %2513 = vmatpush1.msra.mxu0 0.0
        %2514 = vmatprep.subr.mxu0 0.0
        %2515 = vmatpush1.msra.mxu0 0.0
        %2516 = vmatprep.subr.mxu0 0.0
        %2517 = vmatpush1.msra.mxu0 0.0
        %2518 = vmatprep.subr.mxu0 0.0
        %2519 = vmatpush1.msra.mxu0 0.0
        %2520 = vmatprep.subr.mxu0 0.0
        %2521 = vmatpush1.msra.mxu0 0.0
        %2522 = vmatprep.subr.mxu0 0.0
        %2523 = vmatpush1.msra.mxu0 0.0
        %2524 = vmatprep.subr.mxu0 0.0
        %2525 = vmatpush1.msra.mxu0 0.0
        %2526 = vmatprep.subr.mxu0 0.0
        %2527 = vmatpush1.msra.mxu0 %v2494
        %2528 = vmatprep.subr.mxu0 0.0
        %2529 = vmatpush2.msra.mxu0 0.0
        %2530 = vmatprep.subr.mxu0 0.0
        %2531 = vmatpush2.msra.mxu0 0.0
        %2532 = vmatprep.subr.mxu0 0.0
        %2533 = vmatpush2.msra.mxu0 0.0
        %2534 = vmatprep.subr.mxu0 0.0
        %2535 = vmatpush2.msra.mxu0 0.0
        %2536 = vmatprep.subr.mxu0 0.0
        %2537 = vmatpush2.msra.mxu0 0.0
        %2538 = vmatprep.subr.mxu0 0.0
        %2539 = vmatpush2.msra.mxu0 0.0
        %2540 = vmatprep.subr.mxu0 0.0
        %2541 = vmatpush2.msra.mxu0 0.0
        %2542 = vmatprep.subr.mxu0 0.0
        %2543 = vmatpush2.msra.mxu0 0.0
        %2544 = vmatprep.subr.mxu0 0.0
        %2545 = vmatpush2.msra.mxu0 0.0
        %2546 = vmatprep.subr.mxu0 0.0
        %2547 = vmatpush2.msra.mxu0 0.0
        %2548 = vmatprep.subr.mxu0 0.0
        %2549 = vmatpush2.msra.mxu0 0.0
        %2550 = vmatprep.subr.mxu0 0.0
        %2551 = vmatpush2.msra.mxu0 0.0
        %2552 = vmatprep.subr.mxu0 0.0
        %2553 = vmatpush2.msra.mxu0 0.0
        %2554 = vmatprep.subr.mxu0 0.0
        %2555 = vmatpush2.msra.mxu0 0.0
        %2556 = vmatprep.subr.mxu0 0.0
        %2557 = vmatpush2.msra.mxu0 0.0
        %2558 = vmatprep.subr.mxu0 0.0
        %2559 = vmatpush2.msra.mxu0 0.0
        %2560 = vmatprep.mubr.f32.mxu0 0.0
        %2561 = vmatmul.mubr.f32.gmra.mxu0 %v2483
        %v2562 = vpop.f32.mrf.mxu0
        %v2563 = vadd.f32 0.0, %v2562
        %v2564 = vpop.f32.mrf.mxu0
        %2565 = vmatprep.mubr.f32.mxu0 0.0
        %2566 = vmatmul.mubr.f32.gmra.mxu0 %v2486
        %v2567 = vpop.f32.mrf.mxu0
        %v2568 = vadd.f32 0.0, %v2567
        %v2569 = vpop.f32.mrf.mxu0
        %2570 = vmatprep.mubr.f32.mxu0 0.0
        %2571 = vmatmul.mubr.f32.gmra.mxu0 %v2489
        %v2572 = vpop.f32.mrf.mxu0
        %v2573 = vadd.f32 0.0, %v2572
        %v2574 = vpop.f32.mrf.mxu0
        %2575 = vmatprep.mubr.f32.mxu0 0.0
        %2576 = vmatmul.mubr.f32.gmra.mxu0 %v2492
        %v2577 = vpop.f32.mrf.mxu0
        %v2578 = vadd.f32 0.0, %v2577
        %v2579 = vpop.f32.mrf.mxu0
        %2580 = vdwg.mxu0
        %2581 = vxpose.xlu0.b32.start [1/16] %v2444, 128
        %2582 = vxpose.xlu0.b32.cont [2/16] 0.0, 128
        %2583 = vxpose.xlu0.b32.cont [3/16] 0.0, 128
        %2584 = vxpose.xlu0.b32.cont [4/16] 0.0, 128
        %2585 = vxpose.xlu0.b32.cont [5/16] 0.0, 128
        %2586 = vxpose.xlu0.b32.cont [6/16] 0.0, 128
        %2587 = vxpose.xlu0.b32.cont [7/16] 0.0, 128
        %2588 = vxpose.xlu0.b32.cont [8/16] 0.0, 128
        %2589 = vxpose.xlu0.b32.cont [9/16] 0.0, 128
        %2590 = vxpose.xlu0.b32.cont [10/16] 0.0, 128
        %2591 = vxpose.xlu0.b32.cont [11/16] 0.0, 128
        %2592 = vxpose.xlu0.b32.cont [12/16] 0.0, 128
        %2593 = vxpose.xlu0.b32.cont [13/16] 0.0, 128
        %2594 = vxpose.xlu0.b32.cont [14/16] 0.0, 128
        %2595 = vxpose.xlu0.b32.cont [15/16] 0.0, 128
        %2596 = vxpose.xlu0.b32.end [16/16] 0.0, 128
        %v2597 = vpop.trf.xlu0
        %v2598 = vpop.trf.xlu0
        %v2599 = vpop.trf.xlu0
        %v2600 = vpop.trf.xlu0
        %v2601 = vpop.trf.xlu0
        %v2602 = vpop.trf.xlu0
        %v2603 = vpop.trf.xlu0
        %v2604 = vpop.trf.xlu0
        %v2605 = vpop.trf.xlu0
        %v2606 = vpop.trf.xlu0
        %v2607 = vpop.trf.xlu0
        %v2608 = vpop.trf.xlu0
        %v2609 = vpop.trf.xlu0
        %v2610 = vpop.trf.xlu0
        %v2611 = vpop.trf.xlu0
        %v2612 = vpop.trf.xlu0
        %v2614 = vsel %vm756, %v2597, 0
        %v2617 = vsel %vm769, %v2367, 0
        %2619 = vmatprep.subr.mxu0 0.0
        %2620 = vmatpush1.msra.mxu0 0.0
        %2621 = vmatprep.subr.mxu0 0.0
        %2622 = vmatpush1.msra.mxu0 0.0
        %2623 = vmatprep.subr.mxu0 0.0
        %2624 = vmatpush1.msra.mxu0 0.0
        %2625 = vmatprep.subr.mxu0 0.0
        %2626 = vmatpush1.msra.mxu0 0.0
        %2627 = vmatprep.subr.mxu0 0.0
        %2628 = vmatpush1.msra.mxu0 0.0
        %2629 = vmatprep.subr.mxu0 0.0
        %2630 = vmatpush1.msra.mxu0 0.0
        %2631 = vmatprep.subr.mxu0 0.0
        %2632 = vmatpush1.msra.mxu0 0.0
        %2633 = vmatprep.subr.mxu0 0.0
        %2634 = vmatpush1.msra.mxu0 0.0
        %2635 = vmatprep.subr.mxu0 0.0
        %2636 = vmatpush1.msra.mxu0 0.0
        %2637 = vmatprep.subr.mxu0 0.0
        %2638 = vmatpush1.msra.mxu0 0.0
        %2639 = vmatprep.subr.mxu0 0.0
        %2640 = vmatpush1.msra.mxu0 0.0
        %2641 = vmatprep.subr.mxu0 0.0
        %2642 = vmatpush1.msra.mxu0 0.0
        %2643 = vmatprep.subr.mxu0 0.0
        %2644 = vmatpush1.msra.mxu0 0.0
        %2645 = vmatprep.subr.mxu0 0.0
        %2646 = vmatpush1.msra.mxu0 0.0
        %2647 = vmatprep.subr.mxu0 0.0
        %2648 = vmatpush1.msra.mxu0 0.0
        %2649 = vmatprep.subr.mxu0 0.0
        %2650 = vmatpush1.msra.mxu0 %v2617
        %2651 = vmatprep.subr.mxu0 0.0
        %2652 = vmatpush2.msra.mxu0 0.0
        %2653 = vmatprep.subr.mxu0 0.0
        %2654 = vmatpush2.msra.mxu0 0.0
        %2655 = vmatprep.subr.mxu0 0.0
        %2656 = vmatpush2.msra.mxu0 0.0
        %2657 = vmatprep.subr.mxu0 0.0
        %2658 = vmatpush2.msra.mxu0 0.0
        %2659 = vmatprep.subr.mxu0 0.0
        %2660 = vmatpush2.msra.mxu0 0.0
        %2661 = vmatprep.subr.mxu0 0.0
        %2662 = vmatpush2.msra.mxu0 0.0
        %2663 = vmatprep.subr.mxu0 0.0
        %2664 = vmatpush2.msra.mxu0 0.0
        %2665 = vmatprep.subr.mxu0 0.0
        %2666 = vmatpush2.msra.mxu0 0.0
        %2667 = vmatprep.subr.mxu0 0.0
        %2668 = vmatpush2.msra.mxu0 0.0
        %2669 = vmatprep.subr.mxu0 0.0
        %2670 = vmatpush2.msra.mxu0 0.0
        %2671 = vmatprep.subr.mxu0 0.0
        %2672 = vmatpush2.msra.mxu0 0.0
        %2673 = vmatprep.subr.mxu0 0.0
        %2674 = vmatpush2.msra.mxu0 0.0
        %2675 = vmatprep.subr.mxu0 0.0
        %2676 = vmatpush2.msra.mxu0 0.0
        %2677 = vmatprep.subr.mxu0 0.0
        %2678 = vmatpush2.msra.mxu0 0.0
        %2679 = vmatprep.subr.mxu0 0.0
        %2680 = vmatpush2.msra.mxu0 0.0
        %2681 = vmatprep.subr.mxu0 0.0
        %2682 = vmatpush2.msra.mxu0 0.0
        %2683 = vmatprep.mubr.f32.mxu0 0.0
        %2684 = vmatmul.mubr.f32.gmra.mxu0 %v2614
        %v2685 = vpop.f32.mrf.mxu0
        %v2686 = vadd.f32 0.0, %v2685
        %v2687 = vpop.f32.mrf.mxu0
        %2688 = vdwg.mxu0
        %v2689 = vadd.f32 %v2266, %v2563
        %v2690 = vadd.f32 %v2267, %v2568
        %v2691 = vadd.f32 %v2268, %v2573
        %v2692 = vadd.f32 %v2269, %v2578
        %v2693 = vmax.f32 %v2689, -1.0
        %v2694 = vmax.f32 %v2690, -1.0
        %v2695 = vmax.f32 %v2691, -1.0
        %v2696 = vmax.f32 %v2692, -1.0
        %v2697 = vmin.f32 %v2693, 1.0
        %v2698 = vmin.f32 %v2694, 1.0
        %v2699 = vmin.f32 %v2695, 1.0
        %v2700 = vmin.f32 %v2696, 1.0
        %v2701 = vadd.f32 %v2272, %v2686
        %v2702 = vmax.f32 %v2701, -1.0
        %v2703 = vmin.f32 %v2702, 1.0
        %v2704 = vmul.f32 %v546, %v2697
        %v2705 = vmul.f32 %v547, %v2698
        %v2706 = vmul.f32 %v548, %v2699
        %v2707 = vmul.f32 %v549, %v2700
        %v2708 = vadd.f32 %v2277, %v2704
        %v2709 = vadd.f32 %v2278, %v2705
        %v2710 = vadd.f32 %v2279, %v2706
        %v2711 = vadd.f32 %v2280, %v2707
        %v2712 = vmul.f32 %v550, %v2703
        %v2713 = vadd.f32 %v2282, %v2712
        %s2714 = scalar_lea.vmem %s495, 20
        %v2715 = vld [vmem:[%s2714] sm:$0xf]
        %v2717 = vsel %vm557, %v2715, 0
        %v2720 = vsel %vm557, %v2708, 0
        %v2723 = vsel %vm557, %v2709, 0
        %v2726 = vsel %vm557, %v2710, 0
        %v2729 = vsel %vm557, %v2711, 0
        %2731 = vmatprep.subr.mxu0 0.0
        %2732 = vmatpush1.xpose.msra.mxu0 0.0
        %2733 = vmatprep.subr.mxu0 0.0
        %2734 = vmatpush1.xpose.msra.mxu0 0.0
        %2735 = vmatprep.subr.mxu0 0.0
        %2736 = vmatpush1.xpose.msra.mxu0 0.0
        %2737 = vmatprep.subr.mxu0 0.0
        %2738 = vmatpush1.xpose.msra.mxu0 0.0
        %2739 = vmatprep.subr.mxu0 0.0
        %2740 = vmatpush1.xpose.msra.mxu0 0.0
        %2741 = vmatprep.subr.mxu0 0.0
        %2742 = vmatpush1.xpose.msra.mxu0 0.0
        %2743 = vmatprep.subr.mxu0 0.0
        %2744 = vmatpush1.xpose.msra.mxu0 0.0
        %2745 = vmatprep.subr.mxu0 0.0
        %2746 = vmatpush1.xpose.msra.mxu0 0.0
        %2747 = vmatprep.subr.mxu0 0.0
        %2748 = vmatpush1.xpose.msra.mxu0 0.0
        %2749 = vmatprep.subr.mxu0 0.0
        %2750 = vmatpush1.xpose.msra.mxu0 0.0
        %2751 = vmatprep.subr.mxu0 0.0
        %2752 = vmatpush1.xpose.msra.mxu0 0.0
        %2753 = vmatprep.subr.mxu0 0.0
        %2754 = vmatpush1.xpose.msra.mxu0 0.0
        %2755 = vmatprep.subr.mxu0 0.0
        %2756 = vmatpush1.xpose.msra.mxu0 %v2729
        %2757 = vmatprep.subr.mxu0 0.0
        %2758 = vmatpush1.xpose.msra.mxu0 %v2726
        %2759 = vmatprep.subr.mxu0 0.0
        %2760 = vmatpush1.xpose.msra.mxu0 %v2723
        %2761 = vmatprep.subr.mxu0 0.0
        %2762 = vmatpush1.xpose.msra.mxu0 %v2720
        %2763 = vmatprep.subr.mxu0 0.0
        %2764 = vmatpush2.xpose.msra.mxu0 0.0
        %2765 = vmatprep.subr.mxu0 0.0
        %2766 = vmatpush2.xpose.msra.mxu0 0.0
        %2767 = vmatprep.subr.mxu0 0.0
        %2768 = vmatpush2.xpose.msra.mxu0 0.0
        %2769 = vmatprep.subr.mxu0 0.0
        %2770 = vmatpush2.xpose.msra.mxu0 0.0
        %2771 = vmatprep.subr.mxu0 0.0
        %2772 = vmatpush2.xpose.msra.mxu0 0.0
        %2773 = vmatprep.subr.mxu0 0.0
        %2774 = vmatpush2.xpose.msra.mxu0 0.0
        %2775 = vmatprep.subr.mxu0 0.0
        %2776 = vmatpush2.xpose.msra.mxu0 0.0
        %2777 = vmatprep.subr.mxu0 0.0
        %2778 = vmatpush2.xpose.msra.mxu0 0.0
        %2779 = vmatprep.subr.mxu0 0.0
        %2780 = vmatpush2.xpose.msra.mxu0 0.0
        %2781 = vmatprep.subr.mxu0 0.0
        %2782 = vmatpush2.xpose.msra.mxu0 0.0
        %2783 = vmatprep.subr.mxu0 0.0
        %2784 = vmatpush2.xpose.msra.mxu0 0.0
        %2785 = vmatprep.subr.mxu0 0.0
        %2786 = vmatpush2.xpose.msra.mxu0 0.0
        %2787 = vmatprep.subr.mxu0 0.0
        %2788 = vmatpush2.xpose.msra.mxu0 0.0
        %2789 = vmatprep.subr.mxu0 0.0
        %2790 = vmatpush2.xpose.msra.mxu0 0.0
        %2791 = vmatprep.subr.mxu0 0.0
        %2792 = vmatpush2.xpose.msra.mxu0 0.0
        %2793 = vmatprep.subr.mxu0 0.0
        %2794 = vmatpush2.xpose.msra.mxu0 0.0
        %2795 = vmatprep.mubr.f32.mxu0 0.0
        %2796 = vmatmul.mubr.f32.gmra.mxu0 %v2717
        %v2797 = vpop.f32.mrf.mxu0
        %v2798 = vadd.f32 0.0, %v2797
        %v2799 = vpop.f32.mrf.mxu0
        %2800 = vdwg.mxu0
        %v2801 = vmax.f32 %v2798, 0.0
        %v2803 = vsel %vm644, %v2801, 0
        %v2806 = vsel %vm644, %v2713, 0
        %2808 = vmatprep.subr.mxu0 0.0
        %2809 = vmatpush1.xpose.msra.mxu0 0.0
        %2810 = vmatprep.subr.mxu0 0.0
        %2811 = vmatpush1.xpose.msra.mxu0 0.0
        %2812 = vmatprep.subr.mxu0 0.0
        %2813 = vmatpush1.xpose.msra.mxu0 0.0
        %2814 = vmatprep.subr.mxu0 0.0
        %2815 = vmatpush1.xpose.msra.mxu0 0.0
        %2816 = vmatprep.subr.mxu0 0.0
        %2817 = vmatpush1.xpose.msra.mxu0 0.0
        %2818 = vmatprep.subr.mxu0 0.0
        %2819 = vmatpush1.xpose.msra.mxu0 0.0
        %2820 = vmatprep.subr.mxu0 0.0
        %2821 = vmatpush1.xpose.msra.mxu0 0.0
        %2822 = vmatprep.subr.mxu0 0.0
        %2823 = vmatpush1.xpose.msra.mxu0 0.0
        %2824 = vmatprep.subr.mxu0 0.0
        %2825 = vmatpush1.xpose.msra.mxu0 0.0
        %2826 = vmatprep.subr.mxu0 0.0
        %2827 = vmatpush1.xpose.msra.mxu0 0.0
        %2828 = vmatprep.subr.mxu0 0.0
        %2829 = vmatpush1.xpose.msra.mxu0 0.0
        %2830 = vmatprep.subr.mxu0 0.0
        %2831 = vmatpush1.xpose.msra.mxu0 0.0
        %2832 = vmatprep.subr.mxu0 0.0
        %2833 = vmatpush1.xpose.msra.mxu0 0.0
        %2834 = vmatprep.subr.mxu0 0.0
        %2835 = vmatpush1.xpose.msra.mxu0 0.0
        %2836 = vmatprep.subr.mxu0 0.0
        %2837 = vmatpush1.xpose.msra.mxu0 0.0
        %2838 = vmatprep.subr.mxu0 0.0
        %2839 = vmatpush1.xpose.msra.mxu0 %v2806
        %2840 = vmatprep.subr.mxu0 0.0
        %2841 = vmatpush2.xpose.msra.mxu0 0.0
        %2842 = vmatprep.subr.mxu0 0.0
        %2843 = vmatpush2.xpose.msra.mxu0 0.0
        %2844 = vmatprep.subr.mxu0 0.0
        %2845 = vmatpush2.xpose.msra.mxu0 0.0
        %2846 = vmatprep.subr.mxu0 0.0
        %2847 = vmatpush2.xpose.msra.mxu0 0.0
        %2848 = vmatprep.subr.mxu0 0.0
        %2849 = vmatpush2.xpose.msra.mxu0 0.0
        %2850 = vmatprep.subr.mxu0 0.0
        %2851 = vmatpush2.xpose.msra.mxu0 0.0
        %2852 = vmatprep.subr.mxu0 0.0
        %2853 = vmatpush2.xpose.msra.mxu0 0.0
        %2854 = vmatprep.subr.mxu0 0.0
        %2855 = vmatpush2.xpose.msra.mxu0 0.0
        %2856 = vmatprep.subr.mxu0 0.0
        %2857 = vmatpush2.xpose.msra.mxu0 0.0
        %2858 = vmatprep.subr.mxu0 0.0
        %2859 = vmatpush2.xpose.msra.mxu0 0.0
        %2860 = vmatprep.subr.mxu0 0.0
        %2861 = vmatpush2.xpose.msra.mxu0 0.0
        %2862 = vmatprep.subr.mxu0 0.0
        %2863 = vmatpush2.xpose.msra.mxu0 0.0
        %2864 = vmatprep.subr.mxu0 0.0
        %2865 = vmatpush2.xpose.msra.mxu0 0.0
        %2866 = vmatprep.subr.mxu0 0.0
        %2867 = vmatpush2.xpose.msra.mxu0 0.0
        %2868 = vmatprep.subr.mxu0 0.0
        %2869 = vmatpush2.xpose.msra.mxu0 0.0
        %2870 = vmatprep.subr.mxu0 0.0
        %2871 = vmatpush2.xpose.msra.mxu0 0.0
        %2872 = vmatprep.mubr.f32.mxu0 0.0
        %2873 = vmatmul.mubr.f32.gmra.mxu0 %v2803
        %v2874 = vpop.f32.mrf.mxu0
        %v2875 = vadd.f32 0.0, %v2874
        %v2876 = vpop.f32.mrf.mxu0
        %2877 = vdwg.mxu0
        %v2878 = vmax.f32 %v2875, 0.0
        %s2879 = scalar_lea.vmem %s464, 20 [#allocation2]
        %2880 = vst.msk [vmem:[%s2879] sm:$0xf] %vm722, %v2878
        %2881 = vxpose.xlu0.b32.start [1/16] %v2798, 128
        %2882 = vxpose.xlu0.b32.cont [2/16] 0.0, 128
        %2883 = vxpose.xlu0.b32.cont [3/16] 0.0, 128
        %2884 = vxpose.xlu0.b32.cont [4/16] 0.0, 128
        %2885 = vxpose.xlu0.b32.cont [5/16] 0.0, 128
        %2886 = vxpose.xlu0.b32.cont [6/16] 0.0, 128
        %2887 = vxpose.xlu0.b32.cont [7/16] 0.0, 128
        %2888 = vxpose.xlu0.b32.cont [8/16] 0.0, 128
        %2889 = vxpose.xlu0.b32.cont [9/16] 0.0, 128
        %2890 = vxpose.xlu0.b32.cont [10/16] 0.0, 128
        %2891 = vxpose.xlu0.b32.cont [11/16] 0.0, 128
        %2892 = vxpose.xlu0.b32.cont [12/16] 0.0, 128
        %2893 = vxpose.xlu0.b32.cont [13/16] 0.0, 128
        %2894 = vxpose.xlu0.b32.cont [14/16] 0.0, 128
        %2895 = vxpose.xlu0.b32.cont [15/16] 0.0, 128
        %2896 = vxpose.xlu0.b32.end [16/16] 0.0, 128
        %v2897 = vpop.trf.xlu0
        %v2898 = vpop.trf.xlu0
        %v2899 = vpop.trf.xlu0
        %v2900 = vpop.trf.xlu0
        %v2901 = vpop.trf.xlu0
        %v2902 = vpop.trf.xlu0
        %v2903 = vpop.trf.xlu0
        %v2904 = vpop.trf.xlu0
        %v2905 = vpop.trf.xlu0
        %v2906 = vpop.trf.xlu0
        %v2907 = vpop.trf.xlu0
        %v2908 = vpop.trf.xlu0
        %v2909 = vpop.trf.xlu0
        %v2910 = vpop.trf.xlu0
        %v2911 = vpop.trf.xlu0
        %v2912 = vpop.trf.xlu0
        %v2914 = vsel %vm756, %v2897, 0
        %v2917 = vsel %vm756, %v2898, 0
        %v2920 = vsel %vm756, %v2899, 0
        %v2923 = vsel %vm756, %v2900, 0
        %v2925 = vsel %vm769, %v2715, 0
        %2927 = vmatprep.subr.mxu0 0.0
        %2928 = vmatpush1.msra.mxu0 0.0
        %2929 = vmatprep.subr.mxu0 0.0
        %2930 = vmatpush1.msra.mxu0 0.0
        %2931 = vmatprep.subr.mxu0 0.0
        %2932 = vmatpush1.msra.mxu0 0.0
        %2933 = vmatprep.subr.mxu0 0.0
        %2934 = vmatpush1.msra.mxu0 0.0
        %2935 = vmatprep.subr.mxu0 0.0
        %2936 = vmatpush1.msra.mxu0 0.0
        %2937 = vmatprep.subr.mxu0 0.0
        %2938 = vmatpush1.msra.mxu0 0.0
        %2939 = vmatprep.subr.mxu0 0.0
        %2940 = vmatpush1.msra.mxu0 0.0
        %2941 = vmatprep.subr.mxu0 0.0
        %2942 = vmatpush1.msra.mxu0 0.0
        %2943 = vmatprep.subr.mxu0 0.0
        %2944 = vmatpush1.msra.mxu0 0.0
        %2945 = vmatprep.subr.mxu0 0.0
        %2946 = vmatpush1.msra.mxu0 0.0
        %2947 = vmatprep.subr.mxu0 0.0
        %2948 = vmatpush1.msra.mxu0 0.0
        %2949 = vmatprep.subr.mxu0 0.0
        %2950 = vmatpush1.msra.mxu0 0.0
        %2951 = vmatprep.subr.mxu0 0.0
        %2952 = vmatpush1.msra.mxu0 0.0
        %2953 = vmatprep.subr.mxu0 0.0
        %2954 = vmatpush1.msra.mxu0 0.0
        %2955 = vmatprep.subr.mxu0 0.0
        %2956 = vmatpush1.msra.mxu0 0.0
        %2957 = vmatprep.subr.mxu0 0.0
        %2958 = vmatpush1.msra.mxu0 %v2925
        %2959 = vmatprep.subr.mxu0 0.0
        %2960 = vmatpush2.msra.mxu0 0.0
        %2961 = vmatprep.subr.mxu0 0.0
        %2962 = vmatpush2.msra.mxu0 0.0
        %2963 = vmatprep.subr.mxu0 0.0
        %2964 = vmatpush2.msra.mxu0 0.0
        %2965 = vmatprep.subr.mxu0 0.0
        %2966 = vmatpush2.msra.mxu0 0.0
        %2967 = vmatprep.subr.mxu0 0.0
        %2968 = vmatpush2.msra.mxu0 0.0
        %2969 = vmatprep.subr.mxu0 0.0
        %2970 = vmatpush2.msra.mxu0 0.0
        %2971 = vmatprep.subr.mxu0 0.0
        %2972 = vmatpush2.msra.mxu0 0.0
        %2973 = vmatprep.subr.mxu0 0.0
        %2974 = vmatpush2.msra.mxu0 0.0
        %2975 = vmatprep.subr.mxu0 0.0
        %2976 = vmatpush2.msra.mxu0 0.0
        %2977 = vmatprep.subr.mxu0 0.0
        %2978 = vmatpush2.msra.mxu0 0.0
        %2979 = vmatprep.subr.mxu0 0.0
        %2980 = vmatpush2.msra.mxu0 0.0
        %2981 = vmatprep.subr.mxu0 0.0
        %2982 = vmatpush2.msra.mxu0 0.0
        %2983 = vmatprep.subr.mxu0 0.0
        %2984 = vmatpush2.msra.mxu0 0.0
        %2985 = vmatprep.subr.mxu0 0.0
        %2986 = vmatpush2.msra.mxu0 0.0
        %2987 = vmatprep.subr.mxu0 0.0
        %2988 = vmatpush2.msra.mxu0 0.0
        %2989 = vmatprep.subr.mxu0 0.0
        %2990 = vmatpush2.msra.mxu0 0.0
        %2991 = vmatprep.mubr.f32.mxu0 0.0
        %2992 = vmatmul.mubr.f32.gmra.mxu0 %v2914
        %v2993 = vpop.f32.mrf.mxu0
        %v2994 = vadd.f32 0.0, %v2993
        %v2995 = vpop.f32.mrf.mxu0
        %2996 = vmatprep.mubr.f32.mxu0 0.0
        %2997 = vmatmul.mubr.f32.gmra.mxu0 %v2917
        %v2998 = vpop.f32.mrf.mxu0
        %v2999 = vadd.f32 0.0, %v2998
        %v3000 = vpop.f32.mrf.mxu0
        %3001 = vmatprep.mubr.f32.mxu0 0.0
        %3002 = vmatmul.mubr.f32.gmra.mxu0 %v2920
        %v3003 = vpop.f32.mrf.mxu0
        %v3004 = vadd.f32 0.0, %v3003
        %v3005 = vpop.f32.mrf.mxu0
        %3006 = vmatprep.mubr.f32.mxu0 0.0
        %3007 = vmatmul.mubr.f32.gmra.mxu0 %v2923
        %v3008 = vpop.f32.mrf.mxu0
        %v3009 = vadd.f32 0.0, %v3008
        %v3010 = vpop.f32.mrf.mxu0
        %3011 = vdwg.mxu0
        %3012 = vxpose.xlu0.b32.start [1/16] %v2875, 128
        %3013 = vxpose.xlu0.b32.cont [2/16] 0.0, 128
        %3014 = vxpose.xlu0.b32.cont [3/16] 0.0, 128
        %3015 = vxpose.xlu0.b32.cont [4/16] 0.0, 128
        %3016 = vxpose.xlu0.b32.cont [5/16] 0.0, 128
        %3017 = vxpose.xlu0.b32.cont [6/16] 0.0, 128
        %3018 = vxpose.xlu0.b32.cont [7/16] 0.0, 128
        %3019 = vxpose.xlu0.b32.cont [8/16] 0.0, 128
        %3020 = vxpose.xlu0.b32.cont [9/16] 0.0, 128
        %3021 = vxpose.xlu0.b32.cont [10/16] 0.0, 128
        %3022 = vxpose.xlu0.b32.cont [11/16] 0.0, 128
        %3023 = vxpose.xlu0.b32.cont [12/16] 0.0, 128
        %3024 = vxpose.xlu0.b32.cont [13/16] 0.0, 128
        %3025 = vxpose.xlu0.b32.cont [14/16] 0.0, 128
        %3026 = vxpose.xlu0.b32.cont [15/16] 0.0, 128
        %3027 = vxpose.xlu0.b32.end [16/16] 0.0, 128
        %v3028 = vpop.trf.xlu0
        %v3029 = vpop.trf.xlu0
        %v3030 = vpop.trf.xlu0
        %v3031 = vpop.trf.xlu0
        %v3032 = vpop.trf.xlu0
        %v3033 = vpop.trf.xlu0
        %v3034 = vpop.trf.xlu0
        %v3035 = vpop.trf.xlu0
        %v3036 = vpop.trf.xlu0
        %v3037 = vpop.trf.xlu0
        %v3038 = vpop.trf.xlu0
        %v3039 = vpop.trf.xlu0
        %v3040 = vpop.trf.xlu0
        %v3041 = vpop.trf.xlu0
        %v3042 = vpop.trf.xlu0
        %v3043 = vpop.trf.xlu0
        %v3045 = vsel %vm756, %v3028, 0
        %v3048 = vsel %vm769, %v2798, 0
        %3050 = vmatprep.subr.mxu0 0.0
        %3051 = vmatpush1.msra.mxu0 0.0
        %3052 = vmatprep.subr.mxu0 0.0
        %3053 = vmatpush1.msra.mxu0 0.0
        %3054 = vmatprep.subr.mxu0 0.0
        %3055 = vmatpush1.msra.mxu0 0.0
        %3056 = vmatprep.subr.mxu0 0.0
        %3057 = vmatpush1.msra.mxu0 0.0
        %3058 = vmatprep.subr.mxu0 0.0
        %3059 = vmatpush1.msra.mxu0 0.0
        %3060 = vmatprep.subr.mxu0 0.0
        %3061 = vmatpush1.msra.mxu0 0.0
        %3062 = vmatprep.subr.mxu0 0.0
        %3063 = vmatpush1.msra.mxu0 0.0
        %3064 = vmatprep.subr.mxu0 0.0
        %3065 = vmatpush1.msra.mxu0 0.0
        %3066 = vmatprep.subr.mxu0 0.0
        %3067 = vmatpush1.msra.mxu0 0.0
        %3068 = vmatprep.subr.mxu0 0.0
        %3069 = vmatpush1.msra.mxu0 0.0
        %3070 = vmatprep.subr.mxu0 0.0
        %3071 = vmatpush1.msra.mxu0 0.0
        %3072 = vmatprep.subr.mxu0 0.0
        %3073 = vmatpush1.msra.mxu0 0.0
        %3074 = vmatprep.subr.mxu0 0.0
        %3075 = vmatpush1.msra.mxu0 0.0
        %3076 = vmatprep.subr.mxu0 0.0
        %3077 = vmatpush1.msra.mxu0 0.0
        %3078 = vmatprep.subr.mxu0 0.0
        %3079 = vmatpush1.msra.mxu0 0.0
        %3080 = vmatprep.subr.mxu0 0.0
        %3081 = vmatpush1.msra.mxu0 %v3048
        %3082 = vmatprep.subr.mxu0 0.0
        %3083 = vmatpush2.msra.mxu0 0.0
        %3084 = vmatprep.subr.mxu0 0.0
        %3085 = vmatpush2.msra.mxu0 0.0
        %3086 = vmatprep.subr.mxu0 0.0
        %3087 = vmatpush2.msra.mxu0 0.0
        %3088 = vmatprep.subr.mxu0 0.0
        %3089 = vmatpush2.msra.mxu0 0.0
        %3090 = vmatprep.subr.mxu0 0.0
        %3091 = vmatpush2.msra.mxu0 0.0
        %3092 = vmatprep.subr.mxu0 0.0
        %3093 = vmatpush2.msra.mxu0 0.0
        %3094 = vmatprep.subr.mxu0 0.0
        %3095 = vmatpush2.msra.mxu0 0.0
        %3096 = vmatprep.subr.mxu0 0.0
        %3097 = vmatpush2.msra.mxu0 0.0
        %3098 = vmatprep.subr.mxu0 0.0
        %3099 = vmatpush2.msra.mxu0 0.0
        %3100 = vmatprep.subr.mxu0 0.0
        %3101 = vmatpush2.msra.mxu0 0.0
        %3102 = vmatprep.subr.mxu0 0.0
        %3103 = vmatpush2.msra.mxu0 0.0
        %3104 = vmatprep.subr.mxu0 0.0
        %3105 = vmatpush2.msra.mxu0 0.0
        %3106 = vmatprep.subr.mxu0 0.0
        %3107 = vmatpush2.msra.mxu0 0.0
        %3108 = vmatprep.subr.mxu0 0.0
        %3109 = vmatpush2.msra.mxu0 0.0
        %3110 = vmatprep.subr.mxu0 0.0
        %3111 = vmatpush2.msra.mxu0 0.0
        %3112 = vmatprep.subr.mxu0 0.0
        %3113 = vmatpush2.msra.mxu0 0.0
        %3114 = vmatprep.mubr.f32.mxu0 0.0
        %3115 = vmatmul.mubr.f32.gmra.mxu0 %v3045
        %v3116 = vpop.f32.mrf.mxu0
        %v3117 = vadd.f32 0.0, %v3116
        %v3118 = vpop.f32.mrf.mxu0
        %3119 = vdwg.mxu0
        %v3120 = vadd.f32 %v2697, %v2994
        %v3121 = vadd.f32 %v2698, %v2999
        %v3122 = vadd.f32 %v2699, %v3004
        %v3123 = vadd.f32 %v2700, %v3009
        %v3124 = vmax.f32 %v3120, -1.0
        %v3125 = vmax.f32 %v3121, -1.0
        %v3126 = vmax.f32 %v3122, -1.0
        %v3127 = vmax.f32 %v3123, -1.0
        %v3128 = vmin.f32 %v3124, 1.0
        %v3129 = vmin.f32 %v3125, 1.0
        %v3130 = vmin.f32 %v3126, 1.0
        %v3131 = vmin.f32 %v3127, 1.0
        %v3132 = vadd.f32 %v2703, %v3117
        %v3133 = vmax.f32 %v3132, -1.0
        %v3134 = vmin.f32 %v3133, 1.0
        %v3135 = vmul.f32 %v546, %v3128
        %v3136 = vmul.f32 %v547, %v3129
        %v3137 = vmul.f32 %v548, %v3130
        %v3138 = vmul.f32 %v549, %v3131
        %v3139 = vadd.f32 %v2708, %v3135
        %v3140 = vadd.f32 %v2709, %v3136
        %v3141 = vadd.f32 %v2710, %v3137
        %v3142 = vadd.f32 %v2711, %v3138
        %v3143 = vmul.f32 %v550, %v3134
        %v3144 = vadd.f32 %v2713, %v3143
        %3145 = vst.msk [vmem:[%s527] sm:$0xff] %vm557, %v3139
        %3146 = vst.msk [vmem:[%s527 + $0x8] sm:$0xff] %vm557, %v3140
        %3147 = vst.msk [vmem:[%s527 + $0x10] sm:$0xff] %vm557, %v3141
        %3148 = vst.msk [vmem:[%s527 + $0x18] sm:$0xff] %vm557, %v3142
        %3149 = vst.msk [vmem:[%s531] sm:$0xff] %vm644, %v3144
        %3150 = vst.msk [vmem:[%s536] sm:$0xff] %vm557, %v3128
        %3151 = vst.msk [vmem:[%s536 + $0x8] sm:$0xff] %vm557, %v3129
        %3152 = vst.msk [vmem:[%s536 + $0x10] sm:$0xff] %vm557, %v3130
        %3153 = vst.msk [vmem:[%s536 + $0x18] sm:$0xff] %vm557, %v3131
        %3154 = vst.msk [vmem:[%s540] sm:$0xff] %vm644, %v3134
        %s3155 = sand.u32 %s216, 1
        %s3156 = scalar_lea.sflag [#allocation3], %s3155
        %s3157 = sand.u32 %s216, 1
        %s3158 = smul.addr %s3157, 24
        %s3159 = scalar_lea.vmem [#allocation2], %s3158
        %p3160 = scmp.lt.s32.totalorder %s26, 1
        %s3161 = scalar_select %p3160, %s26, 1
        %s3162 = smul.addr %s3161, 4
        %s3163 = smul.addr %s3162, 8
        %s3164 = scalar_lea.vmem %s8, %s3163
        %p3165 = scmp.lt.s32.totalorder %s26, 1
        %s3166 = scalar_select %p3165, %s26, 1
        %s3167 = smul.addr %s3166, 8
        %s3168 = scalar_lea.vmem %s9, %s3167
        %p3169 = scmp.lt.s32.totalorder %s26, 1
        %s3170 = scalar_select %p3169, %s26, 1
        %s3171 = smul.addr %s3170, 4
        %s3172 = smul.addr %s3171, 8
        %s3173 = scalar_lea.vmem %s10, %s3172
        %p3174 = scmp.lt.s32.totalorder %s26, 1
        %s3175 = scalar_select %p3174, %s26, 1
        %s3176 = smul.addr %s3175, 8
        %s3177 = scalar_lea.vmem %s11, %s3176
        // Predicated region
        $region49: #{tpu_custom_call.1} parent=47 // pred_check
          %p3178 = pneg %p226
        $region50: #{tpu_custom_call.1} parent=47 // pred_check_branch
          %3180 = sbr.rel (%p3178) target = $region52
        $region51: #{tpu_custom_call.1} parent=47 // pred_region
          %s3182 = ssub.s32 384, 384
          %3183 = vsyncadd %s3156, %s3182
          %s3184 = smul.addr %s26, 6
          %s3185 = smul.addr %s3184, 64
          %s3186 = scalar_lea.hbm %s7, %s3185
          %s3187 = sshll.u32 %s3159, 4
          %s3188 = int_to_ptr.vmem [resolvable:$true] %s3187
          %3193 = dma.vmem_to_hbm [thread:$0]  %s3188, 384, %s3186, %s3156, 64, 64, 4
        $region52: #{tpu_custom_call.1} parent=47 // pred_fallthru
          _
        // Predicated region
        $region53: #{tpu_custom_call.1} parent=47 // pred_check
          %p3194 = pneg %p252
        $region54: #{tpu_custom_call.1} parent=47 // pred_check_branch
          %3196 = sbr.rel (%p3194) target = $region56
        $region55: #{tpu_custom_call.1} parent=47 // pred_region
          _
        $region56: #{tpu_custom_call.1} parent=47 // pred_fallthru
          _
        // Predicated region
        $region57: #{tpu_custom_call.1} parent=47 // pred_check
          %p3197 = pneg %p278
        $region58: #{tpu_custom_call.1} parent=47 // pred_check_branch
          %3199 = sbr.rel (%p3197) target = $region60
        $region59: #{tpu_custom_call.1} parent=47 // pred_region
          _
        $region60: #{tpu_custom_call.1} parent=47 // pred_fallthru
          _
        // Predicated region
        $region61: #{tpu_custom_call.1} parent=47 // pred_check
          %p3200 = pneg %p304
        $region62: #{tpu_custom_call.1} parent=47 // pred_check_branch
          %3202 = sbr.rel (%p3200) target = $region64
        $region63: #{tpu_custom_call.1} parent=47 // pred_region
          _
        $region64: #{tpu_custom_call.1} parent=47 // pred_fallthru
          _
        // Predicated region
        $region65: #{tpu_custom_call.1} parent=47 // pred_check
          %p3203 = pneg %p330
        $region66: #{tpu_custom_call.1} parent=47 // pred_check_branch
          %3205 = sbr.rel (%p3203) target = $region68
        $region67: #{tpu_custom_call.1} parent=47 // pred_region
          _
        $region68: #{tpu_custom_call.1} parent=47 // pred_fallthru
          _
      $region48: #{tpu_custom_call.1} parent=5 // pred_fallthru
        _
      %p3206 = scmp.le.s32.totalorder 2, %s21
      // Predicated region
      $region69: #{tpu_custom_call.1} parent=5 // pred_check
        %p3207 = pneg %p3206
      $region70: #{tpu_custom_call.1} parent=5 // pred_check_branch
        %3209 = sbr.rel (%p3207) target = $region72
      $region71: #{tpu_custom_call.1} parent=5 // pred_region
        %s3210 = ssub.s32 %s21, 2
        // Predicated region
        $region73: #{tpu_custom_call.1} parent=71 // pred_check
          %p3211 = pneg %p232
        $region74: #{tpu_custom_call.1} parent=71 // pred_check_branch
          %3213 = sbr.rel (%p3211) target = $region76
        $region75: #{tpu_custom_call.1} parent=71 // pred_region
          %s3214 = sand.u32 %s217, 1
          %s3215 = scalar_lea.sflag [#allocation3], %s3214
          %s3216 = sand.u32 %s217, 1
          %s3217 = smul.addr %s3216, 24
          %s3218 = scalar_lea.vmem [#allocation2], %s3217
          %3219 = dma.done %s3215, 384
        $region76: #{tpu_custom_call.1} parent=71 // pred_fallthru
          _
        // Predicated region
        $region77: #{tpu_custom_call.1} parent=71 // pred_check
          %p3220 = pneg %p258
        $region78: #{tpu_custom_call.1} parent=71 // pred_check_branch
          %3222 = sbr.rel (%p3220) target = $region80
        $region79: #{tpu_custom_call.1} parent=71 // pred_region
          %p3223 = scmp.lt.s32.totalorder %s27, 1
          %s3224 = scalar_select %p3223, %s27, 1
          %s3225 = smul.addr %s3224, 4
          %s3226 = smul.addr %s3225, 8
          %s3227 = scalar_lea.vmem %s8, %s3226
        $region80: #{tpu_custom_call.1} parent=71 // pred_fallthru
          _
        // Predicated region
        $region81: #{tpu_custom_call.1} parent=71 // pred_check
          %p3228 = pneg %p284
        $region82: #{tpu_custom_call.1} parent=71 // pred_check_branch
          %3230 = sbr.rel (%p3228) target = $region84
        $region83: #{tpu_custom_call.1} parent=71 // pred_region
          %p3231 = scmp.lt.s32.totalorder %s27, 1
          %s3232 = scalar_select %p3231, %s27, 1
          %s3233 = smul.addr %s3232, 8
          %s3234 = scalar_lea.vmem %s9, %s3233
        $region84: #{tpu_custom_call.1} parent=71 // pred_fallthru
          _
        // Predicated region
        $region85: #{tpu_custom_call.1} parent=71 // pred_check
          %p3235 = pneg %p310
        $region86: #{tpu_custom_call.1} parent=71 // pred_check_branch
          %3237 = sbr.rel (%p3235) target = $region88
        $region87: #{tpu_custom_call.1} parent=71 // pred_region
          %p3238 = scmp.lt.s32.totalorder %s27, 1
          %s3239 = scalar_select %p3238, %s27, 1
          %s3240 = smul.addr %s3239, 4
          %s3241 = smul.addr %s3240, 8
          %s3242 = scalar_lea.vmem %s10, %s3241
        $region88: #{tpu_custom_call.1} parent=71 // pred_fallthru
          _
        // Predicated region
        $region89: #{tpu_custom_call.1} parent=71 // pred_check
          %p3243 = pneg %p336
        $region90: #{tpu_custom_call.1} parent=71 // pred_check_branch
          %3245 = sbr.rel (%p3243) target = $region92
        $region91: #{tpu_custom_call.1} parent=71 // pred_region
          %p3246 = scmp.lt.s32.totalorder %s27, 1
          %s3247 = scalar_select %p3246, %s27, 1
          %s3248 = smul.addr %s3247, 8
          %s3249 = scalar_lea.vmem %s11, %s3248
        $region92: #{tpu_custom_call.1} parent=71 // pred_fallthru
          _
      $region72: #{tpu_custom_call.1} parent=5 // pred_fallthru
        _
    $region6: #{tpu_custom_call.1} parent=1 // loop_footer
      %s25 = sadd.s32 1, %s21
    $region7: #{tpu_custom_call.1} parent=1 // loop_footer_branch
      %20 = sbr.rel target = $region3
    $region8: #{tpu_custom_call.1} parent=1 // loop_exit
      _
    %3250 = vsyncpa [#allocation3], 1
    %s3251 = scalar_lea.sflag [#allocation3], 1
    %3252 = vsyncpa %s3251, 1

</llo_original>
